<compile_context>
chip_gen: v5e
topology: v5e:2x2
jax: 0.10.0
libtpu: 0.0.40
codegen_flags: <defaults>
</compile_context>

<pallas_src>
import functools

import jax
import jax.numpy as jnp
from jax import lax
from jax.experimental import pallas as pl
from jax.experimental.pallas import tpu as pltpu

BN_EPS = 1e-5


def _erf(z):
    # Abramowitz & Stegun 7.1.26 rational approximation (max abs err ~1.5e-7);
    # lax.erf has no Mosaic lowering.  exp() runs on the EUP slot.
    a1, a2, a3, a4, a5 = (0.254829592, -0.284496736, 1.421413741,
                          -1.453152027, 1.061405429)
    p = 0.3275911
    az = jnp.abs(z)
    t = 1.0 / (1.0 + p * az)
    poly = t * (a1 + t * (a2 + t * (a3 + t * (a4 + t * a5))))
    y = 1.0 - poly * jnp.exp(-az * az)
    return jnp.where(z < 0, -y, y)


def _gelu_exact(x):
    return 0.5 * x * (1.0 + _erf(x * 0.7071067811865476))


# --------------------------------------------------------------------------
# shared branch generator: pw1 + axial depthwise branches, one at a time
# --------------------------------------------------------------------------
def _branches(x, pw1_w, pw1_b, dwh_w, dwh_b, dww_w, dww_b, width):
    """Yields (g, branch_g) for g=0..3 with at most one branch live at a time.

    x: (dim, H*W) bf16 for one image.  branch_g is (gc, H*W) f32.
    Both passes call this, so pass-2 values are bit-identical to the values
    the pass-1 statistics were computed from.
    """
    gc = pw1_w.shape[0]
    hw = x.shape[-1]

    # pw1 (1x1 conv) as a channel matmul on the MXU: (gc, dim) @ (dim, HW),
    # bf16 operands, f32 accumulation.
    t = jnp.dot(pw1_w, x, preferred_element_type=jnp.float32) + pw1_b  # (gc, HW)

    lane = lax.broadcasted_iota(jnp.int32, (gc, hw), 1)   # flattened position
    col = lane % width                                    # position in a row

    def shift(a, s, along_h):
        # out[:, i] = a[:, i - s], zeroed where the source crosses the image
        # (H dir) or row (W dir) boundary.  pltpu.roll runs on the XLU slot;
        # the boundary fix-up is a single select.
        rolled = pltpu.roll(a, s % hw, 1)
        pos = lane if along_h else col
        lim = hw if along_h else width
        valid = (pos >= s) if s > 0 else (pos < lim + s)
        return jnp.where(valid, rolled, 0.0)

    yield 0, t
    for g in range(3):                              # dilations 1, 2, 3
        d = g + 1
        # Depthwise 3-tap 'same' convs:  y[i] = w0*a[i-d] + w1*a[i] + w2*a[i+d]
        conv_h = (dwh_w[g, 0] * shift(t, d * width, True)
                  + dwh_w[g, 1] * t
                  + dwh_w[g, 2] * shift(t, -d * width, True)) + dwh_b[g]
        conv_w = (dww_w[g, 0] * shift(t, d, False)
                  + dww_w[g, 1] * t
                  + dww_w[g, 2] * shift(t, -d, False)) + dww_b[g]
        yield g + 1, t + conv_h + conv_w
    # TODO(synk): for very large H*W a halo-tiled H blocking would be needed to
    # bound VMEM; one image per grid step is used here.


# --------------------------------------------------------------------------
# pass 1: per-image, per-channel BN batch statistics (no cat materialization)
# --------------------------------------------------------------------------
def stats_kernel(x_ref, pw1_w_ref, pw1_b_ref,
                 dwh_w_ref, dwh_b_ref, dww_w_ref, dww_b_ref,
                 bsum_ref, bsq_ref, *, width):
    x = x_ref[0]                                   # (dim, H*W) bf16, one image
    for g, branch in _branches(x, pw1_w_ref[...], pw1_b_ref[...],
                               dwh_w_ref[...], dwh_b_ref[...],
                               dww_w_ref[...], dww_b_ref[...], width):
        bsum_ref[0, g] = jnp.sum(branch, axis=1, keepdims=True)
        bsq_ref[0, g] = jnp.sum(branch * branch, axis=1, keepdims=True)


# --------------------------------------------------------------------------
# pass 2: recompute branches + fused (BN-folded) pw2 matmul + GELU
# --------------------------------------------------------------------------
def fused_kernel(x_ref, pw1_w_ref, pw1_b_ref,
                 dwh_w_ref, dwh_b_ref, dww_w_ref, dww_b_ref,
                 w2_ref, b2_ref, o_ref, *, width):
    x = x_ref[0]                                   # (dim, H*W) bf16, one image
    w2 = w2_ref[...]                               # (4, dim, gc) bf16, BN folded
    acc = None
    for g, branch in _branches(x, pw1_w_ref[...], pw1_b_ref[...],
                               dwh_w_ref[...], dwh_b_ref[...],
                               dww_w_ref[...], dww_b_ref[...], width):
        contrib = jnp.dot(w2[g], branch.astype(jnp.bfloat16),
                          preferred_element_type=jnp.float32)     # (dim, HW)
        acc = contrib if acc is None else acc + contrib
    o_ref[0] = _gelu_exact(acc + b2_ref[...])


def _full_spec(arr):
    # Whole-array block (weights stay resident; constant block index).
    shape = arr.shape
    return pl.BlockSpec(shape, lambda *_: (0,) * len(shape))


def bottleneck_block(x_nchw, params):
    """Forward pass of BottleNeckBlock.  x is NCHW float32, returns NCHW."""
    n, dim, h, w = x_nchw.shape
    gc = dim // 4
    hw = h * w

    # Free (contiguous) reshape: channels stay on the 2nd axis, spatial is
    # flattened onto the minor (lane) axis.  bf16 halves input HBM traffic.
    x = x_nchw.reshape(n, dim, hw).astype(jnp.bfloat16)

    # Channel-first weight views (tiny, host side).
    pw1_wT = params["pw1_w"].T.astype(jnp.bfloat16)           # (gc, dim)
    pw1_b = params["pw1_b"].reshape(gc, 1)
    dwh_w = params["dwh_w"].reshape(3, 3, gc, 1)
    dwh_b = params["dwh_b"].reshape(3, gc, 1)
    dww_w = params["dww_w"].reshape(3, 3, gc, 1)
    dww_b = params["dww_b"].reshape(3, gc, 1)

    vmem_cap = 48 * 1024 * 1024      # leaves headroom inside v7x's 64 MiB VMEM

    conv_args = (x, pw1_wT, pw1_b, dwh_w, dwh_b, dww_w, dww_b)
    conv_specs = [pl.BlockSpec((1, dim, hw), lambda i: (i, 0, 0)),
                  _full_spec(pw1_wT), _full_spec(pw1_b),
                  _full_spec(dwh_w), _full_spec(dwh_b),
                  _full_spec(dww_w), _full_spec(dww_b)]

    # ---- pass 1: BN batch statistics (tiny outputs, no cat in HBM) --------
    bsum, bsq = pl.pallas_call(
        functools.partial(stats_kernel, width=w),
        grid=(n,),
        in_specs=conv_specs,
        out_specs=[pl.BlockSpec((1, 4, gc, 1), lambda i: (i, 0, 0, 0)),
                   pl.BlockSpec((1, 4, gc, 1), lambda i: (i, 0, 0, 0))],
        out_shape=[jax.ShapeDtypeStruct((n, 4, gc, 1), jnp.float32),
                   jax.ShapeDtypeStruct((n, 4, gc, 1), jnp.float32)],
        compiler_params=pltpu.CompilerParams(
            dimension_semantics=("parallel",),
            vmem_limit_bytes=vmem_cap),
    )(*conv_args)

    # ---- fold BatchNorm (training-mode batch stats, biased var) into pw2 ---
    count = n * hw
    mean = jnp.sum(bsum.reshape(n, 4 * gc), axis=0) / count
    var = jnp.sum(bsq.reshape(n, 4 * gc), axis=0) / count - mean * mean
    scale = params["bn_g"] * lax.rsqrt(var + BN_EPS)                  # (4gc,)
    w2 = params["pw2_w"].T * scale[None, :]                           # (dim, 4gc)
    # Regroup so pass 2 indexes whole (dim, gc) slabs: w2g[g] = W'[:, g*gc:(g+1)*gc]
    w2g = w2.reshape(dim, 4, gc).transpose(1, 0, 2).astype(jnp.bfloat16)
    b2 = (params["pw2_b"]
          + (params["bn_b"] - mean * scale) @ params["pw2_w"]).reshape(dim, 1)

    # ---- pass 2: recompute branches + fused pw2 + GELU ---------------------
    out = pl.pallas_call(
        functools.partial(fused_kernel, width=w),
        grid=(n,),
        in_specs=conv_specs + [_full_spec(w2g), _full_spec(b2)],
        out_specs=pl.BlockSpec((1, dim, hw), lambda i: (i, 0, 0)),
        out_shape=jax.ShapeDtypeStruct((n, dim, hw), jnp.float32),
        compiler_params=pltpu.CompilerParams(
            dimension_semantics=("parallel",),
            vmem_limit_bytes=vmem_cap),
    )(*conv_args, w2g, b2)

    return out.reshape(n, dim, h, w)


# --------------------------------------------------------------------------
# parameters + pure-JAX reference (mirrors the PyTorch module, BN training mode)
# --------------------------------------------------------------------------
def init_params(key, dim):
    gc = dim // 4
    ks = jax.random.split(key, 10)

    def rnd(k, shape, scale=0.3):
        return scale * jax.random.normal(k, shape, jnp.float32)

    return dict(
        pw1_w=rnd(ks[0], (dim, gc)),            # (Cin, Cout)  1x1 conv
        pw1_b=rnd(ks[1], (gc,)),
        dwh_w=rnd(ks[2], (3, 3, gc)),           # [dilation, tap, channel] (3,1)
        dwh_b=rnd(ks[3], (3, gc)),
        dww_w=rnd(ks[4], (3, 3, gc)),           # [dilation, tap, channel] (1,3)
        dww_b=rnd(ks[5], (3, gc)),
        bn_g=1.0 + rnd(ks[6], (4 * gc,), 0.1),
        bn_b=rnd(ks[7], (4 * gc,), 0.1),
        pw2_w=rnd(ks[8], (4 * gc, dim)),        # (Cin, Cout)  1x1 conv
        pw2_b=rnd(ks[9], (dim,)),
    )
    # TODO(synk): BatchNorm running-stat updates (module state mutation) are not
    # reproduced; they do not affect the forward output in training mode.


def reference_forward(x, p):
    def conv1x1(a, wmat, b):
        return jnp.einsum("nchw,cd->ndhw", a, wmat) + b.reshape(1, -1, 1, 1)

    def axial(a, g):
        d = g + 1
        ch = a.shape[1]
        dn = ("NCHW", "OIHW", "NCHW")
        kh = p["dwh_w"][g].T.reshape(ch, 1, 3, 1)
        kw = p["dww_w"][g].T.reshape(ch, 1, 1, 3)
        yh = lax.conv_general_dilated(a, kh, (1, 1), "SAME", rhs_dilation=(d, 1),
                                      dimension_numbers=dn, feature_group_count=ch)
        yh = yh + p["dwh_b"][g].reshape(1, -1, 1, 1)
        yw = lax.conv_general_dilated(a, kw, (1, 1), "SAME", rhs_dilation=(1, d),
                                      dimension_numbers=dn, feature_group_count=ch)
        yw = yw + p["dww_b"][g].reshape(1, -1, 1, 1)
        return a + yh + yw

    t = conv1x1(x, p["pw1_w"], p["pw1_b"])
    cat = jnp.concatenate([t, axial(t, 0), axial(t, 1), axial(t, 2)], axis=1)
    mean = cat.mean(axis=(0, 2, 3), keepdims=True)
    var = ((cat - mean) ** 2).mean(axis=(0, 2, 3), keepdims=True)
    nrm = (cat - mean) / jnp.sqrt(var + BN_EPS)
    nrm = nrm * p["bn_g"].reshape(1, -1, 1, 1) + p["bn_b"].reshape(1, -1, 1, 1)
    y = conv1x1(nrm, p["pw2_w"], p["pw2_b"])
    return jax.nn.gelu(y, approximate=False)


if __name__ == "__main__":
    key = jax.random.PRNGKey(0)
    kx, kp = jax.random.split(key)
    N, DIM, H, W = 2, 16, 16, 16          # dim divisible by 4 -> gc = 4
    x = jax.random.normal(kx, (N, DIM, H, W), jnp.float32)
    params = init_params(kp, DIM)

    out = jax.block_until_ready(jax.jit(bottleneck_block)(x, params))
    ref = jax.block_until_ready(reference_forward(x, params))

    assert out.shape == (N, DIM, H, W)
    # bf16 MXU operands (x, pw1, branches, BN-folded pw2) -> bf16-level tolerance.
    if not bool(jnp.allclose(out, ref, rtol=5e-2, atol=5e-2)):
        raise AssertionError(
            "kernel/reference mismatch, max abs err = "
            f"{float(jnp.max(jnp.abs(out - ref)))}")
    print("KERNEL_OK")
</pallas_src>

<mosaic_0001>
module attributes {stable_mosaic.version = 11 : i64} {
  func.func @stats_kernel(%arg0: i32, %arg1: memref<1x16x256xbf16, #tpu.memory_space<vmem>>, %arg2: memref<4x16xbf16, #tpu.memory_space<vmem>>, %arg3: memref<4x1xf32, #tpu.memory_space<vmem>>, %arg4: memref<3x3x4x1xf32, #tpu.memory_space<vmem>>, %arg5: memref<3x4x1xf32, #tpu.memory_space<vmem>>, %arg6: memref<3x3x4x1xf32, #tpu.memory_space<vmem>>, %arg7: memref<3x4x1xf32, #tpu.memory_space<vmem>>, %arg8: memref<1x4x4x1xf32, #tpu.memory_space<vmem>>, %arg9: memref<1x4x4x1xf32, #tpu.memory_space<vmem>>) attributes {dimension_semantics = [#tpu.dimension_semantics<parallel>], iteration_bounds = array<i64: 2>, scalar_prefetch = 0 : i64, scratch_operands = 0 : i64, tpu.core_type = #tpu.core_type<tc>, window_params = [{transform_indices = @transform_0, window_bounds = array<i64: 1, 16, 256>}, {pipeline_mode = #tpu.pipeline_mode<synchronous>, transform_indices = @transform_1, window_bounds = array<i64: 4, 16>}, {pipeline_mode = #tpu.pipeline_mode<synchronous>, transform_indices = @transform_2, window_bounds = array<i64: 4, 1>}, {pipeline_mode = #tpu.pipeline_mode<synchronous>, transform_indices = @transform_3, window_bounds = array<i64: 3, 3, 4, 1>}, {pipeline_mode = #tpu.pipeline_mode<synchronous>, transform_indices = @transform_4, window_bounds = array<i64: 3, 4, 1>}, {pipeline_mode = #tpu.pipeline_mode<synchronous>, transform_indices = @transform_5, window_bounds = array<i64: 3, 3, 4, 1>}, {pipeline_mode = #tpu.pipeline_mode<synchronous>, transform_indices = @transform_6, window_bounds = array<i64: 3, 4, 1>}, {transform_indices = @transform_7, window_bounds = array<i64: 1, 4, 4, 1>}, {transform_indices = @transform_8, window_bounds = array<i64: 1, 4, 4, 1>}]} {
    %c0 = arith.constant 0 : index
    %c0_0 = arith.constant 0 : index
    %c0_1 = arith.constant 0 : index
    %0 = vector.load %arg1[%c0, %c0_0, %c0_1] : memref<1x16x256xbf16, #tpu.memory_space<vmem>>, vector<1x16x256xbf16>
    %1 = vector.shape_cast %0 : vector<1x16x256xbf16> to vector<16x256xbf16>
    %c0_2 = arith.constant 0 : index
    %c0_3 = arith.constant 0 : index
    %2 = vector.load %arg2[%c0_2, %c0_3] : memref<4x16xbf16, #tpu.memory_space<vmem>>, vector<4x16xbf16>
    %c0_4 = arith.constant 0 : index
    %c0_5 = arith.constant 0 : index
    %3 = vector.load %arg3[%c0_4, %c0_5] : memref<4x1xf32, #tpu.memory_space<vmem>>, vector<4x1xf32>
    %c0_6 = arith.constant 0 : index
    %c0_7 = arith.constant 0 : index
    %c0_8 = arith.constant 0 : index
    %c0_9 = arith.constant 0 : index
    %4 = vector.load %arg4[%c0_6, %c0_7, %c0_8, %c0_9] : memref<3x3x4x1xf32, #tpu.memory_space<vmem>>, vector<3x3x4x1xf32>
    %c0_10 = arith.constant 0 : index
    %c0_11 = arith.constant 0 : index
    %c0_12 = arith.constant 0 : index
    %5 = vector.load %arg5[%c0_10, %c0_11, %c0_12] : memref<3x4x1xf32, #tpu.memory_space<vmem>>, vector<3x4x1xf32>
    %c0_13 = arith.constant 0 : index
    %c0_14 = arith.constant 0 : index
    %c0_15 = arith.constant 0 : index
    %c0_16 = arith.constant 0 : index
    %6 = vector.load %arg6[%c0_13, %c0_14, %c0_15, %c0_16] : memref<3x3x4x1xf32, #tpu.memory_space<vmem>>, vector<3x3x4x1xf32>
    %c0_17 = arith.constant 0 : index
    %c0_18 = arith.constant 0 : index
    %c0_19 = arith.constant 0 : index
    %7 = vector.load %arg7[%c0_17, %c0_18, %c0_19] : memref<3x4x1xf32, #tpu.memory_space<vmem>>, vector<3x4x1xf32>
    %cst = arith.constant dense<0.000000e+00> : vector<4x256xf32>
    %8 = tpu.matmul %2, %1, %cst {dimension_numbers = #tpu.dot_dimension_numbers<[1], [0], [0], [1], [0, 0, 1, 1], [], []>} : vector<4x16xbf16>, vector<16x256xbf16>, vector<4x256xf32> -> vector<4x256xf32>
    %9 = vector.broadcast %3 : vector<4x1xf32> to vector<4x256xf32>
    %10 = arith.addf %8, %9 : vector<4x256xf32>
    %11 = tpu.iota {dimensions = array<i32: 1>} : vector<4x256xi32>
    %c16_i32 = arith.constant 16 : i32
    %c0_i32 = arith.constant 0 : i32
    %12 = arith.cmpi eq, %c16_i32, %c0_i32 : i32
    %c1_i32 = arith.constant 1 : i32
    %13 = arith.select %12, %c1_i32, %c16_i32 : i32
    %14 = vector.broadcast %13 : i32 to vector<4x256xi32>
    %15 = arith.remsi %11, %14 : vector<4x256xi32>
    %c0_i32_20 = arith.constant 0 : i32
    %16 = vector.broadcast %c0_i32_20 : i32 to vector<4x256xi32>
    %17 = arith.cmpi ne, %15, %16 : vector<4x256xi32>
    %c0_i32_21 = arith.constant 0 : i32
    %18 = vector.broadcast %c0_i32_21 : i32 to vector<4x256xi32>
    %19 = arith.cmpi slt, %15, %18 : vector<4x256xi32>
    %c0_i32_22 = arith.constant 0 : i32
    %20 = arith.cmpi slt, %13, %c0_i32_22 : i32
    %21 = vector.broadcast %20 : i1 to vector<4x256xi1>
    %22 = vector.broadcast %21 : vector<4x256xi1> to vector<4x256xi1>
    %23 = arith.xori %19, %22 : vector<4x256xi1>
    %24 = arith.andi %23, %17 : vector<4x256xi1>
    %25 = vector.broadcast %13 : i32 to vector<4x256xi32>
    %26 = arith.addi %15, %25 : vector<4x256xi32>
    %27 = arith.select %24, %26, %15 : vector<4x256xi1>, vector<4x256xi32>
    %cst_23 = arith.constant dense<0.000000e+00> : vector<4xf32>
    %28 = vector.multi_reduction <add>, %10, %cst_23 [1] : vector<4x256xf32> to vector<4xf32>
    %29 = vector.shape_cast %28 : vector<4xf32> to vector<4x1xf32>
    %c0_24 = arith.constant 0 : index
    %c0_25 = arith.constant 0 : index
    %c0_26 = arith.constant 0 : index
    %c0_27 = arith.constant 0 : index
    %30 = vector.load %arg8[%c0_24, %c0_25, %c0_26, %c0_27] : memref<1x4x4x1xf32, #tpu.memory_space<vmem>>, vector<1x1x4x1xf32>
    %31 = vector.shape_cast %30 : vector<1x1x4x1xf32> to vector<4x1xf32>
    %32 = vector.shape_cast %29 : vector<4x1xf32> to vector<1x1x4x1xf32>
    tpu.vector_store %arg8[%c0_24, %c0_25, %c0_26, %c0_27], %32 {strides = array<i32>} : memref<1x4x4x1xf32, #tpu.memory_space<vmem>>, vector<1x1x4x1xf32>,
    %33 = arith.mulf %10, %10 : vector<4x256xf32>
    %cst_28 = arith.constant dense<0.000000e+00> : vector<4xf32>
    %34 = vector.multi_reduction <add>, %33, %cst_28 [1] : vector<4x256xf32> to vector<4xf32>
    %35 = vector.shape_cast %34 : vector<4xf32> to vector<4x1xf32>
    %c0_29 = arith.constant 0 : index
    %c0_30 = arith.constant 0 : index
    %c0_31 = arith.constant 0 : index
    %c0_32 = arith.constant 0 : index
    %36 = vector.load %arg9[%c0_29, %c0_30, %c0_31, %c0_32] : memref<1x4x4x1xf32, #tpu.memory_space<vmem>>, vector<1x1x4x1xf32>
    %37 = vector.shape_cast %36 : vector<1x1x4x1xf32> to vector<4x1xf32>
    %38 = vector.shape_cast %35 : vector<4x1xf32> to vector<1x1x4x1xf32>
    tpu.vector_store %arg9[%c0_29, %c0_30, %c0_31, %c0_32], %38 {strides = array<i32>} : memref<1x4x4x1xf32, #tpu.memory_space<vmem>>, vector<1x1x4x1xf32>,
    %39 = vector.extract_strided_slice %4 {offsets = [0, 0, 0, 0], sizes = [1, 1, 4, 1], strides = [1, 1, 1, 1]} : vector<3x3x4x1xf32> to vector<1x1x4x1xf32>
    %40 = vector.shape_cast %39 : vector<1x1x4x1xf32> to vector<4x1xf32>
    %c16_i32_33 = arith.constant 16 : i32
    %41 = tpu.dynamic_rotate %10 by %c16_i32_33 dim 1 : vector<4x256xf32>, i32 -> vector<4x256xf32>
    %c16_i32_34 = arith.constant 16 : i32
    %42 = vector.broadcast %c16_i32_34 : i32 to vector<4x256xi32>
    %43 = arith.cmpi sge, %11, %42 : vector<4x256xi32>
    %cst_35 = arith.constant 0.000000e+00 : f32
    %44 = vector.broadcast %cst_35 : f32 to vector<4x256xf32>
    %45 = arith.select %43, %41, %44 : vector<4x256xi1>, vector<4x256xf32>
    %46 = vector.broadcast %40 : vector<4x1xf32> to vector<4x256xf32>
    %47 = arith.mulf %46, %45 : vector<4x256xf32>
    %48 = vector.extract_strided_slice %4 {offsets = [0, 1, 0, 0], sizes = [1, 1, 4, 1], strides = [1, 1, 1, 1]} : vector<3x3x4x1xf32> to vector<1x1x4x1xf32>
    %49 = vector.shape_cast %48 : vector<1x1x4x1xf32> to vector<4x1xf32>
    %50 = vector.broadcast %49 : vector<4x1xf32> to vector<4x256xf32>
    %51 = arith.mulf %50, %10 : vector<4x256xf32>
    %52 = arith.addf %47, %51 : vector<4x256xf32>
    %53 = vector.extract_strided_slice %4 {offsets = [0, 2, 0, 0], sizes = [1, 1, 4, 1], strides = [1, 1, 1, 1]} : vector<3x3x4x1xf32> to vector<1x1x4x1xf32>
    %54 = vector.shape_cast %53 : vector<1x1x4x1xf32> to vector<4x1xf32>
    %c240_i32 = arith.constant 240 : i32
    %55 = tpu.dynamic_rotate %10 by %c240_i32 dim 1 : vector<4x256xf32>, i32 -> vector<4x256xf32>
    %c240_i32_36 = arith.constant 240 : i32
    %56 = vector.broadcast %c240_i32_36 : i32 to vector<4x256xi32>
    %57 = arith.cmpi slt, %11, %56 : vector<4x256xi32>
    %cst_37 = arith.constant 0.000000e+00 : f32
    %58 = vector.broadcast %cst_37 : f32 to vector<4x256xf32>
    %59 = arith.select %57, %55, %58 : vector<4x256xi1>, vector<4x256xf32>
    %60 = vector.broadcast %54 : vector<4x1xf32> to vector<4x256xf32>
    %61 = arith.mulf %60, %59 : vector<4x256xf32>
    %62 = arith.addf %52, %61 : vector<4x256xf32>
    %63 = vector.extract_strided_slice %5 {offsets = [0, 0, 0], sizes = [1, 4, 1], strides = [1, 1, 1]} : vector<3x4x1xf32> to vector<1x4x1xf32>
    %64 = vector.shape_cast %63 : vector<1x4x1xf32> to vector<4x1xf32>
    %65 = vector.broadcast %64 : vector<4x1xf32> to vector<4x256xf32>
    %66 = arith.addf %62, %65 : vector<4x256xf32>
    %67 = vector.extract_strided_slice %6 {offsets = [0, 0, 0, 0], sizes = [1, 1, 4, 1], strides = [1, 1, 1, 1]} : vector<3x3x4x1xf32> to vector<1x1x4x1xf32>
    %68 = vector.shape_cast %67 : vector<1x1x4x1xf32> to vector<4x1xf32>
    %c1_i32_38 = arith.constant 1 : i32
    %69 = tpu.dynamic_rotate %10 by %c1_i32_38 dim 1 : vector<4x256xf32>, i32 -> vector<4x256xf32>
    %c1_i32_39 = arith.constant 1 : i32
    %70 = vector.broadcast %c1_i32_39 : i32 to vector<4x256xi32>
    %71 = arith.cmpi sge, %27, %70 : vector<4x256xi32>
    %cst_40 = arith.constant 0.000000e+00 : f32
    %72 = vector.broadcast %cst_40 : f32 to vector<4x256xf32>
    %73 = arith.select %71, %69, %72 : vector<4x256xi1>, vector<4x256xf32>
    %74 = vector.broadcast %68 : vector<4x1xf32> to vector<4x256xf32>
    %75 = arith.mulf %74, %73 : vector<4x256xf32>
    %76 = vector.extract_strided_slice %6 {offsets = [0, 1, 0, 0], sizes = [1, 1, 4, 1], strides = [1, 1, 1, 1]} : vector<3x3x4x1xf32> to vector<1x1x4x1xf32>
    %77 = vector.shape_cast %76 : vector<1x1x4x1xf32> to vector<4x1xf32>
    %78 = vector.broadcast %77 : vector<4x1xf32> to vector<4x256xf32>
    %79 = arith.mulf %78, %10 : vector<4x256xf32>
    %80 = arith.addf %75, %79 : vector<4x256xf32>
    %81 = vector.extract_strided_slice %6 {offsets = [0, 2, 0, 0], sizes = [1, 1, 4, 1], strides = [1, 1, 1, 1]} : vector<3x3x4x1xf32> to vector<1x1x4x1xf32>
    %82 = vector.shape_cast %81 : vector<1x1x4x1xf32> to vector<4x1xf32>
    %c255_i32 = arith.constant 255 : i32
    %83 = tpu.dynamic_rotate %10 by %c255_i32 dim 1 : vector<4x256xf32>, i32 -> vector<4x256xf32>
    %c15_i32 = arith.constant 15 : i32
    %84 = vector.broadcast %c15_i32 : i32 to vector<4x256xi32>
    %85 = arith.cmpi slt, %27, %84 : vector<4x256xi32>
    %cst_41 = arith.constant 0.000000e+00 : f32
    %86 = vector.broadcast %cst_41 : f32 to vector<4x256xf32>
    %87 = arith.select %85, %83, %86 : vector<4x256xi1>, vector<4x256xf32>
    %88 = vector.broadcast %82 : vector<4x1xf32> to vector<4x256xf32>
    %89 = arith.mulf %88, %87 : vector<4x256xf32>
    %90 = arith.addf %80, %89 : vector<4x256xf32>
    %91 = vector.extract_strided_slice %7 {offsets = [0, 0, 0], sizes = [1, 4, 1], strides = [1, 1, 1]} : vector<3x4x1xf32> to vector<1x4x1xf32>
    %92 = vector.shape_cast %91 : vector<1x4x1xf32> to vector<4x1xf32>
    %93 = vector.broadcast %92 : vector<4x1xf32> to vector<4x256xf32>
    %94 = arith.addf %90, %93 : vector<4x256xf32>
    %95 = arith.addf %10, %66 : vector<4x256xf32>
    %96 = arith.addf %95, %94 : vector<4x256xf32>
    %cst_42 = arith.constant dense<0.000000e+00> : vector<4xf32>
    %97 = vector.multi_reduction <add>, %96, %cst_42 [1] : vector<4x256xf32> to vector<4xf32>
    %98 = vector.shape_cast %97 : vector<4xf32> to vector<4x1xf32>
    %c0_43 = arith.constant 0 : index
    %c1 = arith.constant 1 : index
    %c0_44 = arith.constant 0 : index
    %c0_45 = arith.constant 0 : index
    %99 = vector.load %arg8[%c0_43, %c1, %c0_44, %c0_45] : memref<1x4x4x1xf32, #tpu.memory_space<vmem>>, vector<1x1x4x1xf32>
    %100 = vector.shape_cast %99 : vector<1x1x4x1xf32> to vector<4x1xf32>
    %101 = vector.shape_cast %98 : vector<4x1xf32> to vector<1x1x4x1xf32>
    tpu.vector_store %arg8[%c0_43, %c1, %c0_44, %c0_45], %101 {strides = array<i32>} : memref<1x4x4x1xf32, #tpu.memory_space<vmem>>, vector<1x1x4x1xf32>,
    %102 = arith.mulf %96, %96 : vector<4x256xf32>
    %cst_46 = arith.constant dense<0.000000e+00> : vector<4xf32>
    %103 = vector.multi_reduction <add>, %102, %cst_46 [1] : vector<4x256xf32> to vector<4xf32>
    %104 = vector.shape_cast %103 : vector<4xf32> to vector<4x1xf32>
    %c0_47 = arith.constant 0 : index
    %c1_48 = arith.constant 1 : index
    %c0_49 = arith.constant 0 : index
    %c0_50 = arith.constant 0 : index
    %105 = vector.load %arg9[%c0_47, %c1_48, %c0_49, %c0_50] : memref<1x4x4x1xf32, #tpu.memory_space<vmem>>, vector<1x1x4x1xf32>
    %106 = vector.shape_cast %105 : vector<1x1x4x1xf32> to vector<4x1xf32>
    %107 = vector.shape_cast %104 : vector<4x1xf32> to vector<1x1x4x1xf32>
    tpu.vector_store %arg9[%c0_47, %c1_48, %c0_49, %c0_50], %107 {strides = array<i32>} : memref<1x4x4x1xf32, #tpu.memory_space<vmem>>, vector<1x1x4x1xf32>,
    %108 = vector.extract_strided_slice %4 {offsets = [1, 0, 0, 0], sizes = [1, 1, 4, 1], strides = [1, 1, 1, 1]} : vector<3x3x4x1xf32> to vector<1x1x4x1xf32>
    %109 = vector.shape_cast %108 : vector<1x1x4x1xf32> to vector<4x1xf32>
    %c32_i32 = arith.constant 32 : i32
    %110 = tpu.dynamic_rotate %10 by %c32_i32 dim 1 : vector<4x256xf32>, i32 -> vector<4x256xf32>
    %c32_i32_51 = arith.constant 32 : i32
    %111 = vector.broadcast %c32_i32_51 : i32 to vector<4x256xi32>
    %112 = arith.cmpi sge, %11, %111 : vector<4x256xi32>
    %cst_52 = arith.constant 0.000000e+00 : f32
    %113 = vector.broadcast %cst_52 : f32 to vector<4x256xf32>
    %114 = arith.select %112, %110, %113 : vector<4x256xi1>, vector<4x256xf32>
    %115 = vector.broadcast %109 : vector<4x1xf32> to vector<4x256xf32>
    %116 = arith.mulf %115, %114 : vector<4x256xf32>
    %117 = vector.extract_strided_slice %4 {offsets = [1, 1, 0, 0], sizes = [1, 1, 4, 1], strides = [1, 1, 1, 1]} : vector<3x3x4x1xf32> to vector<1x1x4x1xf32>
    %118 = vector.shape_cast %117 : vector<1x1x4x1xf32> to vector<4x1xf32>
    %119 = vector.broadcast %118 : vector<4x1xf32> to vector<4x256xf32>
    %120 = arith.mulf %119, %10 : vector<4x256xf32>
    %121 = arith.addf %116, %120 : vector<4x256xf32>
    %122 = vector.extract_strided_slice %4 {offsets = [1, 2, 0, 0], sizes = [1, 1, 4, 1], strides = [1, 1, 1, 1]} : vector<3x3x4x1xf32> to vector<1x1x4x1xf32>
    %123 = vector.shape_cast %122 : vector<1x1x4x1xf32> to vector<4x1xf32>
    %c224_i32 = arith.constant 224 : i32
    %124 = tpu.dynamic_rotate %10 by %c224_i32 dim 1 : vector<4x256xf32>, i32 -> vector<4x256xf32>
    %c224_i32_53 = arith.constant 224 : i32
    %125 = vector.broadcast %c224_i32_53 : i32 to vector<4x256xi32>
    %126 = arith.cmpi slt, %11, %125 : vector<4x256xi32>
    %cst_54 = arith.constant 0.000000e+00 : f32
    %127 = vector.broadcast %cst_54 : f32 to vector<4x256xf32>
    %128 = arith.select %126, %124, %127 : vector<4x256xi1>, vector<4x256xf32>
    %129 = vector.broadcast %123 : vector<4x1xf32> to vector<4x256xf32>
    %130 = arith.mulf %129, %128 : vector<4x256xf32>
    %131 = arith.addf %121, %130 : vector<4x256xf32>
    %132 = vector.extract_strided_slice %5 {offsets = [1, 0, 0], sizes = [1, 4, 1], strides = [1, 1, 1]} : vector<3x4x1xf32> to vector<1x4x1xf32>
    %133 = vector.shape_cast %132 : vector<1x4x1xf32> to vector<4x1xf32>
    %134 = vector.broadcast %133 : vector<4x1xf32> to vector<4x256xf32>
    %135 = arith.addf %131, %134 : vector<4x256xf32>
    %136 = vector.extract_strided_slice %6 {offsets = [1, 0, 0, 0], sizes = [1, 1, 4, 1], strides = [1, 1, 1, 1]} : vector<3x3x4x1xf32> to vector<1x1x4x1xf32>
    %137 = vector.shape_cast %136 : vector<1x1x4x1xf32> to vector<4x1xf32>
    %c2_i32 = arith.constant 2 : i32
    %138 = tpu.dynamic_rotate %10 by %c2_i32 dim 1 : vector<4x256xf32>, i32 -> vector<4x256xf32>
    %c2_i32_55 = arith.constant 2 : i32
    %139 = vector.broadcast %c2_i32_55 : i32 to vector<4x256xi32>
    %140 = arith.cmpi sge, %27, %139 : vector<4x256xi32>
    %cst_56 = arith.constant 0.000000e+00 : f32
    %141 = vector.broadcast %cst_56 : f32 to vector<4x256xf32>
    %142 = arith.select %140, %138, %141 : vector<4x256xi1>, vector<4x256xf32>
    %143 = vector.broadcast %137 : vector<4x1xf32> to vector<4x256xf32>
    %144 = arith.mulf %143, %142 : vector<4x256xf32>
    %145 = vector.extract_strided_slice %6 {offsets = [1, 1, 0, 0], sizes = [1, 1, 4, 1], strides = [1, 1, 1, 1]} : vector<3x3x4x1xf32> to vector<1x1x4x1xf32>
    %146 = vector.shape_cast %145 : vector<1x1x4x1xf32> to vector<4x1xf32>
    %147 = vector.broadcast %146 : vector<4x1xf32> to vector<4x256xf32>
    %148 = arith.mulf %147, %10 : vector<4x256xf32>
    %149 = arith.addf %144, %148 : vector<4x256xf32>
    %150 = vector.extract_strided_slice %6 {offsets = [1, 2, 0, 0], sizes = [1, 1, 4, 1], strides = [1, 1, 1, 1]} : vector<3x3x4x1xf32> to vector<1x1x4x1xf32>
    %151 = vector.shape_cast %150 : vector<1x1x4x1xf32> to vector<4x1xf32>
    %c254_i32 = arith.constant 254 : i32
    %152 = tpu.dynamic_rotate %10 by %c254_i32 dim 1 : vector<4x256xf32>, i32 -> vector<4x256xf32>
    %c14_i32 = arith.constant 14 : i32
    %153 = vector.broadcast %c14_i32 : i32 to vector<4x256xi32>
    %154 = arith.cmpi slt, %27, %153 : vector<4x256xi32>
    %cst_57 = arith.constant 0.000000e+00 : f32
    %155 = vector.broadcast %cst_57 : f32 to vector<4x256xf32>
    %156 = arith.select %154, %152, %155 : vector<4x256xi1>, vector<4x256xf32>
    %157 = vector.broadcast %151 : vector<4x1xf32> to vector<4x256xf32>
    %158 = arith.mulf %157, %156 : vector<4x256xf32>
    %159 = arith.addf %149, %158 : vector<4x256xf32>
    %160 = vector.extract_strided_slice %7 {offsets = [1, 0, 0], sizes = [1, 4, 1], strides = [1, 1, 1]} : vector<3x4x1xf32> to vector<1x4x1xf32>
    %161 = vector.shape_cast %160 : vector<1x4x1xf32> to vector<4x1xf32>
    %162 = vector.broadcast %161 : vector<4x1xf32> to vector<4x256xf32>
    %163 = arith.addf %159, %162 : vector<4x256xf32>
    %164 = arith.addf %10, %135 : vector<4x256xf32>
    %165 = arith.addf %164, %163 : vector<4x256xf32>
    %cst_58 = arith.constant dense<0.000000e+00> : vector<4xf32>
    %166 = vector.multi_reduction <add>, %165, %cst_58 [1] : vector<4x256xf32> to vector<4xf32>
    %167 = vector.shape_cast %166 : vector<4xf32> to vector<4x1xf32>
    %c0_59 = arith.constant 0 : index
    %c2 = arith.constant 2 : index
    %c0_60 = arith.constant 0 : index
    %c0_61 = arith.constant 0 : index
    %168 = vector.load %arg8[%c0_59, %c2, %c0_60, %c0_61] : memref<1x4x4x1xf32, #tpu.memory_space<vmem>>, vector<1x1x4x1xf32>
    %169 = vector.shape_cast %168 : vector<1x1x4x1xf32> to vector<4x1xf32>
    %170 = vector.shape_cast %167 : vector<4x1xf32> to vector<1x1x4x1xf32>
    tpu.vector_store %arg8[%c0_59, %c2, %c0_60, %c0_61], %170 {strides = array<i32>} : memref<1x4x4x1xf32, #tpu.memory_space<vmem>>, vector<1x1x4x1xf32>,
    %171 = arith.mulf %165, %165 : vector<4x256xf32>
    %cst_62 = arith.constant dense<0.000000e+00> : vector<4xf32>
    %172 = vector.multi_reduction <add>, %171, %cst_62 [1] : vector<4x256xf32> to vector<4xf32>
    %173 = vector.shape_cast %172 : vector<4xf32> to vector<4x1xf32>
    %c0_63 = arith.constant 0 : index
    %c2_64 = arith.constant 2 : index
    %c0_65 = arith.constant 0 : index
    %c0_66 = arith.constant 0 : index
    %174 = vector.load %arg9[%c0_63, %c2_64, %c0_65, %c0_66] : memref<1x4x4x1xf32, #tpu.memory_space<vmem>>, vector<1x1x4x1xf32>
    %175 = vector.shape_cast %174 : vector<1x1x4x1xf32> to vector<4x1xf32>
    %176 = vector.shape_cast %173 : vector<4x1xf32> to vector<1x1x4x1xf32>
    tpu.vector_store %arg9[%c0_63, %c2_64, %c0_65, %c0_66], %176 {strides = array<i32>} : memref<1x4x4x1xf32, #tpu.memory_space<vmem>>, vector<1x1x4x1xf32>,
    %177 = vector.extract_strided_slice %4 {offsets = [2, 0, 0, 0], sizes = [1, 1, 4, 1], strides = [1, 1, 1, 1]} : vector<3x3x4x1xf32> to vector<1x1x4x1xf32>
    %178 = vector.shape_cast %177 : vector<1x1x4x1xf32> to vector<4x1xf32>
    %c48_i32 = arith.constant 48 : i32
    %179 = tpu.dynamic_rotate %10 by %c48_i32 dim 1 : vector<4x256xf32>, i32 -> vector<4x256xf32>
    %c48_i32_67 = arith.constant 48 : i32
    %180 = vector.broadcast %c48_i32_67 : i32 to vector<4x256xi32>
    %181 = arith.cmpi sge, %11, %180 : vector<4x256xi32>
    %cst_68 = arith.constant 0.000000e+00 : f32
    %182 = vector.broadcast %cst_68 : f32 to vector<4x256xf32>
    %183 = arith.select %181, %179, %182 : vector<4x256xi1>, vector<4x256xf32>
    %184 = vector.broadcast %178 : vector<4x1xf32> to vector<4x256xf32>
    %185 = arith.mulf %184, %183 : vector<4x256xf32>
    %186 = vector.extract_strided_slice %4 {offsets = [2, 1, 0, 0], sizes = [1, 1, 4, 1], strides = [1, 1, 1, 1]} : vector<3x3x4x1xf32> to vector<1x1x4x1xf32>
    %187 = vector.shape_cast %186 : vector<1x1x4x1xf32> to vector<4x1xf32>
    %188 = vector.broadcast %187 : vector<4x1xf32> to vector<4x256xf32>
    %189 = arith.mulf %188, %10 : vector<4x256xf32>
    %190 = arith.addf %185, %189 : vector<4x256xf32>
    %191 = vector.extract_strided_slice %4 {offsets = [2, 2, 0, 0], sizes = [1, 1, 4, 1], strides = [1, 1, 1, 1]} : vector<3x3x4x1xf32> to vector<1x1x4x1xf32>
    %192 = vector.shape_cast %191 : vector<1x1x4x1xf32> to vector<4x1xf32>
    %c208_i32 = arith.constant 208 : i32
    %193 = tpu.dynamic_rotate %10 by %c208_i32 dim 1 : vector<4x256xf32>, i32 -> vector<4x256xf32>
    %c208_i32_69 = arith.constant 208 : i32
    %194 = vector.broadcast %c208_i32_69 : i32 to vector<4x256xi32>
    %195 = arith.cmpi slt, %11, %194 : vector<4x256xi32>
    %cst_70 = arith.constant 0.000000e+00 : f32
    %196 = vector.broadcast %cst_70 : f32 to vector<4x256xf32>
    %197 = arith.select %195, %193, %196 : vector<4x256xi1>, vector<4x256xf32>
    %198 = vector.broadcast %192 : vector<4x1xf32> to vector<4x256xf32>
    %199 = arith.mulf %198, %197 : vector<4x256xf32>
    %200 = arith.addf %190, %199 : vector<4x256xf32>
    %201 = vector.extract_strided_slice %5 {offsets = [2, 0, 0], sizes = [1, 4, 1], strides = [1, 1, 1]} : vector<3x4x1xf32> to vector<1x4x1xf32>
    %202 = vector.shape_cast %201 : vector<1x4x1xf32> to vector<4x1xf32>
    %203 = vector.broadcast %202 : vector<4x1xf32> to vector<4x256xf32>
    %204 = arith.addf %200, %203 : vector<4x256xf32>
    %205 = vector.extract_strided_slice %6 {offsets = [2, 0, 0, 0], sizes = [1, 1, 4, 1], strides = [1, 1, 1, 1]} : vector<3x3x4x1xf32> to vector<1x1x4x1xf32>
    %206 = vector.shape_cast %205 : vector<1x1x4x1xf32> to vector<4x1xf32>
    %c3_i32 = arith.constant 3 : i32
    %207 = tpu.dynamic_rotate %10 by %c3_i32 dim 1 : vector<4x256xf32>, i32 -> vector<4x256xf32>
    %c3_i32_71 = arith.constant 3 : i32
    %208 = vector.broadcast %c3_i32_71 : i32 to vector<4x256xi32>
    %209 = arith.cmpi sge, %27, %208 : vector<4x256xi32>
    %cst_72 = arith.constant 0.000000e+00 : f32
    %210 = vector.broadcast %cst_72 : f32 to vector<4x256xf32>
    %211 = arith.select %209, %207, %210 : vector<4x256xi1>, vector<4x256xf32>
    %212 = vector.broadcast %206 : vector<4x1xf32> to vector<4x256xf32>
    %213 = arith.mulf %212, %211 : vector<4x256xf32>
    %214 = vector.extract_strided_slice %6 {offsets = [2, 1, 0, 0], sizes = [1, 1, 4, 1], strides = [1, 1, 1, 1]} : vector<3x3x4x1xf32> to vector<1x1x4x1xf32>
    %215 = vector.shape_cast %214 : vector<1x1x4x1xf32> to vector<4x1xf32>
    %216 = vector.broadcast %215 : vector<4x1xf32> to vector<4x256xf32>
    %217 = arith.mulf %216, %10 : vector<4x256xf32>
    %218 = arith.addf %213, %217 : vector<4x256xf32>
    %219 = vector.extract_strided_slice %6 {offsets = [2, 2, 0, 0], sizes = [1, 1, 4, 1], strides = [1, 1, 1, 1]} : vector<3x3x4x1xf32> to vector<1x1x4x1xf32>
    %220 = vector.shape_cast %219 : vector<1x1x4x1xf32> to vector<4x1xf32>
    %c253_i32 = arith.constant 253 : i32
    %221 = tpu.dynamic_rotate %10 by %c253_i32 dim 1 : vector<4x256xf32>, i32 -> vector<4x256xf32>
    %c13_i32 = arith.constant 13 : i32
    %222 = vector.broadcast %c13_i32 : i32 to vector<4x256xi32>
    %223 = arith.cmpi slt, %27, %222 : vector<4x256xi32>
    %cst_73 = arith.constant 0.000000e+00 : f32
    %224 = vector.broadcast %cst_73 : f32 to vector<4x256xf32>
    %225 = arith.select %223, %221, %224 : vector<4x256xi1>, vector<4x256xf32>
    %226 = vector.broadcast %220 : vector<4x1xf32> to vector<4x256xf32>
    %227 = arith.mulf %226, %225 : vector<4x256xf32>
    %228 = arith.addf %218, %227 : vector<4x256xf32>
    %229 = vector.extract_strided_slice %7 {offsets = [2, 0, 0], sizes = [1, 4, 1], strides = [1, 1, 1]} : vector<3x4x1xf32> to vector<1x4x1xf32>
    %230 = vector.shape_cast %229 : vector<1x4x1xf32> to vector<4x1xf32>
    %231 = vector.broadcast %230 : vector<4x1xf32> to vector<4x256xf32>
    %232 = arith.addf %228, %231 : vector<4x256xf32>
    %233 = arith.addf %10, %204 : vector<4x256xf32>
    %234 = arith.addf %233, %232 : vector<4x256xf32>
    %cst_74 = arith.constant dense<0.000000e+00> : vector<4xf32>
    %235 = vector.multi_reduction <add>, %234, %cst_74 [1] : vector<4x256xf32> to vector<4xf32>
    %236 = vector.shape_cast %235 : vector<4xf32> to vector<4x1xf32>
    %c0_75 = arith.constant 0 : index
    %c3 = arith.constant 3 : index
    %c0_76 = arith.constant 0 : index
    %c0_77 = arith.constant 0 : index
    %237 = vector.load %arg8[%c0_75, %c3, %c0_76, %c0_77] : memref<1x4x4x1xf32, #tpu.memory_space<vmem>>, vector<1x1x4x1xf32>
    %238 = vector.shape_cast %237 : vector<1x1x4x1xf32> to vector<4x1xf32>
    %239 = vector.shape_cast %236 : vector<4x1xf32> to vector<1x1x4x1xf32>
    tpu.vector_store %arg8[%c0_75, %c3, %c0_76, %c0_77], %239 {strides = array<i32>} : memref<1x4x4x1xf32, #tpu.memory_space<vmem>>, vector<1x1x4x1xf32>,
    %240 = arith.mulf %234, %234 : vector<4x256xf32>
    %cst_78 = arith.constant dense<0.000000e+00> : vector<4xf32>
    %241 = vector.multi_reduction <add>, %240, %cst_78 [1] : vector<4x256xf32> to vector<4xf32>
    %242 = vector.shape_cast %241 : vector<4xf32> to vector<4x1xf32>
    %c0_79 = arith.constant 0 : index
    %c3_80 = arith.constant 3 : index
    %c0_81 = arith.constant 0 : index
    %c0_82 = arith.constant 0 : index
    %243 = vector.load %arg9[%c0_79, %c3_80, %c0_81, %c0_82] : memref<1x4x4x1xf32, #tpu.memory_space<vmem>>, vector<1x1x4x1xf32>
    %244 = vector.shape_cast %243 : vector<1x1x4x1xf32> to vector<4x1xf32>
    %245 = vector.shape_cast %242 : vector<4x1xf32> to vector<1x1x4x1xf32>
    tpu.vector_store %arg9[%c0_79, %c3_80, %c0_81, %c0_82], %245 {strides = array<i32>} : memref<1x4x4x1xf32, #tpu.memory_space<vmem>>, vector<1x1x4x1xf32>,
    return
  }
  func.func @transform_0(%arg0: i32) -> (i32, i32, i32) {
    %c0_i32 = arith.constant 0 : i32
    %c0_i32_0 = arith.constant 0 : i32
    %c0_i32_1 = arith.constant 0 : i32
    return %arg0, %c0_i32, %c0_i32_0 : i32, i32, i32
  }
  func.func @transform_1(%arg0: i32) -> (i32, i32) {
    %c0_i32 = arith.constant 0 : i32
    %c0_i32_0 = arith.constant 0 : i32
    %c0_i32_1 = arith.constant 0 : i32
    return %c0_i32, %c0_i32_0 : i32, i32
  }
  func.func @transform_2(%arg0: i32) -> (i32, i32) {
    %c0_i32 = arith.constant 0 : i32
    %c0_i32_0 = arith.constant 0 : i32
    %c0_i32_1 = arith.constant 0 : i32
    return %c0_i32, %c0_i32_0 : i32, i32
  }
  func.func @transform_3(%arg0: i32) -> (i32, i32, i32, i32) {
    %c0_i32 = arith.constant 0 : i32
    %c0_i32_0 = arith.constant 0 : i32
    %c0_i32_1 = arith.constant 0 : i32
    %c0_i32_2 = arith.constant 0 : i32
    %c0_i32_3 = arith.constant 0 : i32
    return %c0_i32, %c0_i32_0, %c0_i32_1, %c0_i32_2 : i32, i32, i32, i32
  }
  func.func @transform_4(%arg0: i32) -> (i32, i32, i32) {
    %c0_i32 = arith.constant 0 : i32
    %c0_i32_0 = arith.constant 0 : i32
    %c0_i32_1 = arith.constant 0 : i32
    %c0_i32_2 = arith.constant 0 : i32
    return %c0_i32, %c0_i32_0, %c0_i32_1 : i32, i32, i32
  }
  func.func @transform_5(%arg0: i32) -> (i32, i32, i32, i32) {
    %c0_i32 = arith.constant 0 : i32
    %c0_i32_0 = arith.constant 0 : i32
    %c0_i32_1 = arith.constant 0 : i32
    %c0_i32_2 = arith.constant 0 : i32
    %c0_i32_3 = arith.constant 0 : i32
    return %c0_i32, %c0_i32_0, %c0_i32_1, %c0_i32_2 : i32, i32, i32, i32
  }
  func.func @transform_6(%arg0: i32) -> (i32, i32, i32) {
    %c0_i32 = arith.constant 0 : i32
    %c0_i32_0 = arith.constant 0 : i32
    %c0_i32_1 = arith.constant 0 : i32
    %c0_i32_2 = arith.constant 0 : i32
    return %c0_i32, %c0_i32_0, %c0_i32_1 : i32, i32, i32
  }
  func.func @transform_7(%arg0: i32) -> (i32, i32, i32, i32) {
    %c0_i32 = arith.constant 0 : i32
    %c0_i32_0 = arith.constant 0 : i32
    %c0_i32_1 = arith.constant 0 : i32
    %c0_i32_2 = arith.constant 0 : i32
    return %arg0, %c0_i32, %c0_i32_0, %c0_i32_1 : i32, i32, i32, i32
  }
  func.func @transform_8(%arg0: i32) -> (i32, i32, i32, i32) {
    %c0_i32 = arith.constant 0 : i32
    %c0_i32_0 = arith.constant 0 : i32
    %c0_i32_1 = arith.constant 0 : i32
    %c0_i32_2 = arith.constant 0 : i32
    return %arg0, %c0_i32, %c0_i32_0, %c0_i32_1 : i32, i32, i32, i32
  }
}

module attributes {stable_mosaic.version = 11 : i64} {
  func.func @fused_kernel(%arg0: i32, %arg1: memref<1x16x256xbf16, #tpu.memory_space<vmem>>, %arg2: memref<4x16xbf16, #tpu.memory_space<vmem>>, %arg3: memref<4x1xf32, #tpu.memory_space<vmem>>, %arg4: memref<3x3x4x1xf32, #tpu.memory_space<vmem>>, %arg5: memref<3x4x1xf32, #tpu.memory_space<vmem>>, %arg6: memref<3x3x4x1xf32, #tpu.memory_space<vmem>>, %arg7: memref<3x4x1xf32, #tpu.memory_space<vmem>>, %arg8: memref<4x16x4xbf16, #tpu.memory_space<vmem>>, %arg9: memref<16x1xf32, #tpu.memory_space<vmem>>, %arg10: memref<1x16x256xf32, #tpu.memory_space<vmem>>) attributes {dimension_semantics = [#tpu.dimension_semantics<parallel>], iteration_bounds = array<i64: 2>, scalar_prefetch = 0 : i64, scratch_operands = 0 : i64, tpu.core_type = #tpu.core_type<tc>, window_params = [{transform_indices = @transform_0, window_bounds = array<i64: 1, 16, 256>}, {pipeline_mode = #tpu.pipeline_mode<synchronous>, transform_indices = @transform_1, window_bounds = array<i64: 4, 16>}, {pipeline_mode = #tpu.pipeline_mode<synchronous>, transform_indices = @transform_2, window_bounds = array<i64: 4, 1>}, {pipeline_mode = #tpu.pipeline_mode<synchronous>, transform_indices = @transform_3, window_bounds = array<i64: 3, 3, 4, 1>}, {pipeline_mode = #tpu.pipeline_mode<synchronous>, transform_indices = @transform_4, window_bounds = array<i64: 3, 4, 1>}, {pipeline_mode = #tpu.pipeline_mode<synchronous>, transform_indices = @transform_5, window_bounds = array<i64: 3, 3, 4, 1>}, {pipeline_mode = #tpu.pipeline_mode<synchronous>, transform_indices = @transform_6, window_bounds = array<i64: 3, 4, 1>}, {pipeline_mode = #tpu.pipeline_mode<synchronous>, transform_indices = @transform_7, window_bounds = array<i64: 4, 16, 4>}, {pipeline_mode = #tpu.pipeline_mode<synchronous>, transform_indices = @transform_8, window_bounds = array<i64: 16, 1>}, {transform_indices = @transform_9, window_bounds = array<i64: 1, 16, 256>}]} {
    %c0 = arith.constant 0 : index
    %c0_0 = arith.constant 0 : index
    %c0_1 = arith.constant 0 : index
    %0 = vector.load %arg1[%c0, %c0_0, %c0_1] : memref<1x16x256xbf16, #tpu.memory_space<vmem>>, vector<1x16x256xbf16>
    %1 = vector.shape_cast %0 : vector<1x16x256xbf16> to vector<16x256xbf16>
    %c0_2 = arith.constant 0 : index
    %c0_3 = arith.constant 0 : index
    %c0_4 = arith.constant 0 : index
    %2 = vector.load %arg8[%c0_2, %c0_3, %c0_4] : memref<4x16x4xbf16, #tpu.memory_space<vmem>>, vector<4x16x4xbf16>
    %c0_5 = arith.constant 0 : index
    %c0_6 = arith.constant 0 : index
    %3 = vector.load %arg2[%c0_5, %c0_6] : memref<4x16xbf16, #tpu.memory_space<vmem>>, vector<4x16xbf16>
    %c0_7 = arith.constant 0 : index
    %c0_8 = arith.constant 0 : index
    %4 = vector.load %arg3[%c0_7, %c0_8] : memref<4x1xf32, #tpu.memory_space<vmem>>, vector<4x1xf32>
    %c0_9 = arith.constant 0 : index
    %c0_10 = arith.constant 0 : index
    %c0_11 = arith.constant 0 : index
    %c0_12 = arith.constant 0 : index
    %5 = vector.load %arg4[%c0_9, %c0_10, %c0_11, %c0_12] : memref<3x3x4x1xf32, #tpu.memory_space<vmem>>, vector<3x3x4x1xf32>
    %c0_13 = arith.constant 0 : index
    %c0_14 = arith.constant 0 : index
    %c0_15 = arith.constant 0 : index
    %6 = vector.load %arg5[%c0_13, %c0_14, %c0_15] : memref<3x4x1xf32, #tpu.memory_space<vmem>>, vector<3x4x1xf32>
    %c0_16 = arith.constant 0 : index
    %c0_17 = arith.constant 0 : index
    %c0_18 = arith.constant 0 : index
    %c0_19 = arith.constant 0 : index
    %7 = vector.load %arg6[%c0_16, %c0_17, %c0_18, %c0_19] : memref<3x3x4x1xf32, #tpu.memory_space<vmem>>, vector<3x3x4x1xf32>
    %c0_20 = arith.constant 0 : index
    %c0_21 = arith.constant 0 : index
    %c0_22 = arith.constant 0 : index
    %8 = vector.load %arg7[%c0_20, %c0_21, %c0_22] : memref<3x4x1xf32, #tpu.memory_space<vmem>>, vector<3x4x1xf32>
    %cst = arith.constant dense<0.000000e+00> : vector<4x256xf32>
    %9 = tpu.matmul %3, %1, %cst {dimension_numbers = #tpu.dot_dimension_numbers<[1], [0], [0], [1], [0, 0, 1, 1], [], []>} : vector<4x16xbf16>, vector<16x256xbf16>, vector<4x256xf32> -> vector<4x256xf32>
    %10 = vector.broadcast %4 : vector<4x1xf32> to vector<4x256xf32>
    %11 = arith.addf %9, %10 : vector<4x256xf32>
    %12 = tpu.iota {dimensions = array<i32: 1>} : vector<4x256xi32>
    %c16_i32 = arith.constant 16 : i32
    %c0_i32 = arith.constant 0 : i32
    %13 = arith.cmpi eq, %c16_i32, %c0_i32 : i32
    %c1_i32 = arith.constant 1 : i32
    %14 = arith.select %13, %c1_i32, %c16_i32 : i32
    %15 = vector.broadcast %14 : i32 to vector<4x256xi32>
    %16 = arith.remsi %12, %15 : vector<4x256xi32>
    %c0_i32_23 = arith.constant 0 : i32
    %17 = vector.broadcast %c0_i32_23 : i32 to vector<4x256xi32>
    %18 = arith.cmpi ne, %16, %17 : vector<4x256xi32>
    %c0_i32_24 = arith.constant 0 : i32
    %19 = vector.broadcast %c0_i32_24 : i32 to vector<4x256xi32>
    %20 = arith.cmpi slt, %16, %19 : vector<4x256xi32>
    %c0_i32_25 = arith.constant 0 : i32
    %21 = arith.cmpi slt, %14, %c0_i32_25 : i32
    %22 = vector.broadcast %21 : i1 to vector<4x256xi1>
    %23 = vector.broadcast %22 : vector<4x256xi1> to vector<4x256xi1>
    %24 = arith.xori %20, %23 : vector<4x256xi1>
    %25 = arith.andi %24, %18 : vector<4x256xi1>
    %26 = vector.broadcast %14 : i32 to vector<4x256xi32>
    %27 = arith.addi %16, %26 : vector<4x256xi32>
    %28 = arith.select %25, %27, %16 : vector<4x256xi1>, vector<4x256xi32>
    %29 = vector.extract_strided_slice %2 {offsets = [0, 0, 0], sizes = [1, 16, 4], strides = [1, 1, 1]} : vector<4x16x4xbf16> to vector<1x16x4xbf16>
    %30 = vector.shape_cast %29 : vector<1x16x4xbf16> to vector<16x4xbf16>
    %31 = arith.truncf %11 : vector<4x256xf32> to vector<4x256xbf16>
    %cst_26 = arith.constant dense<0.000000e+00> : vector<16x256xf32>
    %32 = tpu.matmul %30, %31, %cst_26 {dimension_numbers = #tpu.dot_dimension_numbers<[1], [0], [0], [1], [0, 0, 1, 1], [], []>} : vector<16x4xbf16>, vector<4x256xbf16>, vector<16x256xf32> -> vector<16x256xf32>
    %33 = vector.extract_strided_slice %5 {offsets = [0, 0, 0, 0], sizes = [1, 1, 4, 1], strides = [1, 1, 1, 1]} : vector<3x3x4x1xf32> to vector<1x1x4x1xf32>
    %34 = vector.shape_cast %33 : vector<1x1x4x1xf32> to vector<4x1xf32>
    %c16_i32_27 = arith.constant 16 : i32
    %35 = tpu.dynamic_rotate %11 by %c16_i32_27 dim 1 : vector<4x256xf32>, i32 -> vector<4x256xf32>
    %c16_i32_28 = arith.constant 16 : i32
    %36 = vector.broadcast %c16_i32_28 : i32 to vector<4x256xi32>
    %37 = arith.cmpi sge, %12, %36 : vector<4x256xi32>
    %cst_29 = arith.constant 0.000000e+00 : f32
    %38 = vector.broadcast %cst_29 : f32 to vector<4x256xf32>
    %39 = arith.select %37, %35, %38 : vector<4x256xi1>, vector<4x256xf32>
    %40 = vector.broadcast %34 : vector<4x1xf32> to vector<4x256xf32>
    %41 = arith.mulf %40, %39 : vector<4x256xf32>
    %42 = vector.extract_strided_slice %5 {offsets = [0, 1, 0, 0], sizes = [1, 1, 4, 1], strides = [1, 1, 1, 1]} : vector<3x3x4x1xf32> to vector<1x1x4x1xf32>
    %43 = vector.shape_cast %42 : vector<1x1x4x1xf32> to vector<4x1xf32>
    %44 = vector.broadcast %43 : vector<4x1xf32> to vector<4x256xf32>
    %45 = arith.mulf %44, %11 : vector<4x256xf32>
    %46 = arith.addf %41, %45 : vector<4x256xf32>
    %47 = vector.extract_strided_slice %5 {offsets = [0, 2, 0, 0], sizes = [1, 1, 4, 1], strides = [1, 1, 1, 1]} : vector<3x3x4x1xf32> to vector<1x1x4x1xf32>
    %48 = vector.shape_cast %47 : vector<1x1x4x1xf32> to vector<4x1xf32>
    %c240_i32 = arith.constant 240 : i32
    %49 = tpu.dynamic_rotate %11 by %c240_i32 dim 1 : vector<4x256xf32>, i32 -> vector<4x256xf32>
    %c240_i32_30 = arith.constant 240 : i32
    %50 = vector.broadcast %c240_i32_30 : i32 to vector<4x256xi32>
    %51 = arith.cmpi slt, %12, %50 : vector<4x256xi32>
    %cst_31 = arith.constant 0.000000e+00 : f32
    %52 = vector.broadcast %cst_31 : f32 to vector<4x256xf32>
    %53 = arith.select %51, %49, %52 : vector<4x256xi1>, vector<4x256xf32>
    %54 = vector.broadcast %48 : vector<4x1xf32> to vector<4x256xf32>
    %55 = arith.mulf %54, %53 : vector<4x256xf32>
    %56 = arith.addf %46, %55 : vector<4x256xf32>
    %57 = vector.extract_strided_slice %6 {offsets = [0, 0, 0], sizes = [1, 4, 1], strides = [1, 1, 1]} : vector<3x4x1xf32> to vector<1x4x1xf32>
    %58 = vector.shape_cast %57 : vector<1x4x1xf32> to vector<4x1xf32>
    %59 = vector.broadcast %58 : vector<4x1xf32> to vector<4x256xf32>
    %60 = arith.addf %56, %59 : vector<4x256xf32>
    %61 = vector.extract_strided_slice %7 {offsets = [0, 0, 0, 0], sizes = [1, 1, 4, 1], strides = [1, 1, 1, 1]} : vector<3x3x4x1xf32> to vector<1x1x4x1xf32>
    %62 = vector.shape_cast %61 : vector<1x1x4x1xf32> to vector<4x1xf32>
    %c1_i32_32 = arith.constant 1 : i32
    %63 = tpu.dynamic_rotate %11 by %c1_i32_32 dim 1 : vector<4x256xf32>, i32 -> vector<4x256xf32>
    %c1_i32_33 = arith.constant 1 : i32
    %64 = vector.broadcast %c1_i32_33 : i32 to vector<4x256xi32>
    %65 = arith.cmpi sge, %28, %64 : vector<4x256xi32>
    %cst_34 = arith.constant 0.000000e+00 : f32
    %66 = vector.broadcast %cst_34 : f32 to vector<4x256xf32>
    %67 = arith.select %65, %63, %66 : vector<4x256xi1>, vector<4x256xf32>
    %68 = vector.broadcast %62 : vector<4x1xf32> to vector<4x256xf32>
    %69 = arith.mulf %68, %67 : vector<4x256xf32>
    %70 = vector.extract_strided_slice %7 {offsets = [0, 1, 0, 0], sizes = [1, 1, 4, 1], strides = [1, 1, 1, 1]} : vector<3x3x4x1xf32> to vector<1x1x4x1xf32>
    %71 = vector.shape_cast %70 : vector<1x1x4x1xf32> to vector<4x1xf32>
    %72 = vector.broadcast %71 : vector<4x1xf32> to vector<4x256xf32>
    %73 = arith.mulf %72, %11 : vector<4x256xf32>
    %74 = arith.addf %69, %73 : vector<4x256xf32>
    %75 = vector.extract_strided_slice %7 {offsets = [0, 2, 0, 0], sizes = [1, 1, 4, 1], strides = [1, 1, 1, 1]} : vector<3x3x4x1xf32> to vector<1x1x4x1xf32>
    %76 = vector.shape_cast %75 : vector<1x1x4x1xf32> to vector<4x1xf32>
    %c255_i32 = arith.constant 255 : i32
    %77 = tpu.dynamic_rotate %11 by %c255_i32 dim 1 : vector<4x256xf32>, i32 -> vector<4x256xf32>
    %c15_i32 = arith.constant 15 : i32
    %78 = vector.broadcast %c15_i32 : i32 to vector<4x256xi32>
    %79 = arith.cmpi slt, %28, %78 : vector<4x256xi32>
    %cst_35 = arith.constant 0.000000e+00 : f32
    %80 = vector.broadcast %cst_35 : f32 to vector<4x256xf32>
    %81 = arith.select %79, %77, %80 : vector<4x256xi1>, vector<4x256xf32>
    %82 = vector.broadcast %76 : vector<4x1xf32> to vector<4x256xf32>
    %83 = arith.mulf %82, %81 : vector<4x256xf32>
    %84 = arith.addf %74, %83 : vector<4x256xf32>
    %85 = vector.extract_strided_slice %8 {offsets = [0, 0, 0], sizes = [1, 4, 1], strides = [1, 1, 1]} : vector<3x4x1xf32> to vector<1x4x1xf32>
    %86 = vector.shape_cast %85 : vector<1x4x1xf32> to vector<4x1xf32>
    %87 = vector.broadcast %86 : vector<4x1xf32> to vector<4x256xf32>
    %88 = arith.addf %84, %87 : vector<4x256xf32>
    %89 = arith.addf %11, %60 : vector<4x256xf32>
    %90 = arith.addf %89, %88 : vector<4x256xf32>
    %91 = vector.extract_strided_slice %2 {offsets = [1, 0, 0], sizes = [1, 16, 4], strides = [1, 1, 1]} : vector<4x16x4xbf16> to vector<1x16x4xbf16>
    %92 = vector.shape_cast %91 : vector<1x16x4xbf16> to vector<16x4xbf16>
    %93 = arith.truncf %90 : vector<4x256xf32> to vector<4x256xbf16>
    %cst_36 = arith.constant dense<0.000000e+00> : vector<16x256xf32>
    %94 = tpu.matmul %92, %93, %cst_36 {dimension_numbers = #tpu.dot_dimension_numbers<[1], [0], [0], [1], [0, 0, 1, 1], [], []>} : vector<16x4xbf16>, vector<4x256xbf16>, vector<16x256xf32> -> vector<16x256xf32>
    %95 = arith.addf %32, %94 : vector<16x256xf32>
    %96 = vector.extract_strided_slice %5 {offsets = [1, 0, 0, 0], sizes = [1, 1, 4, 1], strides = [1, 1, 1, 1]} : vector<3x3x4x1xf32> to vector<1x1x4x1xf32>
    %97 = vector.shape_cast %96 : vector<1x1x4x1xf32> to vector<4x1xf32>
    %c32_i32 = arith.constant 32 : i32
    %98 = tpu.dynamic_rotate %11 by %c32_i32 dim 1 : vector<4x256xf32>, i32 -> vector<4x256xf32>
    %c32_i32_37 = arith.constant 32 : i32
    %99 = vector.broadcast %c32_i32_37 : i32 to vector<4x256xi32>
    %100 = arith.cmpi sge, %12, %99 : vector<4x256xi32>
    %cst_38 = arith.constant 0.000000e+00 : f32
    %101 = vector.broadcast %cst_38 : f32 to vector<4x256xf32>
    %102 = arith.select %100, %98, %101 : vector<4x256xi1>, vector<4x256xf32>
    %103 = vector.broadcast %97 : vector<4x1xf32> to vector<4x256xf32>
    %104 = arith.mulf %103, %102 : vector<4x256xf32>
    %105 = vector.extract_strided_slice %5 {offsets = [1, 1, 0, 0], sizes = [1, 1, 4, 1], strides = [1, 1, 1, 1]} : vector<3x3x4x1xf32> to vector<1x1x4x1xf32>
    %106 = vector.shape_cast %105 : vector<1x1x4x1xf32> to vector<4x1xf32>
    %107 = vector.broadcast %106 : vector<4x1xf32> to vector<4x256xf32>
    %108 = arith.mulf %107, %11 : vector<4x256xf32>
    %109 = arith.addf %104, %108 : vector<4x256xf32>
    %110 = vector.extract_strided_slice %5 {offsets = [1, 2, 0, 0], sizes = [1, 1, 4, 1], strides = [1, 1, 1, 1]} : vector<3x3x4x1xf32> to vector<1x1x4x1xf32>
    %111 = vector.shape_cast %110 : vector<1x1x4x1xf32> to vector<4x1xf32>
    %c224_i32 = arith.constant 224 : i32
    %112 = tpu.dynamic_rotate %11 by %c224_i32 dim 1 : vector<4x256xf32>, i32 -> vector<4x256xf32>
    %c224_i32_39 = arith.constant 224 : i32
    %113 = vector.broadcast %c224_i32_39 : i32 to vector<4x256xi32>
    %114 = arith.cmpi slt, %12, %113 : vector<4x256xi32>
    %cst_40 = arith.constant 0.000000e+00 : f32
    %115 = vector.broadcast %cst_40 : f32 to vector<4x256xf32>
    %116 = arith.select %114, %112, %115 : vector<4x256xi1>, vector<4x256xf32>
    %117 = vector.broadcast %111 : vector<4x1xf32> to vector<4x256xf32>
    %118 = arith.mulf %117, %116 : vector<4x256xf32>
    %119 = arith.addf %109, %118 : vector<4x256xf32>
    %120 = vector.extract_strided_slice %6 {offsets = [1, 0, 0], sizes = [1, 4, 1], strides = [1, 1, 1]} : vector<3x4x1xf32> to vector<1x4x1xf32>
    %121 = vector.shape_cast %120 : vector<1x4x1xf32> to vector<4x1xf32>
    %122 = vector.broadcast %121 : vector<4x1xf32> to vector<4x256xf32>
    %123 = arith.addf %119, %122 : vector<4x256xf32>
    %124 = vector.extract_strided_slice %7 {offsets = [1, 0, 0, 0], sizes = [1, 1, 4, 1], strides = [1, 1, 1, 1]} : vector<3x3x4x1xf32> to vector<1x1x4x1xf32>
    %125 = vector.shape_cast %124 : vector<1x1x4x1xf32> to vector<4x1xf32>
    %c2_i32 = arith.constant 2 : i32
    %126 = tpu.dynamic_rotate %11 by %c2_i32 dim 1 : vector<4x256xf32>, i32 -> vector<4x256xf32>
    %c2_i32_41 = arith.constant 2 : i32
    %127 = vector.broadcast %c2_i32_41 : i32 to vector<4x256xi32>
    %128 = arith.cmpi sge, %28, %127 : vector<4x256xi32>
    %cst_42 = arith.constant 0.000000e+00 : f32
    %129 = vector.broadcast %cst_42 : f32 to vector<4x256xf32>
    %130 = arith.select %128, %126, %129 : vector<4x256xi1>, vector<4x256xf32>
    %131 = vector.broadcast %125 : vector<4x1xf32> to vector<4x256xf32>
    %132 = arith.mulf %131, %130 : vector<4x256xf32>
    %133 = vector.extract_strided_slice %7 {offsets = [1, 1, 0, 0], sizes = [1, 1, 4, 1], strides = [1, 1, 1, 1]} : vector<3x3x4x1xf32> to vector<1x1x4x1xf32>
    %134 = vector.shape_cast %133 : vector<1x1x4x1xf32> to vector<4x1xf32>
    %135 = vector.broadcast %134 : vector<4x1xf32> to vector<4x256xf32>
    %136 = arith.mulf %135, %11 : vector<4x256xf32>
    %137 = arith.addf %132, %136 : vector<4x256xf32>
    %138 = vector.extract_strided_slice %7 {offsets = [1, 2, 0, 0], sizes = [1, 1, 4, 1], strides = [1, 1, 1, 1]} : vector<3x3x4x1xf32> to vector<1x1x4x1xf32>
    %139 = vector.shape_cast %138 : vector<1x1x4x1xf32> to vector<4x1xf32>
    %c254_i32 = arith.constant 254 : i32
    %140 = tpu.dynamic_rotate %11 by %c254_i32 dim 1 : vector<4x256xf32>, i32 -> vector<4x256xf32>
    %c14_i32 = arith.constant 14 : i32
    %141 = vector.broadcast %c14_i32 : i32 to vector<4x256xi32>
    %142 = arith.cmpi slt, %28, %141 : vector<4x256xi32>
    %cst_43 = arith.constant 0.000000e+00 : f32
    %143 = vector.broadcast %cst_43 : f32 to vector<4x256xf32>
    %144 = arith.select %142, %140, %143 : vector<4x256xi1>, vector<4x256xf32>
    %145 = vector.broadcast %139 : vector<4x1xf32> to vector<4x256xf32>
    %146 = arith.mulf %145, %144 : vector<4x256xf32>
    %147 = arith.addf %137, %146 : vector<4x256xf32>
    %148 = vector.extract_strided_slice %8 {offsets = [1, 0, 0], sizes = [1, 4, 1], strides = [1, 1, 1]} : vector<3x4x1xf32> to vector<1x4x1xf32>
    %149 = vector.shape_cast %148 : vector<1x4x1xf32> to vector<4x1xf32>
    %150 = vector.broadcast %149 : vector<4x1xf32> to vector<4x256xf32>
    %151 = arith.addf %147, %150 : vector<4x256xf32>
    %152 = arith.addf %11, %123 : vector<4x256xf32>
    %153 = arith.addf %152, %151 : vector<4x256xf32>
    %154 = vector.extract_strided_slice %2 {offsets = [2, 0, 0], sizes = [1, 16, 4], strides = [1, 1, 1]} : vector<4x16x4xbf16> to vector<1x16x4xbf16>
    %155 = vector.shape_cast %154 : vector<1x16x4xbf16> to vector<16x4xbf16>
    %156 = arith.truncf %153 : vector<4x256xf32> to vector<4x256xbf16>
    %cst_44 = arith.constant dense<0.000000e+00> : vector<16x256xf32>
    %157 = tpu.matmul %155, %156, %cst_44 {dimension_numbers = #tpu.dot_dimension_numbers<[1], [0], [0], [1], [0, 0, 1, 1], [], []>} : vector<16x4xbf16>, vector<4x256xbf16>, vector<16x256xf32> -> vector<16x256xf32>
    %158 = arith.addf %95, %157 : vector<16x256xf32>
    %159 = vector.extract_strided_slice %5 {offsets = [2, 0, 0, 0], sizes = [1, 1, 4, 1], strides = [1, 1, 1, 1]} : vector<3x3x4x1xf32> to vector<1x1x4x1xf32>
    %160 = vector.shape_cast %159 : vector<1x1x4x1xf32> to vector<4x1xf32>
    %c48_i32 = arith.constant 48 : i32
    %161 = tpu.dynamic_rotate %11 by %c48_i32 dim 1 : vector<4x256xf32>, i32 -> vector<4x256xf32>
    %c48_i32_45 = arith.constant 48 : i32
    %162 = vector.broadcast %c48_i32_45 : i32 to vector<4x256xi32>
    %163 = arith.cmpi sge, %12, %162 : vector<4x256xi32>
    %cst_46 = arith.constant 0.000000e+00 : f32
    %164 = vector.broadcast %cst_46 : f32 to vector<4x256xf32>
    %165 = arith.select %163, %161, %164 : vector<4x256xi1>, vector<4x256xf32>
    %166 = vector.broadcast %160 : vector<4x1xf32> to vector<4x256xf32>
    %167 = arith.mulf %166, %165 : vector<4x256xf32>
    %168 = vector.extract_strided_slice %5 {offsets = [2, 1, 0, 0], sizes = [1, 1, 4, 1], strides = [1, 1, 1, 1]} : vector<3x3x4x1xf32> to vector<1x1x4x1xf32>
    %169 = vector.shape_cast %168 : vector<1x1x4x1xf32> to vector<4x1xf32>
    %170 = vector.broadcast %169 : vector<4x1xf32> to vector<4x256xf32>
    %171 = arith.mulf %170, %11 : vector<4x256xf32>
    %172 = arith.addf %167, %171 : vector<4x256xf32>
    %173 = vector.extract_strided_slice %5 {offsets = [2, 2, 0, 0], sizes = [1, 1, 4, 1], strides = [1, 1, 1, 1]} : vector<3x3x4x1xf32> to vector<1x1x4x1xf32>
    %174 = vector.shape_cast %173 : vector<1x1x4x1xf32> to vector<4x1xf32>
    %c208_i32 = arith.constant 208 : i32
    %175 = tpu.dynamic_rotate %11 by %c208_i32 dim 1 : vector<4x256xf32>, i32 -> vector<4x256xf32>
    %c208_i32_47 = arith.constant 208 : i32
    %176 = vector.broadcast %c208_i32_47 : i32 to vector<4x256xi32>
    %177 = arith.cmpi slt, %12, %176 : vector<4x256xi32>
    %cst_48 = arith.constant 0.000000e+00 : f32
    %178 = vector.broadcast %cst_48 : f32 to vector<4x256xf32>
    %179 = arith.select %177, %175, %178 : vector<4x256xi1>, vector<4x256xf32>
    %180 = vector.broadcast %174 : vector<4x1xf32> to vector<4x256xf32>
    %181 = arith.mulf %180, %179 : vector<4x256xf32>
    %182 = arith.addf %172, %181 : vector<4x256xf32>
    %183 = vector.extract_strided_slice %6 {offsets = [2, 0, 0], sizes = [1, 4, 1], strides = [1, 1, 1]} : vector<3x4x1xf32> to vector<1x4x1xf32>
    %184 = vector.shape_cast %183 : vector<1x4x1xf32> to vector<4x1xf32>
    %185 = vector.broadcast %184 : vector<4x1xf32> to vector<4x256xf32>
    %186 = arith.addf %182, %185 : vector<4x256xf32>
    %187 = vector.extract_strided_slice %7 {offsets = [2, 0, 0, 0], sizes = [1, 1, 4, 1], strides = [1, 1, 1, 1]} : vector<3x3x4x1xf32> to vector<1x1x4x1xf32>
    %188 = vector.shape_cast %187 : vector<1x1x4x1xf32> to vector<4x1xf32>
    %c3_i32 = arith.constant 3 : i32
    %189 = tpu.dynamic_rotate %11 by %c3_i32 dim 1 : vector<4x256xf32>, i32 -> vector<4x256xf32>
    %c3_i32_49 = arith.constant 3 : i32
    %190 = vector.broadcast %c3_i32_49 : i32 to vector<4x256xi32>
    %191 = arith.cmpi sge, %28, %190 : vector<4x256xi32>
    %cst_50 = arith.constant 0.000000e+00 : f32
    %192 = vector.broadcast %cst_50 : f32 to vector<4x256xf32>
    %193 = arith.select %191, %189, %192 : vector<4x256xi1>, vector<4x256xf32>
    %194 = vector.broadcast %188 : vector<4x1xf32> to vector<4x256xf32>
    %195 = arith.mulf %194, %193 : vector<4x256xf32>
    %196 = vector.extract_strided_slice %7 {offsets = [2, 1, 0, 0], sizes = [1, 1, 4, 1], strides = [1, 1, 1, 1]} : vector<3x3x4x1xf32> to vector<1x1x4x1xf32>
    %197 = vector.shape_cast %196 : vector<1x1x4x1xf32> to vector<4x1xf32>
    %198 = vector.broadcast %197 : vector<4x1xf32> to vector<4x256xf32>
    %199 = arith.mulf %198, %11 : vector<4x256xf32>
    %200 = arith.addf %195, %199 : vector<4x256xf32>
    %201 = vector.extract_strided_slice %7 {offsets = [2, 2, 0, 0], sizes = [1, 1, 4, 1], strides = [1, 1, 1, 1]} : vector<3x3x4x1xf32> to vector<1x1x4x1xf32>
    %202 = vector.shape_cast %201 : vector<1x1x4x1xf32> to vector<4x1xf32>
    %c253_i32 = arith.constant 253 : i32
    %203 = tpu.dynamic_rotate %11 by %c253_i32 dim 1 : vector<4x256xf32>, i32 -> vector<4x256xf32>
    %c13_i32 = arith.constant 13 : i32
    %204 = vector.broadcast %c13_i32 : i32 to vector<4x256xi32>
    %205 = arith.cmpi slt, %28, %204 : vector<4x256xi32>
    %cst_51 = arith.constant 0.000000e+00 : f32
    %206 = vector.broadcast %cst_51 : f32 to vector<4x256xf32>
    %207 = arith.select %205, %203, %206 : vector<4x256xi1>, vector<4x256xf32>
    %208 = vector.broadcast %202 : vector<4x1xf32> to vector<4x256xf32>
    %209 = arith.mulf %208, %207 : vector<4x256xf32>
    %210 = arith.addf %200, %209 : vector<4x256xf32>
    %211 = vector.extract_strided_slice %8 {offsets = [2, 0, 0], sizes = [1, 4, 1], strides = [1, 1, 1]} : vector<3x4x1xf32> to vector<1x4x1xf32>
    %212 = vector.shape_cast %211 : vector<1x4x1xf32> to vector<4x1xf32>
    %213 = vector.broadcast %212 : vector<4x1xf32> to vector<4x256xf32>
    %214 = arith.addf %210, %213 : vector<4x256xf32>
    %215 = arith.addf %11, %186 : vector<4x256xf32>
    %216 = arith.addf %215, %214 : vector<4x256xf32>
    %217 = vector.extract_strided_slice %2 {offsets = [3, 0, 0], sizes = [1, 16, 4], strides = [1, 1, 1]} : vector<4x16x4xbf16> to vector<1x16x4xbf16>
    %218 = vector.shape_cast %217 : vector<1x16x4xbf16> to vector<16x4xbf16>
    %219 = arith.truncf %216 : vector<4x256xf32> to vector<4x256xbf16>
    %cst_52 = arith.constant dense<0.000000e+00> : vector<16x256xf32>
    %220 = tpu.matmul %218, %219, %cst_52 {dimension_numbers = #tpu.dot_dimension_numbers<[1], [0], [0], [1], [0, 0, 1, 1], [], []>} : vector<16x4xbf16>, vector<4x256xbf16>, vector<16x256xf32> -> vector<16x256xf32>
    %221 = arith.addf %158, %220 : vector<16x256xf32>
    %c0_53 = arith.constant 0 : index
    %c0_54 = arith.constant 0 : index
    %222 = vector.load %arg9[%c0_53, %c0_54] : memref<16x1xf32, #tpu.memory_space<vmem>>, vector<16x1xf32>
    %223 = vector.broadcast %222 : vector<16x1xf32> to vector<16x256xf32>
    %224 = arith.addf %221, %223 : vector<16x256xf32>
    %cst_55 = arith.constant 5.000000e-01 : f32
    %225 = vector.broadcast %cst_55 : f32 to vector<16x256xf32>
    %226 = arith.mulf %225, %224 : vector<16x256xf32>
    %cst_56 = arith.constant 0.707106769 : f32
    %227 = vector.broadcast %cst_56 : f32 to vector<16x256xf32>
    %228 = arith.mulf %224, %227 : vector<16x256xf32>
    %229 = math.absf %228 : vector<16x256xf32>
    %cst_57 = arith.constant 0.327591091 : f32
    %230 = vector.broadcast %cst_57 : f32 to vector<16x256xf32>
    %231 = arith.mulf %230, %229 : vector<16x256xf32>
    %cst_58 = arith.constant 1.000000e+00 : f32
    %232 = vector.broadcast %cst_58 : f32 to vector<16x256xf32>
    %233 = arith.addf %232, %231 : vector<16x256xf32>
    %cst_59 = arith.constant 1.000000e+00 : f32
    %234 = vector.broadcast %cst_59 : f32 to vector<16x256xf32>
    %235 = arith.divf %234, %233 : vector<16x256xf32>
    %cst_60 = arith.constant 1.06140542 : f32
    %236 = vector.broadcast %cst_60 : f32 to vector<16x256xf32>
    %237 = arith.mulf %235, %236 : vector<16x256xf32>
    %cst_61 = arith.constant -1.45315206 : f32
    %238 = vector.broadcast %cst_61 : f32 to vector<16x256xf32>
    %239 = arith.addf %238, %237 : vector<16x256xf32>
    %240 = arith.mulf %235, %239 : vector<16x256xf32>
    %cst_62 = arith.constant 1.42141378 : f32
    %241 = vector.broadcast %cst_62 : f32 to vector<16x256xf32>
    %242 = arith.addf %241, %240 : vector<16x256xf32>
    %243 = arith.mulf %235, %242 : vector<16x256xf32>
    %cst_63 = arith.constant -0.284496725 : f32
    %244 = vector.broadcast %cst_63 : f32 to vector<16x256xf32>
    %245 = arith.addf %244, %243 : vector<16x256xf32>
    %246 = arith.mulf %235, %245 : vector<16x256xf32>
    %cst_64 = arith.constant 0.254829586 : f32
    %247 = vector.broadcast %cst_64 : f32 to vector<16x256xf32>
    %248 = arith.addf %247, %246 : vector<16x256xf32>
    %249 = arith.mulf %235, %248 : vector<16x256xf32>
    %cst_65 = arith.constant 0.000000e+00 : f32
    %250 = vector.broadcast %cst_65 : f32 to vector<16x256xf32>
    %251 = arith.subf %250, %229 : vector<16x256xf32>
    %252 = arith.mulf %251, %229 : vector<16x256xf32>
    %253 = math.exp %252 : vector<16x256xf32>
    %254 = arith.mulf %249, %253 : vector<16x256xf32>
    %cst_66 = arith.constant 1.000000e+00 : f32
    %255 = vector.broadcast %cst_66 : f32 to vector<16x256xf32>
    %256 = arith.subf %255, %254 : vector<16x256xf32>
    %cst_67 = arith.constant 0.000000e+00 : f32
    %257 = vector.broadcast %cst_67 : f32 to vector<16x256xf32>
    %258 = arith.cmpf olt, %228, %257 : vector<16x256xf32>
    %cst_68 = arith.constant 0.000000e+00 : f32
    %259 = vector.broadcast %cst_68 : f32 to vector<16x256xf32>
    %260 = arith.subf %259, %256 : vector<16x256xf32>
    %261 = arith.select %258, %260, %256 : vector<16x256xi1>, vector<16x256xf32>
    %cst_69 = arith.constant 1.000000e+00 : f32
    %262 = vector.broadcast %cst_69 : f32 to vector<16x256xf32>
    %263 = arith.addf %262, %261 : vector<16x256xf32>
    %264 = arith.mulf %226, %263 : vector<16x256xf32>
    %c0_70 = arith.constant 0 : index
    %c0_71 = arith.constant 0 : index
    %c0_72 = arith.constant 0 : index
    %265 = vector.load %arg10[%c0_70, %c0_71, %c0_72] : memref<1x16x256xf32, #tpu.memory_space<vmem>>, vector<1x16x256xf32>
    %266 = vector.shape_cast %265 : vector<1x16x256xf32> to vector<16x256xf32>
    %267 = vector.shape_cast %264 : vector<16x256xf32> to vector<1x16x256xf32>
    tpu.vector_store %arg10[%c0_70, %c0_71, %c0_72], %267 {strides = array<i32>} : memref<1x16x256xf32, #tpu.memory_space<vmem>>, vector<1x16x256xf32>,
    return
  }
  func.func @transform_0(%arg0: i32) -> (i32, i32, i32) {
    %c0_i32 = arith.constant 0 : i32
    %c0_i32_0 = arith.constant 0 : i32
    %c0_i32_1 = arith.constant 0 : i32
    return %arg0, %c0_i32, %c0_i32_0 : i32, i32, i32
  }
  func.func @transform_1(%arg0: i32) -> (i32, i32) {
    %c0_i32 = arith.constant 0 : i32
    %c0_i32_0 = arith.constant 0 : i32
    %c0_i32_1 = arith.constant 0 : i32
    return %c0_i32, %c0_i32_0 : i32, i32
  }
  func.func @transform_2(%arg0: i32) -> (i32, i32) {
    %c0_i32 = arith.constant 0 : i32
    %c0_i32_0 = arith.constant 0 : i32
    %c0_i32_1 = arith.constant 0 : i32
    return %c0_i32, %c0_i32_0 : i32, i32
  }
  func.func @transform_3(%arg0: i32) -> (i32, i32, i32, i32) {
    %c0_i32 = arith.constant 0 : i32
    %c0_i32_0 = arith.constant 0 : i32
    %c0_i32_1 = arith.constant 0 : i32
    %c0_i32_2 = arith.constant 0 : i32
    %c0_i32_3 = arith.constant 0 : i32
    return %c0_i32, %c0_i32_0, %c0_i32_1, %c0_i32_2 : i32, i32, i32, i32
  }
  func.func @transform_4(%arg0: i32) -> (i32, i32, i32) {
    %c0_i32 = arith.constant 0 : i32
    %c0_i32_0 = arith.constant 0 : i32
    %c0_i32_1 = arith.constant 0 : i32
    %c0_i32_2 = arith.constant 0 : i32
    return %c0_i32, %c0_i32_0, %c0_i32_1 : i32, i32, i32
  }
  func.func @transform_5(%arg0: i32) -> (i32, i32, i32, i32) {
    %c0_i32 = arith.constant 0 : i32
    %c0_i32_0 = arith.constant 0 : i32
    %c0_i32_1 = arith.constant 0 : i32
    %c0_i32_2 = arith.constant 0 : i32
    %c0_i32_3 = arith.constant 0 : i32
    return %c0_i32, %c0_i32_0, %c0_i32_1, %c0_i32_2 : i32, i32, i32, i32
  }
  func.func @transform_6(%arg0: i32) -> (i32, i32, i32) {
    %c0_i32 = arith.constant 0 : i32
    %c0_i32_0 = arith.constant 0 : i32
    %c0_i32_1 = arith.constant 0 : i32
    %c0_i32_2 = arith.constant 0 : i32
    return %c0_i32, %c0_i32_0, %c0_i32_1 : i32, i32, i32
  }
  func.func @transform_7(%arg0: i32) -> (i32, i32, i32) {
    %c0_i32 = arith.constant 0 : i32
    %c0_i32_0 = arith.constant 0 : i32
    %c0_i32_1 = arith.constant 0 : i32
    %c0_i32_2 = arith.constant 0 : i32
    return %c0_i32, %c0_i32_0, %c0_i32_1 : i32, i32, i32
  }
  func.func @transform_8(%arg0: i32) -> (i32, i32) {
    %c0_i32 = arith.constant 0 : i32
    %c0_i32_0 = arith.constant 0 : i32
    %c0_i32_1 = arith.constant 0 : i32
    return %c0_i32, %c0_i32_0 : i32, i32
  }
  func.func @transform_9(%arg0: i32) -> (i32, i32, i32) {
    %c0_i32 = arith.constant 0 : i32
    %c0_i32_0 = arith.constant 0 : i32
    %c0_i32_1 = arith.constant 0 : i32
    return %arg0, %c0_i32, %c0_i32_0 : i32, i32, i32
  }
}

</mosaic_0001>

<llo_original>
// kernel: bottleneck_block.2
$region0: #{bottleneck_block.2}
  #allocation0 [shape = 'u32[]', space=smem, size = 0x4, offset = 0x4, fixed_abs, tag = 'smem constant byte address 0x4 - core index']
  #allocation1 [shape = 'u32[72,128]{1,0:T(1,128)}', space=vmem, size = 0x9000, scoped, tag = 'internal scratch']
  %s0 = inlined_call_operand.vmem [shape: bf16[2,16,256], index: 0, kind: input, shape index: {}]
  %s1 = inlined_call_operand.vmem [shape: bf16[4,16], index: 1, kind: input, shape index: {}]
  %s2 = inlined_call_operand.vmem [shape: f32[4,1], index: 2, kind: input, shape index: {}]
  %s3 = inlined_call_operand.vmem [shape: f32[3,3,4,1], index: 3, kind: input, shape index: {}]
  %s4 = inlined_call_operand.vmem [shape: f32[3,4,1], index: 4, kind: input, shape index: {}]
  %s5 = inlined_call_operand.vmem [shape: f32[3,3,4,1], index: 5, kind: input, shape index: {}]
  %s6 = inlined_call_operand.vmem [shape: f32[3,4,1], index: 6, kind: input, shape index: {}]
  %s7 = inlined_call_operand.vmem [shape: f32[2,4,4,1], index: 7, kind: output, shape index: {0}]
  %s8 = inlined_call_operand.vmem [shape: f32[2,4,4,1], index: 8, kind: output, shape index: {1}]
  %9 = xla_tuple %s7, %s8
  %s10 = sld [smem:[#allocation0]]
  $region69: #{bottleneck_block.2} parent=0
    _
  %s12 = ssub.s32 1, %s10
  %s13 = scalar_select 0, %s12, %s10
  loop: start=0, step=1, limit=4
  $region2: #{bottleneck_block.2} parent=0 // loop_pre_header
    _
  $region3: #{bottleneck_block.2} parent=0 // loop_header
    %s15 = sphi 0, %s19
    %p16 = scmp.ge.s32.totalorder %s15, 4
    %s25 = sphi 0, %s27
    %s28 = sphi 0, %s25
    %s29 = sphi 0, %s28
    %s45 = sphi 0, %s29
    %s49 = sphi 0, %s49
    %s51 = sphi 0, %s49
    %s52 = sphi 0, %s51
    %s66 = sphi 0, %s52
    %s70 = sphi 0, %s70
    %s72 = sphi 0, %s70
    %s73 = sphi 0, %s72
    %s87 = sphi 0, %s73
    %s91 = sphi 0, %s91
    %s93 = sphi 0, %s91
    %s94 = sphi 0, %s93
    %s108 = sphi 0, %s94
    %s112 = sphi 0, %s112
    %s114 = sphi 0, %s112
    %s115 = sphi 0, %s114
    %s129 = sphi 0, %s115
    %s133 = sphi 0, %s133
    %s135 = sphi 0, %s133
    %s136 = sphi 0, %s135
    %s150 = sphi 0, %s136
    %s154 = sphi 0, %s154
    %s156 = sphi 0, %s154
    %s157 = sphi 0, %s156
    %s171 = sphi 0, %s157
    %s177 = sphi 0, %s179
    %s180 = sphi 0, %s177
    %s181 = sphi 0, %s180
    %s197 = sphi 0, %s181
    %s203 = sphi 0, %s205
    %s206 = sphi 0, %s203
    %s207 = sphi 0, %s206
    %s223 = sphi 0, %s207
  $region4: #{bottleneck_block.2} parent=0 // loop_header_branch
    %18 = sbr.rel (%p16) target = $region8
  $region5: #{bottleneck_block.2} parent=0 // loop_body
    %s20 = ssub.s32 %s15, 1
    %s21 = ssub.s32 %s15, 2
    %s22 = sadd.s32 %s15, 1
    %s23 = ssub.s32 %s15, %s22
    %p24 = scmp.eq.s32.totalorder %s23, 0
    %s26 = sadd.s32 %s25, 1
    %s27 = scalar_select %p24, %s25, %s26
    %p30 = pneg %p24
    %p31 = scmp.eq.s32.totalorder %s15, 1
    %p32 = por %p30, %p31
    %p33 = scmp.ne.s32.totalorder %s25, %s28
    %p34 = scmp.eq.s32.totalorder %s15, 0
    %p35 = por %p33, %p34
    %p36 = scmp.ne.s32.totalorder %s25, %s28
    %p37 = scmp.eq.s32.totalorder %s20, 1
    %p38 = por %p36, %p37
    %p39 = scmp.ne.s32.totalorder %s28, %s29
    %p40 = scmp.eq.s32.totalorder %s20, 0
    %p41 = por %p39, %p40
    %p42 = scmp.ne.s32.totalorder %s28, %s29
    %p43 = scmp.eq.s32.totalorder %s21, 1
    %p44 = por %p42, %p43
    %p46 = scmp.ne.s32.totalorder %s29, %s45
    %p47 = scmp.eq.s32.totalorder %s21, 0
    %p48 = por %p46, %p47
    %s50 = sadd.s32 %s49, 1
    %p53 = scmp.eq.s32.totalorder %s15, 1
    %p54 = scmp.ne.s32.totalorder %s49, %s51
    %p55 = scmp.eq.s32.totalorder %s15, 0
    %p56 = por %p54, %p55
    %p57 = scmp.ne.s32.totalorder %s49, %s51
    %p58 = scmp.eq.s32.totalorder %s20, 1
    %p59 = por %p57, %p58
    %p60 = scmp.ne.s32.totalorder %s51, %s52
    %p61 = scmp.eq.s32.totalorder %s20, 0
    %p62 = por %p60, %p61
    %p63 = scmp.ne.s32.totalorder %s51, %s52
    %p64 = scmp.eq.s32.totalorder %s21, 1
    %p65 = por %p63, %p64
    %p67 = scmp.ne.s32.totalorder %s52, %s66
    %p68 = scmp.eq.s32.totalorder %s21, 0
    %p69 = por %p67, %p68
    %s71 = sadd.s32 %s70, 1
    %p74 = scmp.eq.s32.totalorder %s15, 1
    %p75 = scmp.ne.s32.totalorder %s70, %s72
    %p76 = scmp.eq.s32.totalorder %s15, 0
    %p77 = por %p75, %p76
    %p78 = scmp.ne.s32.totalorder %s70, %s72
    %p79 = scmp.eq.s32.totalorder %s20, 1
    %p80 = por %p78, %p79
    %p81 = scmp.ne.s32.totalorder %s72, %s73
    %p82 = scmp.eq.s32.totalorder %s20, 0
    %p83 = por %p81, %p82
    %p84 = scmp.ne.s32.totalorder %s72, %s73
    %p85 = scmp.eq.s32.totalorder %s21, 1
    %p86 = por %p84, %p85
    %p88 = scmp.ne.s32.totalorder %s73, %s87
    %p89 = scmp.eq.s32.totalorder %s21, 0
    %p90 = por %p88, %p89
    %s92 = sadd.s32 %s91, 1
    %p95 = scmp.eq.s32.totalorder %s15, 1
    %p96 = scmp.ne.s32.totalorder %s91, %s93
    %p97 = scmp.eq.s32.totalorder %s15, 0
    %p98 = por %p96, %p97
    %p99 = scmp.ne.s32.totalorder %s91, %s93
    %p100 = scmp.eq.s32.totalorder %s20, 1
    %p101 = por %p99, %p100
    %p102 = scmp.ne.s32.totalorder %s93, %s94
    %p103 = scmp.eq.s32.totalorder %s20, 0
    %p104 = por %p102, %p103
    %p105 = scmp.ne.s32.totalorder %s93, %s94
    %p106 = scmp.eq.s32.totalorder %s21, 1
    %p107 = por %p105, %p106
    %p109 = scmp.ne.s32.totalorder %s94, %s108
    %p110 = scmp.eq.s32.totalorder %s21, 0
    %p111 = por %p109, %p110
    %s113 = sadd.s32 %s112, 1
    %p116 = scmp.eq.s32.totalorder %s15, 1
    %p117 = scmp.ne.s32.totalorder %s112, %s114
    %p118 = scmp.eq.s32.totalorder %s15, 0
    %p119 = por %p117, %p118
    %p120 = scmp.ne.s32.totalorder %s112, %s114
    %p121 = scmp.eq.s32.totalorder %s20, 1
    %p122 = por %p120, %p121
    %p123 = scmp.ne.s32.totalorder %s114, %s115
    %p124 = scmp.eq.s32.totalorder %s20, 0
    %p125 = por %p123, %p124
    %p126 = scmp.ne.s32.totalorder %s114, %s115
    %p127 = scmp.eq.s32.totalorder %s21, 1
    %p128 = por %p126, %p127
    %p130 = scmp.ne.s32.totalorder %s115, %s129
    %p131 = scmp.eq.s32.totalorder %s21, 0
    %p132 = por %p130, %p131
    %s134 = sadd.s32 %s133, 1
    %p137 = scmp.eq.s32.totalorder %s15, 1
    %p138 = scmp.ne.s32.totalorder %s133, %s135
    %p139 = scmp.eq.s32.totalorder %s15, 0
    %p140 = por %p138, %p139
    %p141 = scmp.ne.s32.totalorder %s133, %s135
    %p142 = scmp.eq.s32.totalorder %s20, 1
    %p143 = por %p141, %p142
    %p144 = scmp.ne.s32.totalorder %s135, %s136
    %p145 = scmp.eq.s32.totalorder %s20, 0
    %p146 = por %p144, %p145
    %p147 = scmp.ne.s32.totalorder %s135, %s136
    %p148 = scmp.eq.s32.totalorder %s21, 1
    %p149 = por %p147, %p148
    %p151 = scmp.ne.s32.totalorder %s136, %s150
    %p152 = scmp.eq.s32.totalorder %s21, 0
    %p153 = por %p151, %p152
    %s155 = sadd.s32 %s154, 1
    %p158 = scmp.eq.s32.totalorder %s15, 1
    %p159 = scmp.ne.s32.totalorder %s154, %s156
    %p160 = scmp.eq.s32.totalorder %s15, 0
    %p161 = por %p159, %p160
    %p162 = scmp.ne.s32.totalorder %s154, %s156
    %p163 = scmp.eq.s32.totalorder %s20, 1
    %p164 = por %p162, %p163
    %p165 = scmp.ne.s32.totalorder %s156, %s157
    %p166 = scmp.eq.s32.totalorder %s20, 0
    %p167 = por %p165, %p166
    %p168 = scmp.ne.s32.totalorder %s156, %s157
    %p169 = scmp.eq.s32.totalorder %s21, 1
    %p170 = por %p168, %p169
    %p172 = scmp.ne.s32.totalorder %s157, %s171
    %p173 = scmp.eq.s32.totalorder %s21, 0
    %p174 = por %p172, %p173
    %s175 = ssub.s32 %s15, %s22
    %p176 = scmp.eq.s32.totalorder %s175, 0
    %s178 = sadd.s32 %s177, 1
    %s179 = scalar_select %p176, %s177, %s178
    %p182 = pneg %p176
    %p183 = scmp.eq.s32.totalorder %s15, 1
    %p184 = por %p182, %p183
    %p185 = scmp.ne.s32.totalorder %s177, %s180
    %p186 = scmp.eq.s32.totalorder %s15, 0
    %p187 = por %p185, %p186
    %p188 = scmp.ne.s32.totalorder %s177, %s180
    %p189 = scmp.eq.s32.totalorder %s20, 1
    %p190 = por %p188, %p189
    %p191 = scmp.ne.s32.totalorder %s180, %s181
    %p192 = scmp.eq.s32.totalorder %s20, 0
    %p193 = por %p191, %p192
    %p194 = scmp.ne.s32.totalorder %s180, %s181
    %p195 = scmp.eq.s32.totalorder %s21, 1
    %p196 = por %p194, %p195
    %p198 = scmp.ne.s32.totalorder %s181, %s197
    %p199 = scmp.eq.s32.totalorder %s21, 0
    %p200 = por %p198, %p199
    %s201 = ssub.s32 %s15, %s22
    %p202 = scmp.eq.s32.totalorder %s201, 0
    %s204 = sadd.s32 %s203, 1
    %s205 = scalar_select %p202, %s203, %s204
    %p208 = pneg %p202
    %p209 = scmp.eq.s32.totalorder %s15, 1
    %p210 = por %p208, %p209
    %p211 = scmp.ne.s32.totalorder %s203, %s206
    %p212 = scmp.eq.s32.totalorder %s15, 0
    %p213 = por %p211, %p212
    %p214 = scmp.ne.s32.totalorder %s203, %s206
    %p215 = scmp.eq.s32.totalorder %s20, 1
    %p216 = por %p214, %p215
    %p217 = scmp.ne.s32.totalorder %s206, %s207
    %p218 = scmp.eq.s32.totalorder %s20, 0
    %p219 = por %p217, %p218
    %p220 = scmp.ne.s32.totalorder %s206, %s207
    %p221 = scmp.eq.s32.totalorder %s21, 1
    %p222 = por %p220, %p221
    %p224 = scmp.ne.s32.totalorder %s207, %s223
    %p225 = scmp.eq.s32.totalorder %s21, 0
    %p226 = por %p224, %p225
    %p227 = scmp.le.s32.totalorder 1, %s15
    %p228 = scmp.lt.s32.totalorder %s15, 3
    %p229 = pnand %p227, %p228
    %p230 = pneg %p229
    // Predicated region
    $region9: #{bottleneck_block.2} parent=5 // pred_check
      _
    $region10: #{bottleneck_block.2} parent=5 // pred_check_branch
      %232 = sbr.rel (%p229) target = $region12
    $region11: #{bottleneck_block.2} parent=5 // pred_region
      %s233 = ssub.s32 %s15, 1
      // Predicated region
      $region13: #{bottleneck_block.2} parent=11 // pred_check
        %p234 = pneg %p62
      $region14: #{bottleneck_block.2} parent=11 // pred_check_branch
        %236 = sbr.rel (%p234) target = $region16
      $region15: #{bottleneck_block.2} parent=11 // pred_region
        _
      $region16: #{bottleneck_block.2} parent=11 // pred_fallthru
        _
      // Predicated region
      $region17: #{bottleneck_block.2} parent=11 // pred_check
        %p237 = pneg %p83
      $region18: #{bottleneck_block.2} parent=11 // pred_check_branch
        %239 = sbr.rel (%p237) target = $region20
      $region19: #{bottleneck_block.2} parent=11 // pred_region
        _
      $region20: #{bottleneck_block.2} parent=11 // pred_fallthru
        _
      // Predicated region
      $region21: #{bottleneck_block.2} parent=11 // pred_check
        %p240 = pneg %p104
      $region22: #{bottleneck_block.2} parent=11 // pred_check_branch
        %242 = sbr.rel (%p240) target = $region24
      $region23: #{bottleneck_block.2} parent=11 // pred_region
        _
      $region24: #{bottleneck_block.2} parent=11 // pred_fallthru
        _
      // Predicated region
      $region25: #{bottleneck_block.2} parent=11 // pred_check
        %p243 = pneg %p125
      $region26: #{bottleneck_block.2} parent=11 // pred_check_branch
        %245 = sbr.rel (%p243) target = $region28
      $region27: #{bottleneck_block.2} parent=11 // pred_region
        _
      $region28: #{bottleneck_block.2} parent=11 // pred_fallthru
        _
      // Predicated region
      $region29: #{bottleneck_block.2} parent=11 // pred_check
        %p246 = pneg %p146
      $region30: #{bottleneck_block.2} parent=11 // pred_check_branch
        %248 = sbr.rel (%p246) target = $region32
      $region31: #{bottleneck_block.2} parent=11 // pred_region
        _
      $region32: #{bottleneck_block.2} parent=11 // pred_fallthru
        _
      // Predicated region
      $region33: #{bottleneck_block.2} parent=11 // pred_check
        %p249 = pneg %p167
      $region34: #{bottleneck_block.2} parent=11 // pred_check_branch
        %251 = sbr.rel (%p249) target = $region36
      $region35: #{bottleneck_block.2} parent=11 // pred_region
        _
      $region36: #{bottleneck_block.2} parent=11 // pred_fallthru
        _
    $region12: #{bottleneck_block.2} parent=5 // pred_fallthru
      _
    %p252 = scmp.lt.s32.totalorder %s15, 2
    // Predicated region
    $region37: #{bottleneck_block.2} parent=5 // pred_check
      %p253 = pneg %p252
    $region38: #{bottleneck_block.2} parent=5 // pred_check_branch
      %255 = sbr.rel (%p253) target = $region40
    $region39: #{bottleneck_block.2} parent=5 // pred_region
      // Predicated region
      $region41: #{bottleneck_block.2} parent=39 // pred_check
        %p256 = pneg %p35
      $region42: #{bottleneck_block.2} parent=39 // pred_check_branch
        %258 = sbr.rel (%p256) target = $region44
      $region43: #{bottleneck_block.2} parent=39 // pred_region
        %p259 = scmp.lt.s32.totalorder %s15, 1
        %s260 = scalar_select %p259, %s15, 1
        %s261 = smul.addr %s260, 4
        %s262 = smul.addr %s261, 4
        %s263 = scalar_lea.vmem %s0, %s262
      $region44: #{bottleneck_block.2} parent=39 // pred_fallthru
        _
    $region40: #{bottleneck_block.2} parent=5 // pred_fallthru
      _
    %p264 = scmp.le.s32.totalorder 1, %s15
    %p265 = scmp.lt.s32.totalorder %s15, 3
    %p266 = pnand %p264, %p265
    %p267 = pneg %p266
    // Predicated region
    $region45: #{bottleneck_block.2} parent=5 // pred_check
      _
    $region46: #{bottleneck_block.2} parent=5 // pred_check_branch
      %269 = sbr.rel (%p266) target = $region48
    $region47: #{bottleneck_block.2} parent=5 // pred_region
      %s270 = ssub.s32 %s15, 1
      %p271 = scmp.lt.s32.totalorder %s20, 1
      %s272 = scalar_select %p271, %s20, 1
      %s273 = smul.addr %s272, 4
      %s274 = smul.addr %s273, 4
      %s275 = scalar_lea.vmem %s0, %s274
      %p276 = pneg %p41
      %p277 = pneg %p38
      %p278 = pneg %p62
      %p279 = pneg %p59
      %p280 = pneg %p83
      %p281 = pneg %p80
      %p282 = pneg %p104
      %p283 = pneg %p101
      %p284 = pneg %p125
      %p285 = pneg %p122
      %p286 = pneg %p146
      %p287 = pneg %p143
      %p288 = pneg %p167
      %p289 = pneg %p164
      %p290 = pneg %p193
      %p291 = pneg %p190
      %p292 = scmp.lt.s32.totalorder %s20, 1
      %s293 = scalar_select %p292, %s20, 1
      %s294 = smul.addr %s293, 4
      %s295 = smul.addr %s294, 4
      %s296 = scalar_lea.vmem %s7, %s295
      %p297 = pneg %p219
      %p298 = pneg %p216
      %p299 = scmp.lt.s32.totalorder %s20, 1
      %s300 = scalar_select %p299, %s20, 1
      %s301 = smul.addr %s300, 4
      %s302 = smul.addr %s301, 4
      %s303 = scalar_lea.vmem %s8, %s302
      %p304 = scmp.lt.s32.totalorder %s20, 1
      %s305 = scalar_select %p304, %s20, 1
      %s306 = smul.addr %s305, 4
      %s307 = smul.addr %s306, 4
      %s308 = scalar_lea.vmem %s0, %s307
      %p309 = scmp.lt.s32.totalorder %s20, 1
      %s310 = scalar_select %p309, %s20, 1
      %s311 = smul.addr %s310, 4
      %s312 = smul.addr %s311, 4
      %s313 = scalar_lea.vmem %s7, %s312
      %p314 = scmp.lt.s32.totalorder %s20, 1
      %s315 = scalar_select %p314, %s20, 1
      %s316 = smul.addr %s315, 4
      %s317 = smul.addr %s316, 4
      %s318 = scalar_lea.vmem %s8, %s317
      %v320 = vld [vmem:[%s308] sm:$0xff]
      %v321 = vld [vmem:[%s308 + $0x8] sm:$0xff]
      %v322 = vld [vmem:[%s1] sm:$0x3]
      %v323 = vld [vmem:[%s2] sm:$0xf]
      %v324 = vld [vmem:[%s3] sm:$0xf]
      %v325 = vld [vmem:[%s3 + $0x4] sm:$0xf]
      %v326 = vld [vmem:[%s3 + $0x8] sm:$0xf]
      %v327 = vld [vmem:[%s3 + $0xc] sm:$0xf]
      %v328 = vld [vmem:[%s3 + $0x10] sm:$0xf]
      %v329 = vld [vmem:[%s3 + $0x14] sm:$0xf]
      %v330 = vld [vmem:[%s3 + $0x18] sm:$0xf]
      %v331 = vld [vmem:[%s3 + $0x1c] sm:$0xf]
      %v332 = vld [vmem:[%s3 + $0x20] sm:$0xf]
      %v333 = vld [vmem:[%s4] sm:$0xf]
      %v334 = vld [vmem:[%s4 + $0x4] sm:$0xf]
      %v335 = vld [vmem:[%s4 + $0x8] sm:$0xf]
      %v336 = vld [vmem:[%s5] sm:$0xf]
      %v337 = vld [vmem:[%s5 + $0x4] sm:$0xf]
      %v338 = vld [vmem:[%s5 + $0x8] sm:$0xf]
      %v339 = vld [vmem:[%s5 + $0xc] sm:$0xf]
      %v340 = vld [vmem:[%s5 + $0x10] sm:$0xf]
      %v341 = vld [vmem:[%s5 + $0x14] sm:$0xf]
      %v342 = vld [vmem:[%s5 + $0x18] sm:$0xf]
      %v343 = vld [vmem:[%s5 + $0x1c] sm:$0xf]
      %v344 = vld [vmem:[%s5 + $0x20] sm:$0xf]
      %v345 = vld [vmem:[%s6] sm:$0xf]
      %v346 = vld [vmem:[%s6 + $0x4] sm:$0xf]
      %v347 = vld [vmem:[%s6 + $0x8] sm:$0xf]
      %349 = vset.pattern.permute.xlu0 0
      %350 = vperm.xlu0 %349, %v323
      %v351 = vpop.permute.xlu0 %350
      %v355 = vunpack.c.l.b16 %v320
      %v356 = vunpack.c.h.b16 %v320
      %v357 = vunpack.c.l.b16 %v321
      %v358 = vunpack.c.h.b16 %v321
      %v359 = vpack.c.b16 %v357, %v355
      %v360 = vpack.c.b16 %v358, %v356
      %vm363 = vcmask 130048
      %v365 = vsel %vm363, %v322, 0
      %367 = vmatpush.bf16.msra.mxu0 0
      %368 = vmatpush.bf16.msra.mxu0 0
      %369 = vmatpush.bf16.msra.mxu0 0
      %370 = vmatpush.bf16.msra.mxu0 0
      %371 = vmatpush.bf16.msra.mxu0 0
      %372 = vmatpush.bf16.msra.mxu0 0
      %373 = vmatpush.bf16.msra.mxu0 0
      %374 = vmatpush.bf16.msra.mxu0 %v359
      %375 = vmatmul.bf16.gmra.mxu0 %v365
      %v376 = vpop.f32.mrf.mxu0
      %v377 = vadd.f32 %v351, %v376
      %v378 = vpop.f32.mrf.mxu0
      %379 = vdwg.mxu0
      %380 = vmatpush.bf16.msra.mxu0 0
      %381 = vmatpush.bf16.msra.mxu0 0
      %382 = vmatpush.bf16.msra.mxu0 0
      %383 = vmatpush.bf16.msra.mxu0 0
      %384 = vmatpush.bf16.msra.mxu0 0
      %385 = vmatpush.bf16.msra.mxu0 0
      %386 = vmatpush.bf16.msra.mxu0 0
      %387 = vmatpush.bf16.msra.mxu0 %v360
      %388 = vmatmul.bf16.gmra.mxu0 %v365
      %v389 = vpop.f32.mrf.mxu0
      %v390 = vadd.f32 %v351, %v389
      %v391 = vpop.f32.mrf.mxu0
      %392 = vdwg.mxu0
      %v393 = vlaneseq
      %v394 = vand.u32 %v393, 127
      %v395 = vadd.s32 %v394, 128
      %vm396 = vcmp.lt.s32.totalorder %v394, 0
      %v397 = vsub.s32 0, %v394
      %v398 = vsel %vm396, %v397, %v394
      %v399 = vshrl.u32 %v398, 4
      %v400 = vand.u32 %v398, 15
      %v401 = vsub.s32 0, %v400
      %v402 = vsel %vm396, %v401, %v400
      %vm403 = vcmp.lt.s32.totalorder %v395, 0
      %v404 = vsub.s32 0, %v395
      %v405 = vsel %vm403, %v404, %v395
      %v406 = vshrl.u32 %v405, 4
      %v407 = vand.u32 %v405, 15
      %v408 = vsub.s32 0, %v407
      %v409 = vsel %vm403, %v408, %v407
      %vm410 = vcmp.ne.s32.totalorder %v402, 0
      %vm411 = vcmp.ne.s32.totalorder %v409, 0
      %vm412 = vcmp.lt.s32.totalorder %v402, 0
      %vm413 = vcmp.lt.s32.totalorder %v409, 0
      %vm414 = vmand %vm412, %vm410
      %vm415 = vmand %vm413, %vm411
      %v416 = vadd.s32 %v402, 16
      %v417 = vadd.s32 %v409, 16
      %v418 = vsel %vm414, %v416, %v402
      %v419 = vsel %vm415, %v417, %v409
      %vm420 = vcmask 1043456
      %v421 = vsel %vm420, %v377, 0.0
      %v422 = vsel %vm420, %v390, 0.0
      %v423 = vadd.f32 %v421, %v422
      %424 = vadd.xlane.f32.xlu0 %v423
      %v425 = vpop.xlane.xlu0 %424
      %vm426 = vcmask 3072
      %427 = vst.msk [vmem:[%s313] sm:$0xf] %vm426, %v425
      %v428 = vmul.f32 %v377, %v377
      %v429 = vmul.f32 %v390, %v390
      %v430 = vsel %vm420, %v428, 0.0
      %v431 = vsel %vm420, %v429, 0.0
      %v432 = vadd.f32 %v430, %v431
      %433 = vadd.xlane.f32.xlu0 %v432
      %v434 = vpop.xlane.xlu0 %433
      %435 = vst.msk [vmem:[%s318] sm:$0xf] %vm426, %v434
      %436 = vrot.lane.b32.xlu0 %v377, 16
      %v437 = vpop.permute.xlu0 %436
      %438 = vrot.lane.b32.xlu0 %v390, 16
      %v439 = vpop.permute.xlu0 %438
      %vm440 = vcmp.lt.s32.totalorder %v394, 16
      %v441 = vsel %vm440, %v437, %v439
      %v442 = vsel %vm440, %v439, %v437
      %vm443 = vcmp.ge.s32.totalorder %v394, 16
      %vm444 = vcmp.ge.s32.totalorder %v395, 16
      %v445 = vsel %vm443, %v442, 0.0
      %v446 = vsel %vm444, %v441, 0.0
      %448 = vset.pattern.permute.xlu0 0
      %449 = vperm.xlu0 %448, %v324
      %v450 = vpop.permute.xlu0 %449
      %v452 = vmul.f32 %v450, %v445
      %v453 = vmul.f32 %v450, %v446
      %455 = vset.pattern.permute.xlu0 0
      %456 = vperm.xlu0 %455, %v325
      %v457 = vpop.permute.xlu0 %456
      %v459 = vmul.f32 %v457, %v377
      %v460 = vmul.f32 %v457, %v390
      %v461 = vadd.f32 %v452, %v459
      %v462 = vadd.f32 %v453, %v460
      %463 = vrot.lane.b32.xlu0 %v377, 112
      %v464 = vpop.permute.xlu0 %463
      %465 = vrot.lane.b32.xlu0 %v390, 112
      %v466 = vpop.permute.xlu0 %465
      %vm467 = vcmp.lt.s32.totalorder %v394, 112
      %v468 = vsel %vm467, %v464, %v466
      %v469 = vsel %vm467, %v466, %v464
      %vm470 = vcmp.lt.s32.totalorder %v394, 240
      %vm471 = vcmp.lt.s32.totalorder %v395, 240
      %v472 = vsel %vm470, %v468, 0.0
      %v473 = vsel %vm471, %v469, 0.0
      %475 = vset.pattern.permute.xlu0 0
      %476 = vperm.xlu0 %475, %v326
      %v477 = vpop.permute.xlu0 %476
      %v479 = vmul.f32 %v477, %v472
      %v480 = vmul.f32 %v477, %v473
      %v481 = vadd.f32 %v461, %v479
      %v482 = vadd.f32 %v462, %v480
      %484 = vset.pattern.permute.xlu0 0
      %485 = vperm.xlu0 %484, %v333
      %v486 = vpop.permute.xlu0 %485
      %v488 = vadd.f32 %v481, %v486
      %v489 = vadd.f32 %v482, %v486
      %490 = vrot.lane.b32.xlu0 %v377, 1
      %v491 = vpop.permute.xlu0 %490
      %492 = vrot.lane.b32.xlu0 %v390, 1
      %v493 = vpop.permute.xlu0 %492
      %vm494 = vcmp.lt.s32.totalorder %v394, 1
      %v495 = vsel %vm494, %v491, %v493
      %v496 = vsel %vm494, %v493, %v491
      %vm497 = vcmp.ge.s32.totalorder %v418, 1
      %vm498 = vcmp.ge.s32.totalorder %v419, 1
      %v499 = vsel %vm497, %v496, 0.0
      %v500 = vsel %vm498, %v495, 0.0
      %502 = vset.pattern.permute.xlu0 0
      %503 = vperm.xlu0 %502, %v336
      %v504 = vpop.permute.xlu0 %503
      %v506 = vmul.f32 %v504, %v499
      %v507 = vmul.f32 %v504, %v500
      %509 = vset.pattern.permute.xlu0 0
      %510 = vperm.xlu0 %509, %v337
      %v511 = vpop.permute.xlu0 %510
      %v513 = vmul.f32 %v511, %v377
      %v514 = vmul.f32 %v511, %v390
      %v515 = vadd.f32 %v506, %v513
      %v516 = vadd.f32 %v507, %v514
      %517 = vrot.lane.b32.xlu0 %v377, 127
      %v518 = vpop.permute.xlu0 %517
      %519 = vrot.lane.b32.xlu0 %v390, 127
      %v520 = vpop.permute.xlu0 %519
      %vm521 = vcmp.lt.s32.totalorder %v394, 127
      %v522 = vsel %vm521, %v518, %v520
      %v523 = vsel %vm521, %v520, %v518
      %vm524 = vcmp.lt.s32.totalorder %v418, 15
      %vm525 = vcmp.lt.s32.totalorder %v419, 15
      %v526 = vsel %vm524, %v522, 0.0
      %v527 = vsel %vm525, %v523, 0.0
      %529 = vset.pattern.permute.xlu0 0
      %530 = vperm.xlu0 %529, %v338
      %v531 = vpop.permute.xlu0 %530
      %v533 = vmul.f32 %v531, %v526
      %v534 = vmul.f32 %v531, %v527
      %v535 = vadd.f32 %v515, %v533
      %v536 = vadd.f32 %v516, %v534
      %538 = vset.pattern.permute.xlu0 0
      %539 = vperm.xlu0 %538, %v345
      %v540 = vpop.permute.xlu0 %539
      %v542 = vadd.f32 %v535, %v540
      %v543 = vadd.f32 %v536, %v540
      %v544 = vadd.f32 %v377, %v488
      %v545 = vadd.f32 %v390, %v489
      %v546 = vadd.f32 %v544, %v542
      %v547 = vadd.f32 %v545, %v543
      %v548 = vsel %vm420, %v546, 0.0
      %v549 = vsel %vm420, %v547, 0.0
      %v550 = vadd.f32 %v548, %v549
      %551 = vadd.xlane.f32.xlu0 %v550
      %v552 = vpop.xlane.xlu0 %551
      %s553 = scalar_lea.vmem %s313, 4
      %554 = vst.msk [vmem:[%s553] sm:$0xf] %vm426, %v552
      %v555 = vmul.f32 %v546, %v546
      %v556 = vmul.f32 %v547, %v547
      %v557 = vsel %vm420, %v555, 0.0
      %v558 = vsel %vm420, %v556, 0.0
      %v559 = vadd.f32 %v557, %v558
      %560 = vadd.xlane.f32.xlu0 %v559
      %v561 = vpop.xlane.xlu0 %560
      %s562 = scalar_lea.vmem %s318, 4
      %563 = vst.msk [vmem:[%s562] sm:$0xf] %vm426, %v561
      %564 = vrot.lane.b32.xlu0 %v377, 32
      %v565 = vpop.permute.xlu0 %564
      %566 = vrot.lane.b32.xlu0 %v390, 32
      %v567 = vpop.permute.xlu0 %566
      %vm568 = vcmp.lt.s32.totalorder %v394, 32
      %v569 = vsel %vm568, %v565, %v567
      %v570 = vsel %vm568, %v567, %v565
      %vm571 = vcmp.ge.s32.totalorder %v394, 32
      %vm572 = vcmp.ge.s32.totalorder %v395, 32
      %v573 = vsel %vm571, %v570, 0.0
      %v574 = vsel %vm572, %v569, 0.0
      %576 = vset.pattern.permute.xlu0 0
      %577 = vperm.xlu0 %576, %v327
      %v578 = vpop.permute.xlu0 %577
      %v580 = vmul.f32 %v578, %v573
      %v581 = vmul.f32 %v578, %v574
      %583 = vset.pattern.permute.xlu0 0
      %584 = vperm.xlu0 %583, %v328
      %v585 = vpop.permute.xlu0 %584
      %v587 = vmul.f32 %v585, %v377
      %v588 = vmul.f32 %v585, %v390
      %v589 = vadd.f32 %v580, %v587
      %v590 = vadd.f32 %v581, %v588
      %591 = vrot.lane.b32.xlu0 %v377, 96
      %v592 = vpop.permute.xlu0 %591
      %593 = vrot.lane.b32.xlu0 %v390, 96
      %v594 = vpop.permute.xlu0 %593
      %vm595 = vcmp.lt.s32.totalorder %v394, 96
      %v596 = vsel %vm595, %v592, %v594
      %v597 = vsel %vm595, %v594, %v592
      %vm598 = vcmp.lt.s32.totalorder %v394, 224
      %vm599 = vcmp.lt.s32.totalorder %v395, 224
      %v600 = vsel %vm598, %v596, 0.0
      %v601 = vsel %vm599, %v597, 0.0
      %603 = vset.pattern.permute.xlu0 0
      %604 = vperm.xlu0 %603, %v329
      %v605 = vpop.permute.xlu0 %604
      %v607 = vmul.f32 %v605, %v600
      %v608 = vmul.f32 %v605, %v601
      %v609 = vadd.f32 %v589, %v607
      %v610 = vadd.f32 %v590, %v608
      %612 = vset.pattern.permute.xlu0 0
      %613 = vperm.xlu0 %612, %v334
      %v614 = vpop.permute.xlu0 %613
      %v616 = vadd.f32 %v609, %v614
      %v617 = vadd.f32 %v610, %v614
      %618 = vrot.lane.b32.xlu0 %v377, 2
      %v619 = vpop.permute.xlu0 %618
      %620 = vrot.lane.b32.xlu0 %v390, 2
      %v621 = vpop.permute.xlu0 %620
      %vm622 = vcmp.lt.s32.totalorder %v394, 2
      %v623 = vsel %vm622, %v619, %v621
      %v624 = vsel %vm622, %v621, %v619
      %vm625 = vcmp.ge.s32.totalorder %v418, 2
      %vm626 = vcmp.ge.s32.totalorder %v419, 2
      %v627 = vsel %vm625, %v624, 0.0
      %v628 = vsel %vm626, %v623, 0.0
      %630 = vset.pattern.permute.xlu0 0
      %631 = vperm.xlu0 %630, %v339
      %v632 = vpop.permute.xlu0 %631
      %v634 = vmul.f32 %v632, %v627
      %v635 = vmul.f32 %v632, %v628
      %637 = vset.pattern.permute.xlu0 0
      %638 = vperm.xlu0 %637, %v340
      %v639 = vpop.permute.xlu0 %638
      %v641 = vmul.f32 %v639, %v377
      %v642 = vmul.f32 %v639, %v390
      %v643 = vadd.f32 %v634, %v641
      %v644 = vadd.f32 %v635, %v642
      %645 = vrot.lane.b32.xlu0 %v377, 126
      %v646 = vpop.permute.xlu0 %645
      %647 = vrot.lane.b32.xlu0 %v390, 126
      %v648 = vpop.permute.xlu0 %647
      %vm649 = vcmp.lt.s32.totalorder %v394, 126
      %v650 = vsel %vm649, %v646, %v648
      %v651 = vsel %vm649, %v648, %v646
      %vm652 = vcmp.lt.s32.totalorder %v418, 14
      %vm653 = vcmp.lt.s32.totalorder %v419, 14
      %v654 = vsel %vm652, %v650, 0.0
      %v655 = vsel %vm653, %v651, 0.0
      %657 = vset.pattern.permute.xlu0 0
      %658 = vperm.xlu0 %657, %v341
      %v659 = vpop.permute.xlu0 %658
      %v661 = vmul.f32 %v659, %v654
      %v662 = vmul.f32 %v659, %v655
      %v663 = vadd.f32 %v643, %v661
      %v664 = vadd.f32 %v644, %v662
      %666 = vset.pattern.permute.xlu0 0
      %667 = vperm.xlu0 %666, %v346
      %v668 = vpop.permute.xlu0 %667
      %v670 = vadd.f32 %v663, %v668
      %v671 = vadd.f32 %v664, %v668
      %v672 = vadd.f32 %v377, %v616
      %v673 = vadd.f32 %v390, %v617
      %v674 = vadd.f32 %v672, %v670
      %v675 = vadd.f32 %v673, %v671
      %v676 = vsel %vm420, %v674, 0.0
      %v677 = vsel %vm420, %v675, 0.0
      %v678 = vadd.f32 %v676, %v677
      %679 = vadd.xlane.f32.xlu0 %v678
      %v680 = vpop.xlane.xlu0 %679
      %s681 = scalar_lea.vmem %s313, 8
      %682 = vst.msk [vmem:[%s681] sm:$0xf] %vm426, %v680
      %v683 = vmul.f32 %v674, %v674
      %v684 = vmul.f32 %v675, %v675
      %v685 = vsel %vm420, %v683, 0.0
      %v686 = vsel %vm420, %v684, 0.0
      %v687 = vadd.f32 %v685, %v686
      %688 = vadd.xlane.f32.xlu0 %v687
      %v689 = vpop.xlane.xlu0 %688
      %s690 = scalar_lea.vmem %s318, 8
      %691 = vst.msk [vmem:[%s690] sm:$0xf] %vm426, %v689
      %692 = vrot.lane.b32.xlu0 %v377, 48
      %v693 = vpop.permute.xlu0 %692
      %694 = vrot.lane.b32.xlu0 %v390, 48
      %v695 = vpop.permute.xlu0 %694
      %vm696 = vcmp.lt.s32.totalorder %v394, 48
      %v697 = vsel %vm696, %v693, %v695
      %v698 = vsel %vm696, %v695, %v693
      %vm699 = vcmp.ge.s32.totalorder %v394, 48
      %vm700 = vcmp.ge.s32.totalorder %v395, 48
      %v701 = vsel %vm699, %v698, 0.0
      %v702 = vsel %vm700, %v697, 0.0
      %704 = vset.pattern.permute.xlu0 0
      %705 = vperm.xlu0 %704, %v330
      %v706 = vpop.permute.xlu0 %705
      %v708 = vmul.f32 %v706, %v701
      %v709 = vmul.f32 %v706, %v702
      %711 = vset.pattern.permute.xlu0 0
      %712 = vperm.xlu0 %711, %v331
      %v713 = vpop.permute.xlu0 %712
      %v715 = vmul.f32 %v713, %v377
      %v716 = vmul.f32 %v713, %v390
      %v717 = vadd.f32 %v708, %v715
      %v718 = vadd.f32 %v709, %v716
      %719 = vrot.lane.b32.xlu0 %v377, 80
      %v720 = vpop.permute.xlu0 %719
      %721 = vrot.lane.b32.xlu0 %v390, 80
      %v722 = vpop.permute.xlu0 %721
      %vm723 = vcmp.lt.s32.totalorder %v394, 80
      %v724 = vsel %vm723, %v720, %v722
      %v725 = vsel %vm723, %v722, %v720
      %vm726 = vcmp.lt.s32.totalorder %v394, 208
      %vm727 = vcmp.lt.s32.totalorder %v395, 208
      %v728 = vsel %vm726, %v724, 0.0
      %v729 = vsel %vm727, %v725, 0.0
      %731 = vset.pattern.permute.xlu0 0
      %732 = vperm.xlu0 %731, %v332
      %v733 = vpop.permute.xlu0 %732
      %v735 = vmul.f32 %v733, %v728
      %v736 = vmul.f32 %v733, %v729
      %v737 = vadd.f32 %v717, %v735
      %v738 = vadd.f32 %v718, %v736
      %740 = vset.pattern.permute.xlu0 0
      %741 = vperm.xlu0 %740, %v335
      %v742 = vpop.permute.xlu0 %741
      %v744 = vadd.f32 %v737, %v742
      %v745 = vadd.f32 %v738, %v742
      %746 = vrot.lane.b32.xlu0 %v377, 3
      %v747 = vpop.permute.xlu0 %746
      %748 = vrot.lane.b32.xlu0 %v390, 3
      %v749 = vpop.permute.xlu0 %748
      %vm750 = vcmp.lt.s32.totalorder %v394, 3
      %v751 = vsel %vm750, %v747, %v749
      %v752 = vsel %vm750, %v749, %v747
      %vm753 = vcmp.ge.s32.totalorder %v418, 3
      %vm754 = vcmp.ge.s32.totalorder %v419, 3
      %v755 = vsel %vm753, %v752, 0.0
      %v756 = vsel %vm754, %v751, 0.0
      %758 = vset.pattern.permute.xlu0 0
      %759 = vperm.xlu0 %758, %v342
      %v760 = vpop.permute.xlu0 %759
      %v762 = vmul.f32 %v760, %v755
      %v763 = vmul.f32 %v760, %v756
      %765 = vset.pattern.permute.xlu0 0
      %766 = vperm.xlu0 %765, %v343
      %v767 = vpop.permute.xlu0 %766
      %v769 = vmul.f32 %v767, %v377
      %v770 = vmul.f32 %v767, %v390
      %v771 = vadd.f32 %v762, %v769
      %v772 = vadd.f32 %v763, %v770
      %773 = vrot.lane.b32.xlu0 %v377, 125
      %v774 = vpop.permute.xlu0 %773
      %775 = vrot.lane.b32.xlu0 %v390, 125
      %v776 = vpop.permute.xlu0 %775
      %vm777 = vcmp.lt.s32.totalorder %v394, 125
      %v778 = vsel %vm777, %v774, %v776
      %v779 = vsel %vm777, %v776, %v774
      %vm780 = vcmp.lt.s32.totalorder %v418, 13
      %vm781 = vcmp.lt.s32.totalorder %v419, 13
      %v782 = vsel %vm780, %v778, 0.0
      %v783 = vsel %vm781, %v779, 0.0
      %785 = vset.pattern.permute.xlu0 0
      %786 = vperm.xlu0 %785, %v344
      %v787 = vpop.permute.xlu0 %786
      %v789 = vmul.f32 %v787, %v782
      %v790 = vmul.f32 %v787, %v783
      %v791 = vadd.f32 %v771, %v789
      %v792 = vadd.f32 %v772, %v790
      %794 = vset.pattern.permute.xlu0 0
      %795 = vperm.xlu0 %794, %v347
      %v796 = vpop.permute.xlu0 %795
      %v798 = vadd.f32 %v791, %v796
      %v799 = vadd.f32 %v792, %v796
      %v800 = vadd.f32 %v377, %v744
      %v801 = vadd.f32 %v390, %v745
      %v802 = vadd.f32 %v800, %v798
      %v803 = vadd.f32 %v801, %v799
      %v804 = vsel %vm420, %v802, 0.0
      %v805 = vsel %vm420, %v803, 0.0
      %v806 = vadd.f32 %v804, %v805
      %807 = vadd.xlane.f32.xlu0 %v806
      %v808 = vpop.xlane.xlu0 %807
      %s809 = scalar_lea.vmem %s313, 12
      %810 = vst.msk [vmem:[%s809] sm:$0xf] %vm426, %v808
      %v811 = vmul.f32 %v802, %v802
      %v812 = vmul.f32 %v803, %v803
      %v813 = vsel %vm420, %v811, 0.0
      %v814 = vsel %vm420, %v812, 0.0
      %v815 = vadd.f32 %v813, %v814
      %816 = vadd.xlane.f32.xlu0 %v815
      %v817 = vpop.xlane.xlu0 %816
      %s818 = scalar_lea.vmem %s318, 12
      %819 = vst.msk [vmem:[%s818] sm:$0xf] %vm426, %v817
      %p820 = scmp.lt.s32.totalorder %s20, 1
      %s821 = scalar_select %p820, %s20, 1
      %s822 = smul.addr %s821, 4
      %s823 = smul.addr %s822, 4
      %s824 = scalar_lea.vmem %s7, %s823
      %p825 = scmp.lt.s32.totalorder %s20, 1
      %s826 = scalar_select %p825, %s20, 1
      %s827 = smul.addr %s826, 4
      %s828 = smul.addr %s827, 4
      %s829 = scalar_lea.vmem %s8, %s828
      // Predicated region
      $region49: #{bottleneck_block.2} parent=47 // pred_check
        %p830 = pneg %p190
      $region50: #{bottleneck_block.2} parent=47 // pred_check_branch
        %832 = sbr.rel (%p830) target = $region52
      $region51: #{bottleneck_block.2} parent=47 // pred_region
        _
      $region52: #{bottleneck_block.2} parent=47 // pred_fallthru
        _
      // Predicated region
      $region53: #{bottleneck_block.2} parent=47 // pred_check
        %p833 = pneg %p216
      $region54: #{bottleneck_block.2} parent=47 // pred_check_branch
        %835 = sbr.rel (%p833) target = $region56
      $region55: #{bottleneck_block.2} parent=47 // pred_region
        _
      $region56: #{bottleneck_block.2} parent=47 // pred_fallthru
        _
    $region48: #{bottleneck_block.2} parent=5 // pred_fallthru
      _
    %p836 = scmp.le.s32.totalorder 2, %s15
    // Predicated region
    $region57: #{bottleneck_block.2} parent=5 // pred_check
      %p837 = pneg %p836
    $region58: #{bottleneck_block.2} parent=5 // pred_check_branch
      %839 = sbr.rel (%p837) target = $region60
    $region59: #{bottleneck_block.2} parent=5 // pred_region
      %s840 = ssub.s32 %s15, 2
      // Predicated region
      $region61: #{bottleneck_block.2} parent=59 // pred_check
        %p841 = pneg %p196
      $region62: #{bottleneck_block.2} parent=59 // pred_check_branch
        %843 = sbr.rel (%p841) target = $region64
      $region63: #{bottleneck_block.2} parent=59 // pred_region
        %p844 = scmp.lt.s32.totalorder %s21, 1
        %s845 = scalar_select %p844, %s21, 1
        %s846 = smul.addr %s845, 4
        %s847 = smul.addr %s846, 4
        %s848 = scalar_lea.vmem %s7, %s847
      $region64: #{bottleneck_block.2} parent=59 // pred_fallthru
        _
      // Predicated region
      $region65: #{bottleneck_block.2} parent=59 // pred_check
        %p849 = pneg %p222
      $region66: #{bottleneck_block.2} parent=59 // pred_check_branch
        %851 = sbr.rel (%p849) target = $region68
      $region67: #{bottleneck_block.2} parent=59 // pred_region
        %p852 = scmp.lt.s32.totalorder %s21, 1
        %s853 = scalar_select %p852, %s21, 1
        %s854 = smul.addr %s853, 4
        %s855 = smul.addr %s854, 4
        %s856 = scalar_lea.vmem %s8, %s855
      $region68: #{bottleneck_block.2} parent=59 // pred_fallthru
        _
    $region60: #{bottleneck_block.2} parent=5 // pred_fallthru
      _
  $region6: #{bottleneck_block.2} parent=0 // loop_footer
    %s19 = sadd.s32 1, %s15
  $region7: #{bottleneck_block.2} parent=0 // loop_footer_branch
    %14 = sbr.rel target = $region3
  $region8: #{bottleneck_block.2} parent=0 // loop_exit
    _

// kernel: bottleneck_block.3
$region0: #{bottleneck_block.3}
  #allocation0 [shape = 'u32[]', space=smem, size = 0x4, offset = 0x4, fixed_abs, tag = 'smem constant byte address 0x4 - core index']
  #allocation1 [shape = 'u32[72,128]{1,0:T(1,128)}', space=vmem, size = 0x9000, scoped, tag = 'internal scratch']
  %s0 = inlined_call_operand.vmem [shape: bf16[2,16,256], index: 0, kind: input, shape index: {}]
  %s1 = inlined_call_operand.vmem [shape: bf16[4,16], index: 1, kind: input, shape index: {}]
  %s2 = inlined_call_operand.vmem [shape: f32[4,1], index: 2, kind: input, shape index: {}]
  %s3 = inlined_call_operand.vmem [shape: f32[3,3,4,1], index: 3, kind: input, shape index: {}]
  %s4 = inlined_call_operand.vmem [shape: f32[3,4,1], index: 4, kind: input, shape index: {}]
  %s5 = inlined_call_operand.vmem [shape: f32[3,3,4,1], index: 5, kind: input, shape index: {}]
  %s6 = inlined_call_operand.vmem [shape: f32[3,4,1], index: 6, kind: input, shape index: {}]
  %s7 = inlined_call_operand.vmem [shape: bf16[4,16,4], index: 7, kind: input, shape index: {}]
  %s8 = inlined_call_operand.vmem [shape: f32[16,1], index: 8, kind: input, shape index: {}]
  %s9 = inlined_call_operand.vmem [shape: f32[2,16,256], index: 9, kind: output, shape index: {}]
  %s10 = sld [smem:[#allocation0]]
  $region69: #{bottleneck_block.3} parent=0
    _
  %s12 = ssub.s32 1, %s10
  %s13 = scalar_select 0, %s12, %s10
  loop: start=0, step=1, limit=4
  $region2: #{bottleneck_block.3} parent=0 // loop_pre_header
    _
  $region3: #{bottleneck_block.3} parent=0 // loop_header
    %s15 = sphi 0, %s19
    %p16 = scmp.ge.s32.totalorder %s15, 4
    %s25 = sphi 0, %s27
    %s28 = sphi 0, %s25
    %s29 = sphi 0, %s28
    %s45 = sphi 0, %s29
    %s49 = sphi 0, %s49
    %s51 = sphi 0, %s49
    %s52 = sphi 0, %s51
    %s66 = sphi 0, %s52
    %s70 = sphi 0, %s70
    %s72 = sphi 0, %s70
    %s73 = sphi 0, %s72
    %s87 = sphi 0, %s73
    %s91 = sphi 0, %s91
    %s93 = sphi 0, %s91
    %s94 = sphi 0, %s93
    %s108 = sphi 0, %s94
    %s112 = sphi 0, %s112
    %s114 = sphi 0, %s112
    %s115 = sphi 0, %s114
    %s129 = sphi 0, %s115
    %s133 = sphi 0, %s133
    %s135 = sphi 0, %s133
    %s136 = sphi 0, %s135
    %s150 = sphi 0, %s136
    %s154 = sphi 0, %s154
    %s156 = sphi 0, %s154
    %s157 = sphi 0, %s156
    %s171 = sphi 0, %s157
    %s175 = sphi 0, %s175
    %s177 = sphi 0, %s175
    %s178 = sphi 0, %s177
    %s192 = sphi 0, %s178
    %s196 = sphi 0, %s196
    %s198 = sphi 0, %s196
    %s199 = sphi 0, %s198
    %s213 = sphi 0, %s199
    %s219 = sphi 0, %s221
    %s222 = sphi 0, %s219
    %s223 = sphi 0, %s222
    %s239 = sphi 0, %s223
  $region4: #{bottleneck_block.3} parent=0 // loop_header_branch
    %18 = sbr.rel (%p16) target = $region8
  $region5: #{bottleneck_block.3} parent=0 // loop_body
    %s20 = ssub.s32 %s15, 1
    %s21 = ssub.s32 %s15, 2
    %s22 = sadd.s32 %s15, 1
    %s23 = ssub.s32 %s15, %s22
    %p24 = scmp.eq.s32.totalorder %s23, 0
    %s26 = sadd.s32 %s25, 1
    %s27 = scalar_select %p24, %s25, %s26
    %p30 = pneg %p24
    %p31 = scmp.eq.s32.totalorder %s15, 1
    %p32 = por %p30, %p31
    %p33 = scmp.ne.s32.totalorder %s25, %s28
    %p34 = scmp.eq.s32.totalorder %s15, 0
    %p35 = por %p33, %p34
    %p36 = scmp.ne.s32.totalorder %s25, %s28
    %p37 = scmp.eq.s32.totalorder %s20, 1
    %p38 = por %p36, %p37
    %p39 = scmp.ne.s32.totalorder %s28, %s29
    %p40 = scmp.eq.s32.totalorder %s20, 0
    %p41 = por %p39, %p40
    %p42 = scmp.ne.s32.totalorder %s28, %s29
    %p43 = scmp.eq.s32.totalorder %s21, 1
    %p44 = por %p42, %p43
    %p46 = scmp.ne.s32.totalorder %s29, %s45
    %p47 = scmp.eq.s32.totalorder %s21, 0
    %p48 = por %p46, %p47
    %s50 = sadd.s32 %s49, 1
    %p53 = scmp.eq.s32.totalorder %s15, 1
    %p54 = scmp.ne.s32.totalorder %s49, %s51
    %p55 = scmp.eq.s32.totalorder %s15, 0
    %p56 = por %p54, %p55
    %p57 = scmp.ne.s32.totalorder %s49, %s51
    %p58 = scmp.eq.s32.totalorder %s20, 1
    %p59 = por %p57, %p58
    %p60 = scmp.ne.s32.totalorder %s51, %s52
    %p61 = scmp.eq.s32.totalorder %s20, 0
    %p62 = por %p60, %p61
    %p63 = scmp.ne.s32.totalorder %s51, %s52
    %p64 = scmp.eq.s32.totalorder %s21, 1
    %p65 = por %p63, %p64
    %p67 = scmp.ne.s32.totalorder %s52, %s66
    %p68 = scmp.eq.s32.totalorder %s21, 0
    %p69 = por %p67, %p68
    %s71 = sadd.s32 %s70, 1
    %p74 = scmp.eq.s32.totalorder %s15, 1
    %p75 = scmp.ne.s32.totalorder %s70, %s72
    %p76 = scmp.eq.s32.totalorder %s15, 0
    %p77 = por %p75, %p76
    %p78 = scmp.ne.s32.totalorder %s70, %s72
    %p79 = scmp.eq.s32.totalorder %s20, 1
    %p80 = por %p78, %p79
    %p81 = scmp.ne.s32.totalorder %s72, %s73
    %p82 = scmp.eq.s32.totalorder %s20, 0
    %p83 = por %p81, %p82
    %p84 = scmp.ne.s32.totalorder %s72, %s73
    %p85 = scmp.eq.s32.totalorder %s21, 1
    %p86 = por %p84, %p85
    %p88 = scmp.ne.s32.totalorder %s73, %s87
    %p89 = scmp.eq.s32.totalorder %s21, 0
    %p90 = por %p88, %p89
    %s92 = sadd.s32 %s91, 1
    %p95 = scmp.eq.s32.totalorder %s15, 1
    %p96 = scmp.ne.s32.totalorder %s91, %s93
    %p97 = scmp.eq.s32.totalorder %s15, 0
    %p98 = por %p96, %p97
    %p99 = scmp.ne.s32.totalorder %s91, %s93
    %p100 = scmp.eq.s32.totalorder %s20, 1
    %p101 = por %p99, %p100
    %p102 = scmp.ne.s32.totalorder %s93, %s94
    %p103 = scmp.eq.s32.totalorder %s20, 0
    %p104 = por %p102, %p103
    %p105 = scmp.ne.s32.totalorder %s93, %s94
    %p106 = scmp.eq.s32.totalorder %s21, 1
    %p107 = por %p105, %p106
    %p109 = scmp.ne.s32.totalorder %s94, %s108
    %p110 = scmp.eq.s32.totalorder %s21, 0
    %p111 = por %p109, %p110
    %s113 = sadd.s32 %s112, 1
    %p116 = scmp.eq.s32.totalorder %s15, 1
    %p117 = scmp.ne.s32.totalorder %s112, %s114
    %p118 = scmp.eq.s32.totalorder %s15, 0
    %p119 = por %p117, %p118
    %p120 = scmp.ne.s32.totalorder %s112, %s114
    %p121 = scmp.eq.s32.totalorder %s20, 1
    %p122 = por %p120, %p121
    %p123 = scmp.ne.s32.totalorder %s114, %s115
    %p124 = scmp.eq.s32.totalorder %s20, 0
    %p125 = por %p123, %p124
    %p126 = scmp.ne.s32.totalorder %s114, %s115
    %p127 = scmp.eq.s32.totalorder %s21, 1
    %p128 = por %p126, %p127
    %p130 = scmp.ne.s32.totalorder %s115, %s129
    %p131 = scmp.eq.s32.totalorder %s21, 0
    %p132 = por %p130, %p131
    %s134 = sadd.s32 %s133, 1
    %p137 = scmp.eq.s32.totalorder %s15, 1
    %p138 = scmp.ne.s32.totalorder %s133, %s135
    %p139 = scmp.eq.s32.totalorder %s15, 0
    %p140 = por %p138, %p139
    %p141 = scmp.ne.s32.totalorder %s133, %s135
    %p142 = scmp.eq.s32.totalorder %s20, 1
    %p143 = por %p141, %p142
    %p144 = scmp.ne.s32.totalorder %s135, %s136
    %p145 = scmp.eq.s32.totalorder %s20, 0
    %p146 = por %p144, %p145
    %p147 = scmp.ne.s32.totalorder %s135, %s136
    %p148 = scmp.eq.s32.totalorder %s21, 1
    %p149 = por %p147, %p148
    %p151 = scmp.ne.s32.totalorder %s136, %s150
    %p152 = scmp.eq.s32.totalorder %s21, 0
    %p153 = por %p151, %p152
    %s155 = sadd.s32 %s154, 1
    %p158 = scmp.eq.s32.totalorder %s15, 1
    %p159 = scmp.ne.s32.totalorder %s154, %s156
    %p160 = scmp.eq.s32.totalorder %s15, 0
    %p161 = por %p159, %p160
    %p162 = scmp.ne.s32.totalorder %s154, %s156
    %p163 = scmp.eq.s32.totalorder %s20, 1
    %p164 = por %p162, %p163
    %p165 = scmp.ne.s32.totalorder %s156, %s157
    %p166 = scmp.eq.s32.totalorder %s20, 0
    %p167 = por %p165, %p166
    %p168 = scmp.ne.s32.totalorder %s156, %s157
    %p169 = scmp.eq.s32.totalorder %s21, 1
    %p170 = por %p168, %p169
    %p172 = scmp.ne.s32.totalorder %s157, %s171
    %p173 = scmp.eq.s32.totalorder %s21, 0
    %p174 = por %p172, %p173
    %s176 = sadd.s32 %s175, 1
    %p179 = scmp.eq.s32.totalorder %s15, 1
    %p180 = scmp.ne.s32.totalorder %s175, %s177
    %p181 = scmp.eq.s32.totalorder %s15, 0
    %p182 = por %p180, %p181
    %p183 = scmp.ne.s32.totalorder %s175, %s177
    %p184 = scmp.eq.s32.totalorder %s20, 1
    %p185 = por %p183, %p184
    %p186 = scmp.ne.s32.totalorder %s177, %s178
    %p187 = scmp.eq.s32.totalorder %s20, 0
    %p188 = por %p186, %p187
    %p189 = scmp.ne.s32.totalorder %s177, %s178
    %p190 = scmp.eq.s32.totalorder %s21, 1
    %p191 = por %p189, %p190
    %p193 = scmp.ne.s32.totalorder %s178, %s192
    %p194 = scmp.eq.s32.totalorder %s21, 0
    %p195 = por %p193, %p194
    %s197 = sadd.s32 %s196, 1
    %p200 = scmp.eq.s32.totalorder %s15, 1
    %p201 = scmp.ne.s32.totalorder %s196, %s198
    %p202 = scmp.eq.s32.totalorder %s15, 0
    %p203 = por %p201, %p202
    %p204 = scmp.ne.s32.totalorder %s196, %s198
    %p205 = scmp.eq.s32.totalorder %s20, 1
    %p206 = por %p204, %p205
    %p207 = scmp.ne.s32.totalorder %s198, %s199
    %p208 = scmp.eq.s32.totalorder %s20, 0
    %p209 = por %p207, %p208
    %p210 = scmp.ne.s32.totalorder %s198, %s199
    %p211 = scmp.eq.s32.totalorder %s21, 1
    %p212 = por %p210, %p211
    %p214 = scmp.ne.s32.totalorder %s199, %s213
    %p215 = scmp.eq.s32.totalorder %s21, 0
    %p216 = por %p214, %p215
    %s217 = ssub.s32 %s15, %s22
    %p218 = scmp.eq.s32.totalorder %s217, 0
    %s220 = sadd.s32 %s219, 1
    %s221 = scalar_select %p218, %s219, %s220
    %p224 = pneg %p218
    %p225 = scmp.eq.s32.totalorder %s15, 1
    %p226 = por %p224, %p225
    %p227 = scmp.ne.s32.totalorder %s219, %s222
    %p228 = scmp.eq.s32.totalorder %s15, 0
    %p229 = por %p227, %p228
    %p230 = scmp.ne.s32.totalorder %s219, %s222
    %p231 = scmp.eq.s32.totalorder %s20, 1
    %p232 = por %p230, %p231
    %p233 = scmp.ne.s32.totalorder %s222, %s223
    %p234 = scmp.eq.s32.totalorder %s20, 0
    %p235 = por %p233, %p234
    %p236 = scmp.ne.s32.totalorder %s222, %s223
    %p237 = scmp.eq.s32.totalorder %s21, 1
    %p238 = por %p236, %p237
    %p240 = scmp.ne.s32.totalorder %s223, %s239
    %p241 = scmp.eq.s32.totalorder %s21, 0
    %p242 = por %p240, %p241
    %p243 = scmp.le.s32.totalorder 1, %s15
    %p244 = scmp.lt.s32.totalorder %s15, 3
    %p245 = pnand %p243, %p244
    %p246 = pneg %p245
    // Predicated region
    $region9: #{bottleneck_block.3} parent=5 // pred_check
      _
    $region10: #{bottleneck_block.3} parent=5 // pred_check_branch
      %248 = sbr.rel (%p245) target = $region12
    $region11: #{bottleneck_block.3} parent=5 // pred_region
      %s249 = ssub.s32 %s15, 1
      // Predicated region
      $region13: #{bottleneck_block.3} parent=11 // pred_check
        %p250 = pneg %p62
      $region14: #{bottleneck_block.3} parent=11 // pred_check_branch
        %252 = sbr.rel (%p250) target = $region16
      $region15: #{bottleneck_block.3} parent=11 // pred_region
        _
      $region16: #{bottleneck_block.3} parent=11 // pred_fallthru
        _
      // Predicated region
      $region17: #{bottleneck_block.3} parent=11 // pred_check
        %p253 = pneg %p83
      $region18: #{bottleneck_block.3} parent=11 // pred_check_branch
        %255 = sbr.rel (%p253) target = $region20
      $region19: #{bottleneck_block.3} parent=11 // pred_region
        _
      $region20: #{bottleneck_block.3} parent=11 // pred_fallthru
        _
      // Predicated region
      $region21: #{bottleneck_block.3} parent=11 // pred_check
        %p256 = pneg %p104
      $region22: #{bottleneck_block.3} parent=11 // pred_check_branch
        %258 = sbr.rel (%p256) target = $region24
      $region23: #{bottleneck_block.3} parent=11 // pred_region
        _
      $region24: #{bottleneck_block.3} parent=11 // pred_fallthru
        _
      // Predicated region
      $region25: #{bottleneck_block.3} parent=11 // pred_check
        %p259 = pneg %p125
      $region26: #{bottleneck_block.3} parent=11 // pred_check_branch
        %261 = sbr.rel (%p259) target = $region28
      $region27: #{bottleneck_block.3} parent=11 // pred_region
        _
      $region28: #{bottleneck_block.3} parent=11 // pred_fallthru
        _
      // Predicated region
      $region29: #{bottleneck_block.3} parent=11 // pred_check
        %p262 = pneg %p146
      $region30: #{bottleneck_block.3} parent=11 // pred_check_branch
        %264 = sbr.rel (%p262) target = $region32
      $region31: #{bottleneck_block.3} parent=11 // pred_region
        _
      $region32: #{bottleneck_block.3} parent=11 // pred_fallthru
        _
      // Predicated region
      $region33: #{bottleneck_block.3} parent=11 // pred_check
        %p265 = pneg %p167
      $region34: #{bottleneck_block.3} parent=11 // pred_check_branch
        %267 = sbr.rel (%p265) target = $region36
      $region35: #{bottleneck_block.3} parent=11 // pred_region
        _
      $region36: #{bottleneck_block.3} parent=11 // pred_fallthru
        _
      // Predicated region
      $region37: #{bottleneck_block.3} parent=11 // pred_check
        %p268 = pneg %p188
      $region38: #{bottleneck_block.3} parent=11 // pred_check_branch
        %270 = sbr.rel (%p268) target = $region40
      $region39: #{bottleneck_block.3} parent=11 // pred_region
        _
      $region40: #{bottleneck_block.3} parent=11 // pred_fallthru
        _
      // Predicated region
      $region41: #{bottleneck_block.3} parent=11 // pred_check
        %p271 = pneg %p209
      $region42: #{bottleneck_block.3} parent=11 // pred_check_branch
        %273 = sbr.rel (%p271) target = $region44
      $region43: #{bottleneck_block.3} parent=11 // pred_region
        _
      $region44: #{bottleneck_block.3} parent=11 // pred_fallthru
        _
    $region12: #{bottleneck_block.3} parent=5 // pred_fallthru
      _
    %p274 = scmp.lt.s32.totalorder %s15, 2
    // Predicated region
    $region45: #{bottleneck_block.3} parent=5 // pred_check
      %p275 = pneg %p274
    $region46: #{bottleneck_block.3} parent=5 // pred_check_branch
      %277 = sbr.rel (%p275) target = $region48
    $region47: #{bottleneck_block.3} parent=5 // pred_region
      // Predicated region
      $region49: #{bottleneck_block.3} parent=47 // pred_check
        %p278 = pneg %p35
      $region50: #{bottleneck_block.3} parent=47 // pred_check_branch
        %280 = sbr.rel (%p278) target = $region52
      $region51: #{bottleneck_block.3} parent=47 // pred_region
        %p281 = scmp.lt.s32.totalorder %s15, 1
        %s282 = scalar_select %p281, %s15, 1
        %s283 = smul.addr %s282, 4
        %s284 = smul.addr %s283, 4
        %s285 = scalar_lea.vmem %s0, %s284
      $region52: #{bottleneck_block.3} parent=47 // pred_fallthru
        _
    $region48: #{bottleneck_block.3} parent=5 // pred_fallthru
      _
    %p286 = scmp.le.s32.totalorder 1, %s15
    %p287 = scmp.lt.s32.totalorder %s15, 3
    %p288 = pnand %p286, %p287
    %p289 = pneg %p288
    // Predicated region
    $region53: #{bottleneck_block.3} parent=5 // pred_check
      _
    $region54: #{bottleneck_block.3} parent=5 // pred_check_branch
      %291 = sbr.rel (%p288) target = $region56
    $region55: #{bottleneck_block.3} parent=5 // pred_region
      %s292 = ssub.s32 %s15, 1
      %p293 = scmp.lt.s32.totalorder %s20, 1
      %s294 = scalar_select %p293, %s20, 1
      %s295 = smul.addr %s294, 4
      %s296 = smul.addr %s295, 4
      %s297 = scalar_lea.vmem %s0, %s296
      %p298 = pneg %p41
      %p299 = pneg %p38
      %p300 = pneg %p62
      %p301 = pneg %p59
      %p302 = pneg %p83
      %p303 = pneg %p80
      %p304 = pneg %p104
      %p305 = pneg %p101
      %p306 = pneg %p125
      %p307 = pneg %p122
      %p308 = pneg %p146
      %p309 = pneg %p143
      %p310 = pneg %p167
      %p311 = pneg %p164
      %p312 = pneg %p188
      %p313 = pneg %p185
      %p314 = pneg %p209
      %p315 = pneg %p206
      %p316 = pneg %p235
      %p317 = pneg %p232
      %p318 = scmp.lt.s32.totalorder %s20, 1
      %s319 = scalar_select %p318, %s20, 1
      %s320 = smul.addr %s319, 4
      %s321 = smul.addr %s320, 8
      %s322 = scalar_lea.vmem %s9, %s321
      %p323 = scmp.lt.s32.totalorder %s20, 1
      %s324 = scalar_select %p323, %s20, 1
      %s325 = smul.addr %s324, 4
      %s326 = smul.addr %s325, 4
      %s327 = scalar_lea.vmem %s0, %s326
      %p328 = scmp.lt.s32.totalorder %s20, 1
      %s329 = scalar_select %p328, %s20, 1
      %s330 = smul.addr %s329, 4
      %s331 = smul.addr %s330, 8
      %s332 = scalar_lea.vmem %s9, %s331
      %v334 = vld [vmem:[%s327] sm:$0xff]
      %v335 = vld [vmem:[%s327 + $0x8] sm:$0xff]
      %v336 = vld [vmem:[%s7] sm:$0xf]
      %v337 = vld [vmem:[%s7 + $0x4] sm:$0xf]
      %v338 = vld [vmem:[%s7 + $0x8] sm:$0xf]
      %v339 = vld [vmem:[%s7 + $0xc] sm:$0xf]
      %v340 = vld [vmem:[%s7 + $0x10] sm:$0xf]
      %v341 = vld [vmem:[%s7 + $0x14] sm:$0xf]
      %v342 = vld [vmem:[%s7 + $0x18] sm:$0xf]
      %v343 = vld [vmem:[%s7 + $0x1c] sm:$0xf]
      %v344 = vld [vmem:[%s1] sm:$0x3]
      %v345 = vld [vmem:[%s2] sm:$0xf]
      %v346 = vld [vmem:[%s3] sm:$0xf]
      %v347 = vld [vmem:[%s3 + $0x4] sm:$0xf]
      %v348 = vld [vmem:[%s3 + $0x8] sm:$0xf]
      %v349 = vld [vmem:[%s3 + $0xc] sm:$0xf]
      %v350 = vld [vmem:[%s3 + $0x10] sm:$0xf]
      %v351 = vld [vmem:[%s3 + $0x14] sm:$0xf]
      %v352 = vld [vmem:[%s3 + $0x18] sm:$0xf]
      %v353 = vld [vmem:[%s3 + $0x1c] sm:$0xf]
      %v354 = vld [vmem:[%s3 + $0x20] sm:$0xf]
      %v355 = vld [vmem:[%s4] sm:$0xf]
      %v356 = vld [vmem:[%s4 + $0x4] sm:$0xf]
      %v357 = vld [vmem:[%s4 + $0x8] sm:$0xf]
      %v358 = vld [vmem:[%s5] sm:$0xf]
      %v359 = vld [vmem:[%s5 + $0x4] sm:$0xf]
      %v360 = vld [vmem:[%s5 + $0x8] sm:$0xf]
      %v361 = vld [vmem:[%s5 + $0xc] sm:$0xf]
      %v362 = vld [vmem:[%s5 + $0x10] sm:$0xf]
      %v363 = vld [vmem:[%s5 + $0x14] sm:$0xf]
      %v364 = vld [vmem:[%s5 + $0x18] sm:$0xf]
      %v365 = vld [vmem:[%s5 + $0x1c] sm:$0xf]
      %v366 = vld [vmem:[%s5 + $0x20] sm:$0xf]
      %v367 = vld [vmem:[%s6] sm:$0xf]
      %v368 = vld [vmem:[%s6 + $0x4] sm:$0xf]
      %v369 = vld [vmem:[%s6 + $0x8] sm:$0xf]
      %371 = vset.pattern.permute.xlu0 0
      %372 = vperm.xlu0 %371, %v345
      %v373 = vpop.permute.xlu0 %372
      %v377 = vunpack.c.l.b16 %v334
      %v378 = vunpack.c.h.b16 %v334
      %v379 = vunpack.c.l.b16 %v335
      %v380 = vunpack.c.h.b16 %v335
      %v381 = vpack.c.b16 %v379, %v377
      %v382 = vpack.c.b16 %v380, %v378
      %vm385 = vcmask 130048
      %v387 = vsel %vm385, %v344, 0
      %389 = vmatpush.bf16.msra.mxu0 0
      %390 = vmatpush.bf16.msra.mxu0 0
      %391 = vmatpush.bf16.msra.mxu0 0
      %392 = vmatpush.bf16.msra.mxu0 0
      %393 = vmatpush.bf16.msra.mxu0 0
      %394 = vmatpush.bf16.msra.mxu0 0
      %395 = vmatpush.bf16.msra.mxu0 0
      %396 = vmatpush.bf16.msra.mxu0 %v381
      %397 = vmatmul.bf16.gmra.mxu0 %v387
      %v398 = vpop.f32.mrf.mxu0
      %v399 = vadd.f32 %v373, %v398
      %v400 = vpop.f32.mrf.mxu0
      %401 = vdwg.mxu0
      %402 = vmatpush.bf16.msra.mxu0 0
      %403 = vmatpush.bf16.msra.mxu0 0
      %404 = vmatpush.bf16.msra.mxu0 0
      %405 = vmatpush.bf16.msra.mxu0 0
      %406 = vmatpush.bf16.msra.mxu0 0
      %407 = vmatpush.bf16.msra.mxu0 0
      %408 = vmatpush.bf16.msra.mxu0 0
      %409 = vmatpush.bf16.msra.mxu0 %v382
      %410 = vmatmul.bf16.gmra.mxu0 %v387
      %v411 = vpop.f32.mrf.mxu0
      %v412 = vadd.f32 %v373, %v411
      %v413 = vpop.f32.mrf.mxu0
      %414 = vdwg.mxu0
      %v415 = vlaneseq
      %v416 = vand.u32 %v415, 127
      %v417 = vadd.s32 %v416, 128
      %vm418 = vcmp.lt.s32.totalorder %v416, 0
      %v419 = vsub.s32 0, %v416
      %v420 = vsel %vm418, %v419, %v416
      %v421 = vshrl.u32 %v420, 4
      %v422 = vand.u32 %v420, 15
      %v423 = vsub.s32 0, %v422
      %v424 = vsel %vm418, %v423, %v422
      %vm425 = vcmp.lt.s32.totalorder %v417, 0
      %v426 = vsub.s32 0, %v417
      %v427 = vsel %vm425, %v426, %v417
      %v428 = vshrl.u32 %v427, 4
      %v429 = vand.u32 %v427, 15
      %v430 = vsub.s32 0, %v429
      %v431 = vsel %vm425, %v430, %v429
      %vm432 = vcmp.ne.s32.totalorder %v424, 0
      %vm433 = vcmp.ne.s32.totalorder %v431, 0
      %vm434 = vcmp.lt.s32.totalorder %v424, 0
      %vm435 = vcmp.lt.s32.totalorder %v431, 0
      %vm436 = vmand %vm434, %vm432
      %vm437 = vmand %vm435, %vm433
      %v438 = vadd.s32 %v424, 16
      %v439 = vadd.s32 %v431, 16
      %v440 = vsel %vm436, %v438, %v424
      %v441 = vsel %vm437, %v439, %v431
      %v442 = vpack.c.bf16 %v399, %v399
      %v443 = vpack.c.bf16 %v412, %v412
      %444 = vrot.lane.b32.xlu0 %v399, 16
      %v445 = vpop.permute.xlu0 %444
      %446 = vrot.lane.b32.xlu0 %v412, 16
      %v447 = vpop.permute.xlu0 %446
      %vm448 = vcmp.lt.s32.totalorder %v416, 16
      %v449 = vsel %vm448, %v445, %v447
      %v450 = vsel %vm448, %v447, %v445
      %vm451 = vcmp.ge.s32.totalorder %v416, 16
      %vm452 = vcmp.ge.s32.totalorder %v417, 16
      %v453 = vsel %vm451, %v450, 0.0
      %v454 = vsel %vm452, %v449, 0.0
      %456 = vset.pattern.permute.xlu0 0
      %457 = vperm.xlu0 %456, %v346
      %v458 = vpop.permute.xlu0 %457
      %v460 = vmul.f32 %v458, %v453
      %v461 = vmul.f32 %v458, %v454
      %463 = vset.pattern.permute.xlu0 0
      %464 = vperm.xlu0 %463, %v347
      %v465 = vpop.permute.xlu0 %464
      %v467 = vmul.f32 %v465, %v399
      %v468 = vmul.f32 %v465, %v412
      %v469 = vadd.f32 %v460, %v467
      %v470 = vadd.f32 %v461, %v468
      %471 = vrot.lane.b32.xlu0 %v399, 112
      %v472 = vpop.permute.xlu0 %471
      %473 = vrot.lane.b32.xlu0 %v412, 112
      %v474 = vpop.permute.xlu0 %473
      %vm475 = vcmp.lt.s32.totalorder %v416, 112
      %v476 = vsel %vm475, %v472, %v474
      %v477 = vsel %vm475, %v474, %v472
      %vm478 = vcmp.lt.s32.totalorder %v416, 240
      %vm479 = vcmp.lt.s32.totalorder %v417, 240
      %v480 = vsel %vm478, %v476, 0.0
      %v481 = vsel %vm479, %v477, 0.0
      %483 = vset.pattern.permute.xlu0 0
      %484 = vperm.xlu0 %483, %v348
      %v485 = vpop.permute.xlu0 %484
      %v487 = vmul.f32 %v485, %v480
      %v488 = vmul.f32 %v485, %v481
      %v489 = vadd.f32 %v469, %v487
      %v490 = vadd.f32 %v470, %v488
      %492 = vset.pattern.permute.xlu0 0
      %493 = vperm.xlu0 %492, %v355
      %v494 = vpop.permute.xlu0 %493
      %v496 = vadd.f32 %v489, %v494
      %v497 = vadd.f32 %v490, %v494
      %498 = vrot.lane.b32.xlu0 %v399, 1
      %v499 = vpop.permute.xlu0 %498
      %500 = vrot.lane.b32.xlu0 %v412, 1
      %v501 = vpop.permute.xlu0 %500
      %vm502 = vcmp.lt.s32.totalorder %v416, 1
      %v503 = vsel %vm502, %v499, %v501
      %v504 = vsel %vm502, %v501, %v499
      %vm505 = vcmp.ge.s32.totalorder %v440, 1
      %vm506 = vcmp.ge.s32.totalorder %v441, 1
      %v507 = vsel %vm505, %v504, 0.0
      %v508 = vsel %vm506, %v503, 0.0
      %510 = vset.pattern.permute.xlu0 0
      %511 = vperm.xlu0 %510, %v358
      %v512 = vpop.permute.xlu0 %511
      %v514 = vmul.f32 %v512, %v507
      %v515 = vmul.f32 %v512, %v508
      %517 = vset.pattern.permute.xlu0 0
      %518 = vperm.xlu0 %517, %v359
      %v519 = vpop.permute.xlu0 %518
      %v521 = vmul.f32 %v519, %v399
      %v522 = vmul.f32 %v519, %v412
      %v523 = vadd.f32 %v514, %v521
      %v524 = vadd.f32 %v515, %v522
      %525 = vrot.lane.b32.xlu0 %v399, 127
      %v526 = vpop.permute.xlu0 %525
      %527 = vrot.lane.b32.xlu0 %v412, 127
      %v528 = vpop.permute.xlu0 %527
      %vm529 = vcmp.lt.s32.totalorder %v416, 127
      %v530 = vsel %vm529, %v526, %v528
      %v531 = vsel %vm529, %v528, %v526
      %vm532 = vcmp.lt.s32.totalorder %v440, 15
      %vm533 = vcmp.lt.s32.totalorder %v441, 15
      %v534 = vsel %vm532, %v530, 0.0
      %v535 = vsel %vm533, %v531, 0.0
      %537 = vset.pattern.permute.xlu0 0
      %538 = vperm.xlu0 %537, %v360
      %v539 = vpop.permute.xlu0 %538
      %v541 = vmul.f32 %v539, %v534
      %v542 = vmul.f32 %v539, %v535
      %v543 = vadd.f32 %v523, %v541
      %v544 = vadd.f32 %v524, %v542
      %546 = vset.pattern.permute.xlu0 0
      %547 = vperm.xlu0 %546, %v367
      %v548 = vpop.permute.xlu0 %547
      %v550 = vadd.f32 %v543, %v548
      %v551 = vadd.f32 %v544, %v548
      %v552 = vadd.f32 %v399, %v496
      %v553 = vadd.f32 %v412, %v497
      %v554 = vadd.f32 %v552, %v550
      %v555 = vadd.f32 %v553, %v551
      %v556 = vpack.c.bf16 %v554, %v554
      %v557 = vpack.c.bf16 %v555, %v555
      %v560 = vunpack.c.l.b16 %v338
      %v561 = vunpack.c.l.b16 %v339
      %v562 = vpack.c.b16 %v561, %v560
      %vm563 = vcmask 31744
      %v565 = vsel %vm563, %v562, 0
      %vm567 = vcmask 1041408
      %v569 = vsel %vm567, %v556, 0
      %v572 = vsel %vm567, %v557, 0
      %574 = vmatpush.bf16.msra.mxu0 0
      %575 = vmatpush.bf16.msra.mxu0 0
      %576 = vmatpush.bf16.msra.mxu0 0
      %577 = vmatpush.bf16.msra.mxu0 0
      %578 = vmatpush.bf16.msra.mxu0 0
      %579 = vmatpush.bf16.msra.mxu0 0
      %580 = vmatpush.bf16.msra.mxu0 0
      %581 = vmatpush.bf16.msra.mxu0 %v569
      %582 = vmatmul.bf16.gmra.mxu0 %v565
      %v583 = vpop.f32.mrf.mxu0
      %v584 = vadd.f32 0.0, %v583
      %v585 = vpop.f32.mrf.mxu0
      %v586 = vadd.f32 0.0, %v585
      %587 = vdwg.mxu0
      %588 = vmatpush.bf16.msra.mxu0 0
      %589 = vmatpush.bf16.msra.mxu0 0
      %590 = vmatpush.bf16.msra.mxu0 0
      %591 = vmatpush.bf16.msra.mxu0 0
      %592 = vmatpush.bf16.msra.mxu0 0
      %593 = vmatpush.bf16.msra.mxu0 0
      %594 = vmatpush.bf16.msra.mxu0 0
      %595 = vmatpush.bf16.msra.mxu0 %v572
      %596 = vmatmul.bf16.gmra.mxu0 %v565
      %v597 = vpop.f32.mrf.mxu0
      %v598 = vadd.f32 0.0, %v597
      %v599 = vpop.f32.mrf.mxu0
      %v600 = vadd.f32 0.0, %v599
      %601 = vdwg.mxu0
      %v604 = vunpack.c.l.b16 %v336
      %v605 = vunpack.c.l.b16 %v337
      %v606 = vpack.c.b16 %v605, %v604
      %v608 = vsel %vm563, %v606, 0
      %v611 = vsel %vm567, %v442, 0
      %v614 = vsel %vm567, %v443, 0
      %616 = vmatpush.bf16.msra.mxu0 0
      %617 = vmatpush.bf16.msra.mxu0 0
      %618 = vmatpush.bf16.msra.mxu0 0
      %619 = vmatpush.bf16.msra.mxu0 0
      %620 = vmatpush.bf16.msra.mxu0 0
      %621 = vmatpush.bf16.msra.mxu0 0
      %622 = vmatpush.bf16.msra.mxu0 0
      %623 = vmatpush.bf16.msra.mxu0 %v611
      %624 = vmatmul.bf16.gmra.mxu0 %v608
      %v625 = vpop.f32.mrf.mxu0
      %v626 = vadd.f32 %v584, %v625
      %v627 = vpop.f32.mrf.mxu0
      %v628 = vadd.f32 %v586, %v627
      %629 = vdwg.mxu0
      %630 = vmatpush.bf16.msra.mxu0 0
      %631 = vmatpush.bf16.msra.mxu0 0
      %632 = vmatpush.bf16.msra.mxu0 0
      %633 = vmatpush.bf16.msra.mxu0 0
      %634 = vmatpush.bf16.msra.mxu0 0
      %635 = vmatpush.bf16.msra.mxu0 0
      %636 = vmatpush.bf16.msra.mxu0 0
      %637 = vmatpush.bf16.msra.mxu0 %v614
      %638 = vmatmul.bf16.gmra.mxu0 %v608
      %v639 = vpop.f32.mrf.mxu0
      %v640 = vadd.f32 %v598, %v639
      %v641 = vpop.f32.mrf.mxu0
      %v642 = vadd.f32 %v600, %v641
      %643 = vdwg.mxu0
      %644 = vrot.lane.b32.xlu0 %v399, 32
      %v645 = vpop.permute.xlu0 %644
      %646 = vrot.lane.b32.xlu0 %v412, 32
      %v647 = vpop.permute.xlu0 %646
      %vm648 = vcmp.lt.s32.totalorder %v416, 32
      %v649 = vsel %vm648, %v645, %v647
      %v650 = vsel %vm648, %v647, %v645
      %vm651 = vcmp.ge.s32.totalorder %v416, 32
      %vm652 = vcmp.ge.s32.totalorder %v417, 32
      %v653 = vsel %vm651, %v650, 0.0
      %v654 = vsel %vm652, %v649, 0.0
      %656 = vset.pattern.permute.xlu0 0
      %657 = vperm.xlu0 %656, %v349
      %v658 = vpop.permute.xlu0 %657
      %v660 = vmul.f32 %v658, %v653
      %v661 = vmul.f32 %v658, %v654
      %663 = vset.pattern.permute.xlu0 0
      %664 = vperm.xlu0 %663, %v350
      %v665 = vpop.permute.xlu0 %664
      %v667 = vmul.f32 %v665, %v399
      %v668 = vmul.f32 %v665, %v412
      %v669 = vadd.f32 %v660, %v667
      %v670 = vadd.f32 %v661, %v668
      %671 = vrot.lane.b32.xlu0 %v399, 96
      %v672 = vpop.permute.xlu0 %671
      %673 = vrot.lane.b32.xlu0 %v412, 96
      %v674 = vpop.permute.xlu0 %673
      %vm675 = vcmp.lt.s32.totalorder %v416, 96
      %v676 = vsel %vm675, %v672, %v674
      %v677 = vsel %vm675, %v674, %v672
      %vm678 = vcmp.lt.s32.totalorder %v416, 224
      %vm679 = vcmp.lt.s32.totalorder %v417, 224
      %v680 = vsel %vm678, %v676, 0.0
      %v681 = vsel %vm679, %v677, 0.0
      %683 = vset.pattern.permute.xlu0 0
      %684 = vperm.xlu0 %683, %v351
      %v685 = vpop.permute.xlu0 %684
      %v687 = vmul.f32 %v685, %v680
      %v688 = vmul.f32 %v685, %v681
      %v689 = vadd.f32 %v669, %v687
      %v690 = vadd.f32 %v670, %v688
      %692 = vset.pattern.permute.xlu0 0
      %693 = vperm.xlu0 %692, %v356
      %v694 = vpop.permute.xlu0 %693
      %v696 = vadd.f32 %v689, %v694
      %v697 = vadd.f32 %v690, %v694
      %698 = vrot.lane.b32.xlu0 %v399, 2
      %v699 = vpop.permute.xlu0 %698
      %700 = vrot.lane.b32.xlu0 %v412, 2
      %v701 = vpop.permute.xlu0 %700
      %vm702 = vcmp.lt.s32.totalorder %v416, 2
      %v703 = vsel %vm702, %v699, %v701
      %v704 = vsel %vm702, %v701, %v699
      %vm705 = vcmp.ge.s32.totalorder %v440, 2
      %vm706 = vcmp.ge.s32.totalorder %v441, 2
      %v707 = vsel %vm705, %v704, 0.0
      %v708 = vsel %vm706, %v703, 0.0
      %710 = vset.pattern.permute.xlu0 0
      %711 = vperm.xlu0 %710, %v361
      %v712 = vpop.permute.xlu0 %711
      %v714 = vmul.f32 %v712, %v707
      %v715 = vmul.f32 %v712, %v708
      %717 = vset.pattern.permute.xlu0 0
      %718 = vperm.xlu0 %717, %v362
      %v719 = vpop.permute.xlu0 %718
      %v721 = vmul.f32 %v719, %v399
      %v722 = vmul.f32 %v719, %v412
      %v723 = vadd.f32 %v714, %v721
      %v724 = vadd.f32 %v715, %v722
      %725 = vrot.lane.b32.xlu0 %v399, 126
      %v726 = vpop.permute.xlu0 %725
      %727 = vrot.lane.b32.xlu0 %v412, 126
      %v728 = vpop.permute.xlu0 %727
      %vm729 = vcmp.lt.s32.totalorder %v416, 126
      %v730 = vsel %vm729, %v726, %v728
      %v731 = vsel %vm729, %v728, %v726
      %vm732 = vcmp.lt.s32.totalorder %v440, 14
      %vm733 = vcmp.lt.s32.totalorder %v441, 14
      %v734 = vsel %vm732, %v730, 0.0
      %v735 = vsel %vm733, %v731, 0.0
      %737 = vset.pattern.permute.xlu0 0
      %738 = vperm.xlu0 %737, %v363
      %v739 = vpop.permute.xlu0 %738
      %v741 = vmul.f32 %v739, %v734
      %v742 = vmul.f32 %v739, %v735
      %v743 = vadd.f32 %v723, %v741
      %v744 = vadd.f32 %v724, %v742
      %746 = vset.pattern.permute.xlu0 0
      %747 = vperm.xlu0 %746, %v368
      %v748 = vpop.permute.xlu0 %747
      %v750 = vadd.f32 %v743, %v748
      %v751 = vadd.f32 %v744, %v748
      %v752 = vadd.f32 %v399, %v696
      %v753 = vadd.f32 %v412, %v697
      %v754 = vadd.f32 %v752, %v750
      %v755 = vadd.f32 %v753, %v751
      %v756 = vpack.c.bf16 %v754, %v754
      %v757 = vpack.c.bf16 %v755, %v755
      %v760 = vunpack.c.l.b16 %v340
      %v761 = vunpack.c.l.b16 %v341
      %v762 = vpack.c.b16 %v761, %v760
      %v764 = vsel %vm563, %v762, 0
      %v767 = vsel %vm567, %v756, 0
      %v770 = vsel %vm567, %v757, 0
      %772 = vmatpush.bf16.msra.mxu0 0
      %773 = vmatpush.bf16.msra.mxu0 0
      %774 = vmatpush.bf16.msra.mxu0 0
      %775 = vmatpush.bf16.msra.mxu0 0
      %776 = vmatpush.bf16.msra.mxu0 0
      %777 = vmatpush.bf16.msra.mxu0 0
      %778 = vmatpush.bf16.msra.mxu0 0
      %779 = vmatpush.bf16.msra.mxu0 %v767
      %780 = vmatmul.bf16.gmra.mxu0 %v764
      %v781 = vpop.f32.mrf.mxu0
      %v782 = vadd.f32 0.0, %v781
      %v783 = vpop.f32.mrf.mxu0
      %v784 = vadd.f32 0.0, %v783
      %785 = vdwg.mxu0
      %786 = vmatpush.bf16.msra.mxu0 0
      %787 = vmatpush.bf16.msra.mxu0 0
      %788 = vmatpush.bf16.msra.mxu0 0
      %789 = vmatpush.bf16.msra.mxu0 0
      %790 = vmatpush.bf16.msra.mxu0 0
      %791 = vmatpush.bf16.msra.mxu0 0
      %792 = vmatpush.bf16.msra.mxu0 0
      %793 = vmatpush.bf16.msra.mxu0 %v770
      %794 = vmatmul.bf16.gmra.mxu0 %v764
      %v795 = vpop.f32.mrf.mxu0
      %v796 = vadd.f32 0.0, %v795
      %v797 = vpop.f32.mrf.mxu0
      %v798 = vadd.f32 0.0, %v797
      %799 = vdwg.mxu0
      %v800 = vadd.f32 %v626, %v782
      %v801 = vadd.f32 %v640, %v796
      %v802 = vadd.f32 %v628, %v784
      %v803 = vadd.f32 %v642, %v798
      %804 = vrot.lane.b32.xlu0 %v399, 48
      %v805 = vpop.permute.xlu0 %804
      %806 = vrot.lane.b32.xlu0 %v412, 48
      %v807 = vpop.permute.xlu0 %806
      %vm808 = vcmp.lt.s32.totalorder %v416, 48
      %v809 = vsel %vm808, %v805, %v807
      %v810 = vsel %vm808, %v807, %v805
      %vm811 = vcmp.ge.s32.totalorder %v416, 48
      %vm812 = vcmp.ge.s32.totalorder %v417, 48
      %v813 = vsel %vm811, %v810, 0.0
      %v814 = vsel %vm812, %v809, 0.0
      %816 = vset.pattern.permute.xlu0 0
      %817 = vperm.xlu0 %816, %v352
      %v818 = vpop.permute.xlu0 %817
      %v820 = vmul.f32 %v818, %v813
      %v821 = vmul.f32 %v818, %v814
      %823 = vset.pattern.permute.xlu0 0
      %824 = vperm.xlu0 %823, %v353
      %v825 = vpop.permute.xlu0 %824
      %v827 = vmul.f32 %v825, %v399
      %v828 = vmul.f32 %v825, %v412
      %v829 = vadd.f32 %v820, %v827
      %v830 = vadd.f32 %v821, %v828
      %831 = vrot.lane.b32.xlu0 %v399, 80
      %v832 = vpop.permute.xlu0 %831
      %833 = vrot.lane.b32.xlu0 %v412, 80
      %v834 = vpop.permute.xlu0 %833
      %vm835 = vcmp.lt.s32.totalorder %v416, 80
      %v836 = vsel %vm835, %v832, %v834
      %v837 = vsel %vm835, %v834, %v832
      %vm838 = vcmp.lt.s32.totalorder %v416, 208
      %vm839 = vcmp.lt.s32.totalorder %v417, 208
      %v840 = vsel %vm838, %v836, 0.0
      %v841 = vsel %vm839, %v837, 0.0
      %843 = vset.pattern.permute.xlu0 0
      %844 = vperm.xlu0 %843, %v354
      %v845 = vpop.permute.xlu0 %844
      %v847 = vmul.f32 %v845, %v840
      %v848 = vmul.f32 %v845, %v841
      %v849 = vadd.f32 %v829, %v847
      %v850 = vadd.f32 %v830, %v848
      %852 = vset.pattern.permute.xlu0 0
      %853 = vperm.xlu0 %852, %v357
      %v854 = vpop.permute.xlu0 %853
      %v856 = vadd.f32 %v849, %v854
      %v857 = vadd.f32 %v850, %v854
      %858 = vrot.lane.b32.xlu0 %v399, 3
      %v859 = vpop.permute.xlu0 %858
      %860 = vrot.lane.b32.xlu0 %v412, 3
      %v861 = vpop.permute.xlu0 %860
      %vm862 = vcmp.lt.s32.totalorder %v416, 3
      %v863 = vsel %vm862, %v859, %v861
      %v864 = vsel %vm862, %v861, %v859
      %vm865 = vcmp.ge.s32.totalorder %v440, 3
      %vm866 = vcmp.ge.s32.totalorder %v441, 3
      %v867 = vsel %vm865, %v864, 0.0
      %v868 = vsel %vm866, %v863, 0.0
      %870 = vset.pattern.permute.xlu0 0
      %871 = vperm.xlu0 %870, %v364
      %v872 = vpop.permute.xlu0 %871
      %v874 = vmul.f32 %v872, %v867
      %v875 = vmul.f32 %v872, %v868
      %877 = vset.pattern.permute.xlu0 0
      %878 = vperm.xlu0 %877, %v365
      %v879 = vpop.permute.xlu0 %878
      %v881 = vmul.f32 %v879, %v399
      %v882 = vmul.f32 %v879, %v412
      %v883 = vadd.f32 %v874, %v881
      %v884 = vadd.f32 %v875, %v882
      %885 = vrot.lane.b32.xlu0 %v399, 125
      %v886 = vpop.permute.xlu0 %885
      %887 = vrot.lane.b32.xlu0 %v412, 125
      %v888 = vpop.permute.xlu0 %887
      %vm889 = vcmp.lt.s32.totalorder %v416, 125
      %v890 = vsel %vm889, %v886, %v888
      %v891 = vsel %vm889, %v888, %v886
      %vm892 = vcmp.lt.s32.totalorder %v440, 13
      %vm893 = vcmp.lt.s32.totalorder %v441, 13
      %v894 = vsel %vm892, %v890, 0.0
      %v895 = vsel %vm893, %v891, 0.0
      %897 = vset.pattern.permute.xlu0 0
      %898 = vperm.xlu0 %897, %v366
      %v899 = vpop.permute.xlu0 %898
      %v901 = vmul.f32 %v899, %v894
      %v902 = vmul.f32 %v899, %v895
      %v903 = vadd.f32 %v883, %v901
      %v904 = vadd.f32 %v884, %v902
      %906 = vset.pattern.permute.xlu0 0
      %907 = vperm.xlu0 %906, %v369
      %v908 = vpop.permute.xlu0 %907
      %v910 = vadd.f32 %v903, %v908
      %v911 = vadd.f32 %v904, %v908
      %v912 = vadd.f32 %v399, %v856
      %v913 = vadd.f32 %v412, %v857
      %v914 = vadd.f32 %v912, %v910
      %v915 = vadd.f32 %v913, %v911
      %v916 = vpack.c.bf16 %v914, %v914
      %v917 = vpack.c.bf16 %v915, %v915
      %v920 = vunpack.c.l.b16 %v342
      %v921 = vunpack.c.l.b16 %v343
      %v922 = vpack.c.b16 %v921, %v920
      %v924 = vsel %vm563, %v922, 0
      %v927 = vsel %vm567, %v916, 0
      %v930 = vsel %vm567, %v917, 0
      %932 = vmatpush.bf16.msra.mxu0 0
      %933 = vmatpush.bf16.msra.mxu0 0
      %934 = vmatpush.bf16.msra.mxu0 0
      %935 = vmatpush.bf16.msra.mxu0 0
      %936 = vmatpush.bf16.msra.mxu0 0
      %937 = vmatpush.bf16.msra.mxu0 0
      %938 = vmatpush.bf16.msra.mxu0 0
      %939 = vmatpush.bf16.msra.mxu0 %v927
      %940 = vmatmul.bf16.gmra.mxu0 %v924
      %v941 = vpop.f32.mrf.mxu0
      %v942 = vadd.f32 0.0, %v941
      %v943 = vpop.f32.mrf.mxu0
      %v944 = vadd.f32 0.0, %v943
      %945 = vdwg.mxu0
      %946 = vmatpush.bf16.msra.mxu0 0
      %947 = vmatpush.bf16.msra.mxu0 0
      %948 = vmatpush.bf16.msra.mxu0 0
      %949 = vmatpush.bf16.msra.mxu0 0
      %950 = vmatpush.bf16.msra.mxu0 0
      %951 = vmatpush.bf16.msra.mxu0 0
      %952 = vmatpush.bf16.msra.mxu0 0
      %953 = vmatpush.bf16.msra.mxu0 %v930
      %954 = vmatmul.bf16.gmra.mxu0 %v924
      %v955 = vpop.f32.mrf.mxu0
      %v956 = vadd.f32 0.0, %v955
      %v957 = vpop.f32.mrf.mxu0
      %v958 = vadd.f32 0.0, %v957
      %959 = vdwg.mxu0
      %v960 = vadd.f32 %v800, %v942
      %v961 = vadd.f32 %v801, %v956
      %v962 = vadd.f32 %v802, %v944
      %v963 = vadd.f32 %v803, %v958
      %v964 = vld [vmem:[%s8] sm:$0xff]
      %v965 = vld [vmem:[%s8 + $0x8] sm:$0xff]
      %967 = vset.pattern.permute.xlu0 0
      %968 = vperm.xlu0 %967, %v964
      %v969 = vpop.permute.xlu0 %968
      %972 = vset.pattern.permute.xlu0 0
      %973 = vperm.xlu0 %972, %v965
      %v974 = vpop.permute.xlu0 %973
      %v976 = vadd.f32 %v960, %v969
      %v977 = vadd.f32 %v961, %v969
      %v978 = vadd.f32 %v962, %v974
      %v979 = vadd.f32 %v963, %v974
      %v980 = vmul.f32 %v976, 0.5
      %v981 = vmul.f32 %v977, 0.5
      %v982 = vmul.f32 %v978, 0.5
      %v983 = vmul.f32 %v979, 0.5
      %v984 = vmul.f32 %v976, 0.70710677
      %v985 = vmul.f32 %v977, 0.70710677
      %v986 = vmul.f32 %v978, 0.70710677
      %v987 = vmul.f32 %v979, 0.70710677
      %v988 = vand.u32 2147483647, %v984
      %v989 = vand.u32 2147483647, %v985
      %v990 = vand.u32 2147483647, %v986
      %v991 = vand.u32 2147483647, %v987
      %v992 = vmul.f32 %v988, 0.3275911
      %v993 = vmul.f32 %v989, 0.3275911
      %v994 = vmul.f32 %v990, 0.3275911
      %v995 = vmul.f32 %v991, 0.3275911
      %v996 = vadd.f32 %v992, 1.0
      %v997 = vadd.f32 %v993, 1.0
      %v998 = vadd.f32 %v994, 1.0
      %v999 = vadd.f32 %v995, 1.0
      %v1000 = vrcp.pop %v996
      %v1001 = vmul.f32 %v996, %v1000
      %v1002 = vsub.f32 1.0, %v1001
      %v1003 = vmul.f32 %v1000, %v1002
      %v1004 = vadd.f32 %v1000, %v1003
      %vm1005 = vweird.f32 %v996
      %vm1006 = vweird.f32 %v1000
      %vm1007 = vmor %vm1005, %vm1006
      %v1008 = vsel %vm1007, %v1000, %v1004
      %v1009 = vand.u32 2147483647, %v996
      %vm1010 = vcmp.eq.f32.partialorder %v1009, 8.507059e+37
      %v1011 = vand.u32 %v996, 2147483648
      %v1012 = vor.u32 1.1754944e-38, %v1011
      %v1013 = vsel %vm1010, %v1012, %v1008
      %v1014 = vmul.f32 1.0, %v1013
      %v1015 = vrcp.pop %v997
      %v1016 = vmul.f32 %v997, %v1015
      %v1017 = vsub.f32 1.0, %v1016
      %v1018 = vmul.f32 %v1015, %v1017
      %v1019 = vadd.f32 %v1015, %v1018
      %vm1020 = vweird.f32 %v997
      %vm1021 = vweird.f32 %v1015
      %vm1022 = vmor %vm1020, %vm1021
      %v1023 = vsel %vm1022, %v1015, %v1019
      %v1024 = vand.u32 2147483647, %v997
      %vm1025 = vcmp.eq.f32.partialorder %v1024, 8.507059e+37
      %v1026 = vand.u32 %v997, 2147483648
      %v1027 = vor.u32 1.1754944e-38, %v1026
      %v1028 = vsel %vm1025, %v1027, %v1023
      %v1029 = vmul.f32 1.0, %v1028
      %v1030 = vrcp.pop %v998
      %v1031 = vmul.f32 %v998, %v1030
      %v1032 = vsub.f32 1.0, %v1031
      %v1033 = vmul.f32 %v1030, %v1032
      %v1034 = vadd.f32 %v1030, %v1033
      %vm1035 = vweird.f32 %v998
      %vm1036 = vweird.f32 %v1030
      %vm1037 = vmor %vm1035, %vm1036
      %v1038 = vsel %vm1037, %v1030, %v1034
      %v1039 = vand.u32 2147483647, %v998
      %vm1040 = vcmp.eq.f32.partialorder %v1039, 8.507059e+37
      %v1041 = vand.u32 %v998, 2147483648
      %v1042 = vor.u32 1.1754944e-38, %v1041
      %v1043 = vsel %vm1040, %v1042, %v1038
      %v1044 = vmul.f32 1.0, %v1043
      %v1045 = vrcp.pop %v999
      %v1046 = vmul.f32 %v999, %v1045
      %v1047 = vsub.f32 1.0, %v1046
      %v1048 = vmul.f32 %v1045, %v1047
      %v1049 = vadd.f32 %v1045, %v1048
      %vm1050 = vweird.f32 %v999
      %vm1051 = vweird.f32 %v1045
      %vm1052 = vmor %vm1050, %vm1051
      %v1053 = vsel %vm1052, %v1045, %v1049
      %v1054 = vand.u32 2147483647, %v999
      %vm1055 = vcmp.eq.f32.partialorder %v1054, 8.507059e+37
      %v1056 = vand.u32 %v999, 2147483648
      %v1057 = vor.u32 1.1754944e-38, %v1056
      %v1058 = vsel %vm1055, %v1057, %v1053
      %v1059 = vmul.f32 1.0, %v1058
      %v1060 = vmul.f32 %v1014, 1.0614054
      %v1061 = vmul.f32 %v1029, 1.0614054
      %v1062 = vmul.f32 %v1044, 1.0614054
      %v1063 = vmul.f32 %v1059, 1.0614054
      %v1064 = vadd.f32 %v1060, -1.4531521
      %v1065 = vadd.f32 %v1061, -1.4531521
      %v1066 = vadd.f32 %v1062, -1.4531521
      %v1067 = vadd.f32 %v1063, -1.4531521
      %v1068 = vmul.f32 %v1014, %v1064
      %v1069 = vmul.f32 %v1029, %v1065
      %v1070 = vmul.f32 %v1044, %v1066
      %v1071 = vmul.f32 %v1059, %v1067
      %v1072 = vadd.f32 %v1068, 1.4214138
      %v1073 = vadd.f32 %v1069, 1.4214138
      %v1074 = vadd.f32 %v1070, 1.4214138
      %v1075 = vadd.f32 %v1071, 1.4214138
      %v1076 = vmul.f32 %v1014, %v1072
      %v1077 = vmul.f32 %v1029, %v1073
      %v1078 = vmul.f32 %v1044, %v1074
      %v1079 = vmul.f32 %v1059, %v1075
      %v1080 = vadd.f32 %v1076, -0.28449672
      %v1081 = vadd.f32 %v1077, -0.28449672
      %v1082 = vadd.f32 %v1078, -0.28449672
      %v1083 = vadd.f32 %v1079, -0.28449672
      %v1084 = vmul.f32 %v1014, %v1080
      %v1085 = vmul.f32 %v1029, %v1081
      %v1086 = vmul.f32 %v1044, %v1082
      %v1087 = vmul.f32 %v1059, %v1083
      %v1088 = vadd.f32 %v1084, 0.2548296
      %v1089 = vadd.f32 %v1085, 0.2548296
      %v1090 = vadd.f32 %v1086, 0.2548296
      %v1091 = vadd.f32 %v1087, 0.2548296
      %v1092 = vmul.f32 %v1014, %v1088
      %v1093 = vmul.f32 %v1029, %v1089
      %v1094 = vmul.f32 %v1044, %v1090
      %v1095 = vmul.f32 %v1059, %v1091
      %v1096 = vsub.f32 0.0, %v988
      %v1097 = vsub.f32 0.0, %v989
      %v1098 = vsub.f32 0.0, %v990
      %v1099 = vsub.f32 0.0, %v991
      %v1100 = vmul.f32 %v1096, %v988
      %v1101 = vmul.f32 %v1097, %v989
      %v1102 = vmul.f32 %v1098, %v990
      %v1103 = vmul.f32 %v1099, %v991
      %v1104 = vmul.f32 %v1100, 1.442695
      %v1105 = vpow.pop %v1104
      %v1106 = vmul.f32 %v1101, 1.442695
      %v1107 = vpow.pop %v1106
      %v1108 = vmul.f32 %v1102, 1.442695
      %v1109 = vpow.pop %v1108
      %v1110 = vmul.f32 %v1103, 1.442695
      %v1111 = vpow.pop %v1110
      %v1112 = vmul.f32 %v1092, %v1105
      %v1113 = vmul.f32 %v1093, %v1107
      %v1114 = vmul.f32 %v1094, %v1109
      %v1115 = vmul.f32 %v1095, %v1111
      %v1116 = vsub.f32 1.0, %v1112
      %v1117 = vsub.f32 1.0, %v1113
      %v1118 = vsub.f32 1.0, %v1114
      %v1119 = vsub.f32 1.0, %v1115
      %vm1120 = vcmp.lt.f32.partialorder %v984, 0.0
      %vm1121 = vcmp.lt.f32.partialorder %v985, 0.0
      %vm1122 = vcmp.lt.f32.partialorder %v986, 0.0
      %vm1123 = vcmp.lt.f32.partialorder %v987, 0.0
      %v1124 = vsub.f32 0.0, %v1116
      %v1125 = vsub.f32 0.0, %v1117
      %v1126 = vsub.f32 0.0, %v1118
      %v1127 = vsub.f32 0.0, %v1119
      %v1128 = vsel %vm1120, %v1124, %v1116
      %v1129 = vsel %vm1121, %v1125, %v1117
      %v1130 = vsel %vm1122, %v1126, %v1118
      %v1131 = vsel %vm1123, %v1127, %v1119
      %v1132 = vadd.f32 %v1128, 1.0
      %v1133 = vadd.f32 %v1129, 1.0
      %v1134 = vadd.f32 %v1130, 1.0
      %v1135 = vadd.f32 %v1131, 1.0
      %v1136 = vmul.f32 %v980, %v1132
      %v1137 = vmul.f32 %v981, %v1133
      %v1138 = vmul.f32 %v982, %v1134
      %v1139 = vmul.f32 %v983, %v1135
      %1140 = vst [vmem:[%s332] sm:$0xff] %v1136
      %1141 = vst [vmem:[%s332 + $0x8] sm:$0xff] %v1137
      %1142 = vst [vmem:[%s332 + $0x10] sm:$0xff] %v1138
      %1143 = vst [vmem:[%s332 + $0x18] sm:$0xff] %v1139
      %p1144 = scmp.lt.s32.totalorder %s20, 1
      %s1145 = scalar_select %p1144, %s20, 1
      %s1146 = smul.addr %s1145, 4
      %s1147 = smul.addr %s1146, 8
      %s1148 = scalar_lea.vmem %s9, %s1147
      // Predicated region
      $region57: #{bottleneck_block.3} parent=55 // pred_check
        %p1149 = pneg %p232
      $region58: #{bottleneck_block.3} parent=55 // pred_check_branch
        %1151 = sbr.rel (%p1149) target = $region60
      $region59: #{bottleneck_block.3} parent=55 // pred_region
        _
      $region60: #{bottleneck_block.3} parent=55 // pred_fallthru
        _
    $region56: #{bottleneck_block.3} parent=5 // pred_fallthru
      _
    %p1152 = scmp.le.s32.totalorder 2, %s15
    // Predicated region
    $region61: #{bottleneck_block.3} parent=5 // pred_check
      %p1153 = pneg %p1152
    $region62: #{bottleneck_block.3} parent=5 // pred_check_branch
      %1155 = sbr.rel (%p1153) target = $region64
    $region63: #{bottleneck_block.3} parent=5 // pred_region
      %s1156 = ssub.s32 %s15, 2
      // Predicated region
      $region65: #{bottleneck_block.3} parent=63 // pred_check
        %p1157 = pneg %p238
      $region66: #{bottleneck_block.3} parent=63 // pred_check_branch
        %1159 = sbr.rel (%p1157) target = $region68
      $region67: #{bottleneck_block.3} parent=63 // pred_region
        %p1160 = scmp.lt.s32.totalorder %s21, 1
        %s1161 = scalar_select %p1160, %s21, 1
        %s1162 = smul.addr %s1161, 4
        %s1163 = smul.addr %s1162, 8
        %s1164 = scalar_lea.vmem %s9, %s1163
      $region68: #{bottleneck_block.3} parent=63 // pred_fallthru
        _
    $region64: #{bottleneck_block.3} parent=5 // pred_fallthru
      _
  $region6: #{bottleneck_block.3} parent=0 // loop_footer
    %s19 = sadd.s32 1, %s15
  $region7: #{bottleneck_block.3} parent=0 // loop_footer_branch
    %14 = sbr.rel target = $region3
  $region8: #{bottleneck_block.3} parent=0 // loop_exit
    _

</llo_original>
